<compile_context>
chip_gen: v7x
topology: tpu7x:2x2x1
jax: 0.10.0
libtpu: 0.0.40
codegen_flags: <defaults>
</compile_context>

<pallas_src>
import functools

import jax
import jax.numpy as jnp
import numpy as np
from jax.experimental import pallas as pl
from jax.experimental.pallas import tpu as pltpu

EPS = 1e-5
LANE = 128                      # channel dims padded to multiples of the TPU lane width
VMEM_LIMIT = 32 * 1024 * 1024   # safe on v5e/v6e (128 MiB) and v7x (64 MiB physical)


def _round_up(x, m):
    return (x + m - 1) // m * m


def _pad_last(a, size):
    if a.shape[-1] == size:
        return a
    pad = [(0, 0)] * (a.ndim - 1) + [(0, size - a.shape[-1])]
    return jnp.pad(a, pad)


# ----------------------------------------------------------------------------
# Pallas kernels
# ----------------------------------------------------------------------------
def _mm_kernel(x_ref, w_ref, b_ref, o_ref, acc_ref, *, relu):
    """(tm,tk)@(tk,tn), K-axis accumulation in f32 scratch, bias(+relu) epilogue."""
    @pl.when(pl.program_id(2) == 0)
    def _():
        acc_ref[...] = jnp.zeros_like(acc_ref)

    acc_ref[...] += jnp.dot(x_ref[...].astype(jnp.bfloat16), w_ref[...],
                            preferred_element_type=jnp.float32)

    @pl.when(pl.program_id(2) == pl.num_programs(2) - 1)
    def _():
        y = acc_ref[...] + b_ref[...]
        if relu:
            y = jnp.maximum(y, 0.0)
        o_ref[...] = y.astype(o_ref.dtype)


def _mm_res_kernel(x_ref, w_ref, b_ref, r_ref, o_ref, acc_ref, *, relu):
    """Same as _mm_kernel plus a fused residual add (no zeros stream when unused)."""
    @pl.when(pl.program_id(2) == 0)
    def _():
        acc_ref[...] = jnp.zeros_like(acc_ref)

    acc_ref[...] += jnp.dot(x_ref[...].astype(jnp.bfloat16), w_ref[...],
                            preferred_element_type=jnp.float32)

    @pl.when(pl.program_id(2) == pl.num_programs(2) - 1)
    def _():
        y = acc_ref[...] + b_ref[...] + r_ref[...].astype(jnp.float32)
        if relu:
            y = jnp.maximum(y, 0.0)
        o_ref[...] = y.astype(o_ref.dtype)


def _mm_dual_kernel(a_ref, wa_ref, r_ref, wr_ref, b_ref, o_ref, *, relu):
    """conv3 + projection shortcut fused: a@wa + r@wr + bias (+relu), one epilogue/output."""
    acc = jnp.dot(a_ref[...].astype(jnp.bfloat16), wa_ref[...],
                  preferred_element_type=jnp.float32)
    acc = acc + jnp.dot(r_ref[...].astype(jnp.bfloat16), wr_ref[...],
                        preferred_element_type=jnp.float32)
    y = acc + b_ref[...]
    if relu:
        y = jnp.maximum(y, 0.0)
    o_ref[...] = y.astype(o_ref.dtype)


def _conv3x3_kernel(q_ref, w_ref, b_ref, o_ref, *, stride, Ho, Wo, relu):
    """3x3 conv (pad 1, stride) as 9 accumulating matmuls over phase-quadrant inputs.

    q_ref: (stride*stride, Hq, Wq, C) f32  -- padded conv1 output, phase-decomposed
    w_ref: (9, C, Cout) bf16               -- BN-folded weight, tap-major (dh, dw)
    """
    s = stride
    acc = None
    for dh in range(3):
        for dw in range(3):
            qi = (dh % s) * s + (dw % s)
            oh, ow = dh // s, dw // s
            tap = q_ref[qi, oh:oh + Ho, ow:ow + Wo, :]          # (Ho, Wo, C) f32
            tap = tap.reshape(Ho * Wo, tap.shape[-1]).astype(jnp.bfloat16)
            part = jnp.dot(tap, w_ref[dh * 3 + dw], preferred_element_type=jnp.float32)
            acc = part if acc is None else acc + part
    y = acc + b_ref[...]
    if relu:
        y = jnp.maximum(y, 0.0)
    o_ref[0] = y.astype(o_ref.dtype)


# ----------------------------------------------------------------------------
# pallas_call wrappers
# ----------------------------------------------------------------------------
def fused_matmul_bias(x, w, bias, residual=None, relu=True, out_dtype=jnp.float32,
                      tm=512, tn=512, tk=512):
    """(M,K)@(K,N) + bias [+ residual] [-> relu].  K and N must be multiples of 128."""
    M, K = x.shape
    K2, N = w.shape
    assert K == K2 and K % LANE == 0 and N % LANE == 0
    tn = min(tn, N)
    while N % tn:
        tn -= LANE
    tk = min(tk, K)
    while K % tk:
        tk -= LANE
    tm = min(tm, _round_up(M, 8))
    grid = (pl.cdiv(M, tm), N // tn, K // tk)
    bias2 = bias.reshape(1, N).astype(jnp.float32)

    in_specs = [
        pl.BlockSpec((tm, tk), lambda i, j, k: (i, k)),      # activations
        pl.BlockSpec((tk, tn), lambda i, j, k: (k, j)),      # BN-folded weight (bf16)
        pl.BlockSpec((1, tn), lambda i, j, k: (0, j)),       # BN bias
    ]
    args = [x, w, bias2]
    if residual is None:
        kernel = functools.partial(_mm_kernel, relu=relu)
    else:
        kernel = functools.partial(_mm_res_kernel, relu=relu)
        in_specs.append(pl.BlockSpec((tm, tn), lambda i, j, k: (i, j)))  # residual tile
        args.append(residual)

    return pl.pallas_call(
        kernel,
        out_shape=jax.ShapeDtypeStruct((M, N), out_dtype),
        grid_spec=pltpu.PrefetchScalarGridSpec(
            num_scalar_prefetch=0,
            grid=grid,
            in_specs=in_specs,
            out_specs=pl.BlockSpec((tm, tn), lambda i, j, k: (i, j)),
            scratch_shapes=[pltpu.VMEM((tm, tn), jnp.float32)],
        ),
        compiler_params=pltpu.CompilerParams(
            dimension_semantics=("parallel", "parallel", "arbitrary"),
            vmem_limit_bytes=VMEM_LIMIT),
    )(*args)


def fused_matmul_dual(a, wa, r, wr, bias, relu=True, out_dtype=jnp.float32,
                      tm=512, tn=512):
    """a@wa + r@wr + bias (+relu): conv3 and the projection shortcut share one kernel."""
    M, Ka = a.shape
    Mr, Kb = r.shape
    N = wa.shape[1]
    assert M == Mr and wa.shape[0] == Ka and wr.shape == (Kb, N)
    assert Ka % LANE == 0 and Kb % LANE == 0 and N % LANE == 0
    tn = min(tn, N)
    while N % tn:
        tn -= LANE
    tm = min(tm, _round_up(M, 8))
    grid = (pl.cdiv(M, tm), N // tn)
    bias2 = bias.reshape(1, N).astype(jnp.float32)

    return pl.pallas_call(
        functools.partial(_mm_dual_kernel, relu=relu),
        out_shape=jax.ShapeDtypeStruct((M, N), out_dtype),
        grid_spec=pltpu.PrefetchScalarGridSpec(
            num_scalar_prefetch=0,
            grid=grid,
            in_specs=[
                pl.BlockSpec((tm, Ka), lambda i, j: (i, 0)),   # conv2 output tile
                pl.BlockSpec((Ka, tn), lambda i, j: (0, j)),   # conv3 folded weight
                pl.BlockSpec((tm, Kb), lambda i, j: (i, 0)),   # strided-input tile
                pl.BlockSpec((Kb, tn), lambda i, j: (0, j)),   # shortcut folded weight
                pl.BlockSpec((1, tn), lambda i, j: (0, j)),    # combined bias (b3 + bsc)
            ],
            out_specs=pl.BlockSpec((tm, tn), lambda i, j: (i, j)),
        ),
        compiler_params=pltpu.CompilerParams(
            dimension_semantics=("parallel", "parallel"),
            vmem_limit_bytes=VMEM_LIMIT),
    )(a, wa, r, wr, bias2)


def im2col_3x3(x_nhwc, stride):
    """Fallback patch extraction (only used if the fused conv2 path's Wo%8 constraint fails)."""
    N, H, W, C = x_nhwc.shape
    xp = jnp.pad(x_nhwc, ((0, 0), (1, 1), (1, 1), (0, 0)))
    Ho = (H - 1) // stride + 1
    Wo = (W - 1) // stride + 1
    cols = []
    for dh in range(3):
        for dw in range(3):
            cols.append(xp[:, dh:dh + Ho * stride:stride, dw:dw + Wo * stride:stride, :])
    patches = jnp.concatenate(cols, axis=-1)
    return patches.reshape(N * Ho * Wo, 9 * C), Ho, Wo


def conv3x3_bn_relu(x_nhwc, w9, bias, stride):
    """3x3 conv (pad 1) + folded BN + ReLU.  Returns ((N*Ho*Wo, Cout) bf16, Ho, Wo)."""
    N, H, W, C = x_nhwc.shape
    Cout = w9.shape[-1]
    s = stride
    Ho = (H - 1) // s + 1
    Wo = (W - 1) // s + 1
    bias2 = bias.reshape(1, Cout).astype(jnp.float32)

    if Wo % 8 != 0:
        # TODO(synk): ragged Wo (not a sublane multiple) -- fall back to wrapper-side im2col.
        patches, Ho, Wo = im2col_3x3(x_nhwc, s)
        out = fused_matmul_bias(patches, w9.reshape(9 * C, Cout), bias,
                                relu=True, out_dtype=jnp.bfloat16)
        return out, Ho, Wo

    # Phase ("quadrant") decomposition: every tap becomes a unit-stride static VMEM slice;
    # extra HBM traffic is ~1x the conv1 output (vs 9x for im2col).
    xp = jnp.pad(x_nhwc, ((0, 0), (1, 1), (1, 1), (0, 0)))
    Hq = -(-(H + 2) // s)
    Wq = -(-(W + 2) // s)
    quads = []
    for a in range(s):
        for b in range(s):
            q = xp[:, a::s, b::s, :]
            q = jnp.pad(q, ((0, 0), (0, Hq - q.shape[1]), (0, Wq - q.shape[2]), (0, 0)))
            quads.append(q)
    quads = jnp.stack(quads, axis=1).reshape(N * s * s, Hq, Wq, C)

    out = pl.pallas_call(
        functools.partial(_conv3x3_kernel, stride=s, Ho=Ho, Wo=Wo, relu=True),
        out_shape=jax.ShapeDtypeStruct((N, Ho * Wo, Cout), jnp.bfloat16),
        grid_spec=pltpu.PrefetchScalarGridSpec(
            num_scalar_prefetch=0,
            grid=(N,),
            in_specs=[
                pl.BlockSpec((s * s, Hq, Wq, C), lambda n: (n, 0, 0, 0)),
                pl.BlockSpec((9, C, Cout), lambda n: (0, 0, 0)),
                pl.BlockSpec((1, Cout), lambda n: (0, 0)),
            ],
            out_specs=pl.BlockSpec((1, Ho * Wo, Cout), lambda n: (n, 0, 0)),
        ),
        compiler_params=pltpu.CompilerParams(
            dimension_semantics=("parallel",),
            vmem_limit_bytes=VMEM_LIMIT),
    )(quads, w9, bias2)
    return out.reshape(N * Ho * Wo, Cout), Ho, Wo


# ----------------------------------------------------------------------------
# Parameter construction (deterministic, synthetic) + BN folding / padding
# ----------------------------------------------------------------------------
def make_bottleneck_params(key, in_planes, planes, stride):
    expansion = 4
    out_planes = expansion * planes
    keys = jax.random.split(key, 10)
    k = iter(keys)

    def conv_w(kk, cout, cin, ksz):
        return (0.1 * jax.random.normal(kk, (cout, cin, ksz, ksz))).astype(jnp.float32)

    def bn_p(kk, c):
        k1, k2, k3, k4 = jax.random.split(kk, 4)
        return dict(
            gamma=jax.random.uniform(k1, (c,), minval=0.5, maxval=1.5).astype(jnp.float32),
            beta=(0.1 * jax.random.normal(k2, (c,))).astype(jnp.float32),
            mean=(0.1 * jax.random.normal(k3, (c,))).astype(jnp.float32),
            var=jax.random.uniform(k4, (c,), minval=0.5, maxval=1.5).astype(jnp.float32))

    raw = dict(
        w1=conv_w(next(k), planes, in_planes, 1), bn1=bn_p(next(k), planes),
        w2=conv_w(next(k), planes, planes, 3), bn2=bn_p(next(k), planes),
        w3=conv_w(next(k), out_planes, planes, 1), bn3=bn_p(next(k), out_planes),
    )
    has_shortcut = (stride != 1) or (in_planes != out_planes)
    if has_shortcut:
        raw["wsc"] = conv_w(next(k), out_planes, in_planes, 1)
        raw["bnsc"] = bn_p(next(k), out_planes)

    cin_p, pln_p, out_p = (_round_up(c, LANE) for c in (in_planes, planes, out_planes))

    def fold_1x1(w_oihw, bn, k_pad, n_pad):
        s = bn["gamma"] / jnp.sqrt(bn["var"] + EPS)
        b = bn["beta"] - bn["mean"] * s
        w = w_oihw[:, :, 0, 0].T * s[None, :]                       # (K, N), BN scale folded
        w = jnp.pad(w, ((0, k_pad - w.shape[0]), (0, n_pad - w.shape[1])))
        return w.astype(jnp.bfloat16), jnp.pad(b, (0, n_pad - b.shape[0])).astype(jnp.float32)

    packed = {}
    packed["w1"], packed["b1"] = fold_1x1(raw["w1"], raw["bn1"], cin_p, pln_p)
    s2 = raw["bn2"]["gamma"] / jnp.sqrt(raw["bn2"]["var"] + EPS)
    b2 = raw["bn2"]["beta"] - raw["bn2"]["mean"] * s2
    w2 = jnp.transpose(raw["w2"], (2, 3, 1, 0)) * s2[None, None, None, :]   # (3,3,Cin,Cout)
    w2 = jnp.pad(w2, ((0, 0), (0, 0), (0, pln_p - planes), (0, pln_p - planes)))
    packed["w2"] = w2.reshape(9, pln_p, pln_p).astype(jnp.bfloat16)
    packed["b2"] = jnp.pad(b2, (0, pln_p - planes)).astype(jnp.float32)
    packed["w3"], packed["b3"] = fold_1x1(raw["w3"], raw["bn3"], pln_p, out_p)
    if has_shortcut:
        packed["wsc"], packed["bsc"] = fold_1x1(raw["wsc"], raw["bnsc"], cin_p, out_p)
    return raw, packed, has_shortcut


# ----------------------------------------------------------------------------
# Bottleneck forward using the Pallas kernels
# ----------------------------------------------------------------------------
def bottleneck_forward(x_nchw, packed, *, stride, has_shortcut, out_planes):
    x = jnp.transpose(x_nchw, (0, 2, 3, 1)).astype(jnp.float32)        # NHWC
    N, H, W, Cin = x.shape
    cin_p, pln_p = packed["w1"].shape
    out_p = packed["w3"].shape[1]
    x = _pad_last(x, cin_p)                                            # lane-dense channels

    # conv1 (1x1) + bn1 + relu
    out1 = fused_matmul_bias(x.reshape(N * H * W, cin_p), packed["w1"], packed["b1"],
                             relu=True, out_dtype=jnp.float32)
    out1 = out1.reshape(N, H, W, pln_p)

    # conv2 (3x3, pad 1, stride) + bn2 + relu  -- fused 9-tap conv, no HBM im2col
    out2, Ho, Wo = conv3x3_bn_relu(out1, packed["w2"], packed["b2"], stride)

    # conv3 (1x1) + bn3 + shortcut + relu
    if has_shortcut:
        xs = x[:, ::stride, ::stride, :].reshape(N * Ho * Wo, cin_p)
        out = fused_matmul_dual(out2, packed["w3"], xs, packed["wsc"],
                                packed["b3"] + packed["bsc"], relu=True,
                                out_dtype=jnp.float32)
    else:
        res = x.reshape(N * H * W, cin_p)          # identity: cin_p == out_p
        out = fused_matmul_bias(out2, packed["w3"], packed["b3"], residual=res,
                                relu=True, out_dtype=jnp.float32)

    out = out.reshape(N, Ho, Wo, out_p)[..., :out_planes]
    return jnp.transpose(out, (0, 3, 1, 2))        # back to NCHW


# ----------------------------------------------------------------------------
# Pure-JAX f32 reference (lax.conv) for the correctness check
# ----------------------------------------------------------------------------
def reference_forward(x_nchw, raw, stride, has_shortcut):
    def conv(x, w, s, pad):
        return jax.lax.conv_general_dilated(
            x, w, (s, s), pad, dimension_numbers=("NCHW", "OIHW", "NCHW"))

    def bn(x, p):
        sc = p["gamma"] / jnp.sqrt(p["var"] + EPS)
        b = p["beta"] - p["mean"] * sc
        return x * sc[None, :, None, None] + b[None, :, None, None]

    out = jax.nn.relu(bn(conv(x_nchw, raw["w1"], 1, "VALID"), raw["bn1"]))
    out = jax.nn.relu(bn(conv(out, raw["w2"], stride, ((1, 1), (1, 1))), raw["bn2"]))
    out = bn(conv(out, raw["w3"], 1, "VALID"), raw["bn3"])
    if has_shortcut:
        sc = bn(conv(x_nchw, raw["wsc"], stride, "VALID"), raw["bnsc"])
    else:
        sc = x_nchw
    return jax.nn.relu(out + sc)


if __name__ == "__main__":
    key = jax.random.PRNGKey(0)
    # Two small configs: projection shortcut (stride 2) and identity shortcut (stride 1).
    configs = [(16, 4, 2), (16, 4, 1)]
    fwd = jax.jit(bottleneck_forward,
                  static_argnames=("stride", "has_shortcut", "out_planes"))

    for idx, (in_planes, planes, stride) in enumerate(configs):
        kx, kp = jax.random.split(jax.random.fold_in(key, idx))
        x = jax.random.normal(kx, (2, in_planes, 16, 16), dtype=jnp.float32)   # NCHW
        raw, packed, has_shortcut = make_bottleneck_params(kp, in_planes, planes, stride)

        out = fwd(x, packed, stride=stride, has_shortcut=has_shortcut,
                  out_planes=4 * planes)
        out = jax.block_until_ready(out)

        ref = jax.block_until_ready(reference_forward(x, raw, stride, has_shortcut))
        # bf16 matmul inputs (f32 accumulate/epilogue) vs a pure-f32 reference ->
        # tolerance loosened accordingly.
        np.testing.assert_allclose(np.asarray(out), np.asarray(ref), atol=3e-2, rtol=3e-2)

    print("KERNEL_OK")
</pallas_src>

<mosaic_0001>
module attributes {stable_mosaic.version = 11 : i64} {
  func.func @_mm_kernel(%arg0: i32, %arg1: i32, %arg2: i32, %arg3: memref<512x128xf32, #tpu.memory_space<vmem>>, %arg4: memref<128x128xbf16, #tpu.memory_space<vmem>>, %arg5: memref<1x128xf32, #tpu.memory_space<vmem>>, %arg6: memref<512x128xf32, #tpu.memory_space<vmem>>, %arg7: memref<512x128xf32, #tpu.memory_space<vmem>>) attributes {dimension_semantics = [#tpu.dimension_semantics<parallel>, #tpu.dimension_semantics<parallel>, #tpu.dimension_semantics<arbitrary>], iteration_bounds = array<i64: 1, 1, 1>, scalar_prefetch = 0 : i64, scratch_operands = 1 : i64, tpu.core_type = #tpu.core_type<tc>, window_params = [{transform_indices = @transform_0, window_bounds = array<i64: 512, 128>}, {transform_indices = @transform_1, window_bounds = array<i64: 128, 128>}, {transform_indices = @transform_2, window_bounds = array<i64: 1, 128>}, {transform_indices = @transform_3, window_bounds = array<i64: 512, 128>}]} {
    %c0_i32 = arith.constant 0 : i32
    %0 = arith.cmpi eq, %arg2, %c0_i32 : i32
    %1 = arith.extui %0 : i1 to i32
    %c0_i32_0 = arith.constant 0 : i32
    %2 = arith.cmpi ne, %1, %c0_i32_0 : i32
    scf.if %2 {
      %cst_10 = arith.constant 0.000000e+00 : f32
      %13 = vector.broadcast %cst_10 : f32 to vector<512x128xf32>
      %c0_11 = arith.constant 0 : index
      %c0_12 = arith.constant 0 : index
      %14 = vector.load %arg7[%c0_11, %c0_12] : memref<512x128xf32, #tpu.memory_space<vmem>>, vector<512x128xf32>
      tpu.vector_store %arg7[%c0_11, %c0_12], %13 {strides = array<i32>} : memref<512x128xf32, #tpu.memory_space<vmem>>, vector<512x128xf32>,
    } else {
    }
    %c0 = arith.constant 0 : index
    %c0_1 = arith.constant 0 : index
    %3 = vector.load %arg7[%c0, %c0_1] : memref<512x128xf32, #tpu.memory_space<vmem>>, vector<512x128xf32>
    %c0_2 = arith.constant 0 : index
    %c0_3 = arith.constant 0 : index
    %4 = vector.load %arg3[%c0_2, %c0_3] : memref<512x128xf32, #tpu.memory_space<vmem>>, vector<512x128xf32>
    %5 = arith.truncf %4 : vector<512x128xf32> to vector<512x128xbf16>
    %c0_4 = arith.constant 0 : index
    %c0_5 = arith.constant 0 : index
    %6 = vector.load %arg4[%c0_4, %c0_5] : memref<128x128xbf16, #tpu.memory_space<vmem>>, vector<128x128xbf16>
    %cst = arith.constant dense<0.000000e+00> : vector<512x128xf32>
    %7 = tpu.matmul %5, %6, %cst {dimension_numbers = #tpu.dot_dimension_numbers<[1], [0], [0], [1], [0, 0, 1, 1], [], []>} : vector<512x128xbf16>, vector<128x128xbf16>, vector<512x128xf32> -> vector<512x128xf32>
    %8 = arith.addf %3, %7 : vector<512x128xf32>
    %c0_6 = arith.constant 0 : index
    %c0_7 = arith.constant 0 : index
    %9 = vector.load %arg7[%c0_6, %c0_7] : memref<512x128xf32, #tpu.memory_space<vmem>>, vector<512x128xf32>
    tpu.vector_store %arg7[%c0_6, %c0_7], %8 {strides = array<i32>} : memref<512x128xf32, #tpu.memory_space<vmem>>, vector<512x128xf32>,
    %c0_i32_8 = arith.constant 0 : i32
    %10 = arith.cmpi eq, %arg2, %c0_i32_8 : i32
    %11 = arith.extui %10 : i1 to i32
    %c0_i32_9 = arith.constant 0 : i32
    %12 = arith.cmpi ne, %11, %c0_i32_9 : i32
    scf.if %12 {
      %c0_10 = arith.constant 0 : index
      %c0_11 = arith.constant 0 : index
      %13 = vector.load %arg7[%c0_10, %c0_11] : memref<512x128xf32, #tpu.memory_space<vmem>>, vector<512x128xf32>
      %c0_12 = arith.constant 0 : index
      %c0_13 = arith.constant 0 : index
      %14 = vector.load %arg5[%c0_12, %c0_13] : memref<1x128xf32, #tpu.memory_space<vmem>>, vector<1x128xf32>
      %15 = vector.broadcast %14 : vector<1x128xf32> to vector<512x128xf32>
      %16 = arith.addf %13, %15 : vector<512x128xf32>
      %cst_14 = arith.constant 0.000000e+00 : f32
      %17 = vector.broadcast %cst_14 : f32 to vector<512x128xf32>
      %18 = arith.maximumf %16, %17 : vector<512x128xf32>
      %c0_15 = arith.constant 0 : index
      %c0_16 = arith.constant 0 : index
      %19 = vector.load %arg6[%c0_15, %c0_16] : memref<512x128xf32, #tpu.memory_space<vmem>>, vector<512x128xf32>
      tpu.vector_store %arg6[%c0_15, %c0_16], %18 {strides = array<i32>} : memref<512x128xf32, #tpu.memory_space<vmem>>, vector<512x128xf32>,
    } else {
    }
    return
  }
  func.func @transform_0(%arg0: i32, %arg1: i32, %arg2: i32) -> (i32, i32) {
    %c0_i32 = arith.constant 0 : i32
    return %arg0, %arg2 : i32, i32
  }
  func.func @transform_1(%arg0: i32, %arg1: i32, %arg2: i32) -> (i32, i32) {
    %c0_i32 = arith.constant 0 : i32
    return %arg2, %arg1 : i32, i32
  }
  func.func @transform_2(%arg0: i32, %arg1: i32, %arg2: i32) -> (i32, i32) {
    %c0_i32 = arith.constant 0 : i32
    %c0_i32_0 = arith.constant 0 : i32
    return %c0_i32, %arg1 : i32, i32
  }
  func.func @transform_3(%arg0: i32, %arg1: i32, %arg2: i32) -> (i32, i32) {
    %c0_i32 = arith.constant 0 : i32
    return %arg0, %arg1 : i32, i32
  }
}

module attributes {stable_mosaic.version = 11 : i64} {
  func.func @_conv3x3_kernel(%arg0: i32, %arg1: memref<4x9x9x128xf32, #tpu.memory_space<vmem>>, %arg2: memref<9x128x128xbf16, #tpu.memory_space<vmem>>, %arg3: memref<1x128xf32, #tpu.memory_space<vmem>>, %arg4: memref<1x64x128xbf16, #tpu.memory_space<vmem>>) attributes {dimension_semantics = [#tpu.dimension_semantics<parallel>], iteration_bounds = array<i64: 2>, scalar_prefetch = 0 : i64, scratch_operands = 0 : i64, tpu.core_type = #tpu.core_type<tc>, window_params = [{transform_indices = @transform_0, window_bounds = array<i64: 4, 9, 9, 128>}, {pipeline_mode = #tpu.pipeline_mode<synchronous>, transform_indices = @transform_1, window_bounds = array<i64: 9, 128, 128>}, {pipeline_mode = #tpu.pipeline_mode<synchronous>, transform_indices = @transform_2, window_bounds = array<i64: 1, 128>}, {transform_indices = @transform_3, window_bounds = array<i64: 1, 64, 128>}]} {
    %c0 = arith.constant 0 : index
    %c0_0 = arith.constant 0 : index
    %c0_1 = arith.constant 0 : index
    %c0_2 = arith.constant 0 : index
    %0 = vector.load %arg1[%c0, %c0_0, %c0_1, %c0_2] : memref<4x9x9x128xf32, #tpu.memory_space<vmem>>, vector<1x8x8x128xf32>
    %1 = vector.shape_cast %0 : vector<1x8x8x128xf32> to vector<8x8x128xf32>
    %2 = vector.shape_cast %1 : vector<8x8x128xf32> to vector<64x128xf32>
    %3 = arith.truncf %2 : vector<64x128xf32> to vector<64x128xbf16>
    %c0_3 = arith.constant 0 : index
    %c0_4 = arith.constant 0 : index
    %c0_5 = arith.constant 0 : index
    %4 = vector.load %arg2[%c0_3, %c0_4, %c0_5] : memref<9x128x128xbf16, #tpu.memory_space<vmem>>, vector<1x128x128xbf16>
    %5 = vector.shape_cast %4 : vector<1x128x128xbf16> to vector<128x128xbf16>
    %cst = arith.constant dense<0.000000e+00> : vector<64x128xf32>
    %6 = tpu.matmul %3, %5, %cst {dimension_numbers = #tpu.dot_dimension_numbers<[1], [0], [0], [1], [0, 0, 1, 1], [], []>} : vector<64x128xbf16>, vector<128x128xbf16>, vector<64x128xf32> -> vector<64x128xf32>
    %c1 = arith.constant 1 : index
    %c0_6 = arith.constant 0 : index
    %c0_7 = arith.constant 0 : index
    %c0_8 = arith.constant 0 : index
    %7 = vector.load %arg1[%c1, %c0_6, %c0_7, %c0_8] : memref<4x9x9x128xf32, #tpu.memory_space<vmem>>, vector<1x8x8x128xf32>
    %8 = vector.shape_cast %7 : vector<1x8x8x128xf32> to vector<8x8x128xf32>
    %9 = vector.shape_cast %8 : vector<8x8x128xf32> to vector<64x128xf32>
    %10 = arith.truncf %9 : vector<64x128xf32> to vector<64x128xbf16>
    %c1_9 = arith.constant 1 : index
    %c0_10 = arith.constant 0 : index
    %c0_11 = arith.constant 0 : index
    %11 = vector.load %arg2[%c1_9, %c0_10, %c0_11] : memref<9x128x128xbf16, #tpu.memory_space<vmem>>, vector<1x128x128xbf16>
    %12 = vector.shape_cast %11 : vector<1x128x128xbf16> to vector<128x128xbf16>
    %cst_12 = arith.constant dense<0.000000e+00> : vector<64x128xf32>
    %13 = tpu.matmul %10, %12, %cst_12 {dimension_numbers = #tpu.dot_dimension_numbers<[1], [0], [0], [1], [0, 0, 1, 1], [], []>} : vector<64x128xbf16>, vector<128x128xbf16>, vector<64x128xf32> -> vector<64x128xf32>
    %14 = arith.addf %6, %13 : vector<64x128xf32>
    %c0_13 = arith.constant 0 : index
    %c0_14 = arith.constant 0 : index
    %c1_15 = arith.constant 1 : index
    %c0_16 = arith.constant 0 : index
    %15 = vector.load %arg1[%c0_13, %c0_14, %c1_15, %c0_16] : memref<4x9x9x128xf32, #tpu.memory_space<vmem>>, vector<1x8x8x128xf32>
    %16 = vector.shape_cast %15 : vector<1x8x8x128xf32> to vector<8x8x128xf32>
    %17 = vector.shape_cast %16 : vector<8x8x128xf32> to vector<64x128xf32>
    %18 = arith.truncf %17 : vector<64x128xf32> to vector<64x128xbf16>
    %c2 = arith.constant 2 : index
    %c0_17 = arith.constant 0 : index
    %c0_18 = arith.constant 0 : index
    %19 = vector.load %arg2[%c2, %c0_17, %c0_18] : memref<9x128x128xbf16, #tpu.memory_space<vmem>>, vector<1x128x128xbf16>
    %20 = vector.shape_cast %19 : vector<1x128x128xbf16> to vector<128x128xbf16>
    %cst_19 = arith.constant dense<0.000000e+00> : vector<64x128xf32>
    %21 = tpu.matmul %18, %20, %cst_19 {dimension_numbers = #tpu.dot_dimension_numbers<[1], [0], [0], [1], [0, 0, 1, 1], [], []>} : vector<64x128xbf16>, vector<128x128xbf16>, vector<64x128xf32> -> vector<64x128xf32>
    %22 = arith.addf %14, %21 : vector<64x128xf32>
    %c2_20 = arith.constant 2 : index
    %c0_21 = arith.constant 0 : index
    %c0_22 = arith.constant 0 : index
    %c0_23 = arith.constant 0 : index
    %23 = vector.load %arg1[%c2_20, %c0_21, %c0_22, %c0_23] : memref<4x9x9x128xf32, #tpu.memory_space<vmem>>, vector<1x8x8x128xf32>
    %24 = vector.shape_cast %23 : vector<1x8x8x128xf32> to vector<8x8x128xf32>
    %25 = vector.shape_cast %24 : vector<8x8x128xf32> to vector<64x128xf32>
    %26 = arith.truncf %25 : vector<64x128xf32> to vector<64x128xbf16>
    %c3 = arith.constant 3 : index
    %c0_24 = arith.constant 0 : index
    %c0_25 = arith.constant 0 : index
    %27 = vector.load %arg2[%c3, %c0_24, %c0_25] : memref<9x128x128xbf16, #tpu.memory_space<vmem>>, vector<1x128x128xbf16>
    %28 = vector.shape_cast %27 : vector<1x128x128xbf16> to vector<128x128xbf16>
    %cst_26 = arith.constant dense<0.000000e+00> : vector<64x128xf32>
    %29 = tpu.matmul %26, %28, %cst_26 {dimension_numbers = #tpu.dot_dimension_numbers<[1], [0], [0], [1], [0, 0, 1, 1], [], []>} : vector<64x128xbf16>, vector<128x128xbf16>, vector<64x128xf32> -> vector<64x128xf32>
    %30 = arith.addf %22, %29 : vector<64x128xf32>
    %c3_27 = arith.constant 3 : index
    %c0_28 = arith.constant 0 : index
    %c0_29 = arith.constant 0 : index
    %c0_30 = arith.constant 0 : index
    %31 = vector.load %arg1[%c3_27, %c0_28, %c0_29, %c0_30] : memref<4x9x9x128xf32, #tpu.memory_space<vmem>>, vector<1x8x8x128xf32>
    %32 = vector.shape_cast %31 : vector<1x8x8x128xf32> to vector<8x8x128xf32>
    %33 = vector.shape_cast %32 : vector<8x8x128xf32> to vector<64x128xf32>
    %34 = arith.truncf %33 : vector<64x128xf32> to vector<64x128xbf16>
    %c4 = arith.constant 4 : index
    %c0_31 = arith.constant 0 : index
    %c0_32 = arith.constant 0 : index
    %35 = vector.load %arg2[%c4, %c0_31, %c0_32] : memref<9x128x128xbf16, #tpu.memory_space<vmem>>, vector<1x128x128xbf16>
    %36 = vector.shape_cast %35 : vector<1x128x128xbf16> to vector<128x128xbf16>
    %cst_33 = arith.constant dense<0.000000e+00> : vector<64x128xf32>
    %37 = tpu.matmul %34, %36, %cst_33 {dimension_numbers = #tpu.dot_dimension_numbers<[1], [0], [0], [1], [0, 0, 1, 1], [], []>} : vector<64x128xbf16>, vector<128x128xbf16>, vector<64x128xf32> -> vector<64x128xf32>
    %38 = arith.addf %30, %37 : vector<64x128xf32>
    %c2_34 = arith.constant 2 : index
    %c0_35 = arith.constant 0 : index
    %c1_36 = arith.constant 1 : index
    %c0_37 = arith.constant 0 : index
    %39 = vector.load %arg1[%c2_34, %c0_35, %c1_36, %c0_37] : memref<4x9x9x128xf32, #tpu.memory_space<vmem>>, vector<1x8x8x128xf32>
    %40 = vector.shape_cast %39 : vector<1x8x8x128xf32> to vector<8x8x128xf32>
    %41 = vector.shape_cast %40 : vector<8x8x128xf32> to vector<64x128xf32>
    %42 = arith.truncf %41 : vector<64x128xf32> to vector<64x128xbf16>
    %c5 = arith.constant 5 : index
    %c0_38 = arith.constant 0 : index
    %c0_39 = arith.constant 0 : index
    %43 = vector.load %arg2[%c5, %c0_38, %c0_39] : memref<9x128x128xbf16, #tpu.memory_space<vmem>>, vector<1x128x128xbf16>
    %44 = vector.shape_cast %43 : vector<1x128x128xbf16> to vector<128x128xbf16>
    %cst_40 = arith.constant dense<0.000000e+00> : vector<64x128xf32>
    %45 = tpu.matmul %42, %44, %cst_40 {dimension_numbers = #tpu.dot_dimension_numbers<[1], [0], [0], [1], [0, 0, 1, 1], [], []>} : vector<64x128xbf16>, vector<128x128xbf16>, vector<64x128xf32> -> vector<64x128xf32>
    %46 = arith.addf %38, %45 : vector<64x128xf32>
    %c0_41 = arith.constant 0 : index
    %c1_42 = arith.constant 1 : index
    %c0_43 = arith.constant 0 : index
    %c0_44 = arith.constant 0 : index
    %47 = vector.load %arg1[%c0_41, %c1_42, %c0_43, %c0_44] : memref<4x9x9x128xf32, #tpu.memory_space<vmem>>, vector<1x8x8x128xf32>
    %48 = vector.shape_cast %47 : vector<1x8x8x128xf32> to vector<8x8x128xf32>
    %49 = vector.shape_cast %48 : vector<8x8x128xf32> to vector<64x128xf32>
    %50 = arith.truncf %49 : vector<64x128xf32> to vector<64x128xbf16>
    %c6 = arith.constant 6 : index
    %c0_45 = arith.constant 0 : index
    %c0_46 = arith.constant 0 : index
    %51 = vector.load %arg2[%c6, %c0_45, %c0_46] : memref<9x128x128xbf16, #tpu.memory_space<vmem>>, vector<1x128x128xbf16>
    %52 = vector.shape_cast %51 : vector<1x128x128xbf16> to vector<128x128xbf16>
    %cst_47 = arith.constant dense<0.000000e+00> : vector<64x128xf32>
    %53 = tpu.matmul %50, %52, %cst_47 {dimension_numbers = #tpu.dot_dimension_numbers<[1], [0], [0], [1], [0, 0, 1, 1], [], []>} : vector<64x128xbf16>, vector<128x128xbf16>, vector<64x128xf32> -> vector<64x128xf32>
    %54 = arith.addf %46, %53 : vector<64x128xf32>
    %c1_48 = arith.constant 1 : index
    %c1_49 = arith.constant 1 : index
    %c0_50 = arith.constant 0 : index
    %c0_51 = arith.constant 0 : index
    %55 = vector.load %arg1[%c1_48, %c1_49, %c0_50, %c0_51] : memref<4x9x9x128xf32, #tpu.memory_space<vmem>>, vector<1x8x8x128xf32>
    %56 = vector.shape_cast %55 : vector<1x8x8x128xf32> to vector<8x8x128xf32>
    %57 = vector.shape_cast %56 : vector<8x8x128xf32> to vector<64x128xf32>
    %58 = arith.truncf %57 : vector<64x128xf32> to vector<64x128xbf16>
    %c7 = arith.constant 7 : index
    %c0_52 = arith.constant 0 : index
    %c0_53 = arith.constant 0 : index
    %59 = vector.load %arg2[%c7, %c0_52, %c0_53] : memref<9x128x128xbf16, #tpu.memory_space<vmem>>, vector<1x128x128xbf16>
    %60 = vector.shape_cast %59 : vector<1x128x128xbf16> to vector<128x128xbf16>
    %cst_54 = arith.constant dense<0.000000e+00> : vector<64x128xf32>
    %61 = tpu.matmul %58, %60, %cst_54 {dimension_numbers = #tpu.dot_dimension_numbers<[1], [0], [0], [1], [0, 0, 1, 1], [], []>} : vector<64x128xbf16>, vector<128x128xbf16>, vector<64x128xf32> -> vector<64x128xf32>
    %62 = arith.addf %54, %61 : vector<64x128xf32>
    %c0_55 = arith.constant 0 : index
    %c1_56 = arith.constant 1 : index
    %c1_57 = arith.constant 1 : index
    %c0_58 = arith.constant 0 : index
    %63 = vector.load %arg1[%c0_55, %c1_56, %c1_57, %c0_58] : memref<4x9x9x128xf32, #tpu.memory_space<vmem>>, vector<1x8x8x128xf32>
    %64 = vector.shape_cast %63 : vector<1x8x8x128xf32> to vector<8x8x128xf32>
    %65 = vector.shape_cast %64 : vector<8x8x128xf32> to vector<64x128xf32>
    %66 = arith.truncf %65 : vector<64x128xf32> to vector<64x128xbf16>
    %c8 = arith.constant 8 : index
    %c0_59 = arith.constant 0 : index
    %c0_60 = arith.constant 0 : index
    %67 = vector.load %arg2[%c8, %c0_59, %c0_60] : memref<9x128x128xbf16, #tpu.memory_space<vmem>>, vector<1x128x128xbf16>
    %68 = vector.shape_cast %67 : vector<1x128x128xbf16> to vector<128x128xbf16>
    %cst_61 = arith.constant dense<0.000000e+00> : vector<64x128xf32>
    %69 = tpu.matmul %66, %68, %cst_61 {dimension_numbers = #tpu.dot_dimension_numbers<[1], [0], [0], [1], [0, 0, 1, 1], [], []>} : vector<64x128xbf16>, vector<128x128xbf16>, vector<64x128xf32> -> vector<64x128xf32>
    %70 = arith.addf %62, %69 : vector<64x128xf32>
    %c0_62 = arith.constant 0 : index
    %c0_63 = arith.constant 0 : index
    %71 = vector.load %arg3[%c0_62, %c0_63] : memref<1x128xf32, #tpu.memory_space<vmem>>, vector<1x128xf32>
    %72 = vector.broadcast %71 : vector<1x128xf32> to vector<64x128xf32>
    %73 = arith.addf %70, %72 : vector<64x128xf32>
    %cst_64 = arith.constant 0.000000e+00 : f32
    %74 = vector.broadcast %cst_64 : f32 to vector<64x128xf32>
    %75 = arith.maximumf %73, %74 : vector<64x128xf32>
    %76 = arith.truncf %75 : vector<64x128xf32> to vector<64x128xbf16>
    %c0_65 = arith.constant 0 : index
    %c0_66 = arith.constant 0 : index
    %c0_67 = arith.constant 0 : index
    %77 = vector.load %arg4[%c0_65, %c0_66, %c0_67] : memref<1x64x128xbf16, #tpu.memory_space<vmem>>, vector<1x64x128xbf16>
    %78 = vector.shape_cast %77 : vector<1x64x128xbf16> to vector<64x128xbf16>
    %79 = vector.shape_cast %76 : vector<64x128xbf16> to vector<1x64x128xbf16>
    tpu.vector_store %arg4[%c0_65, %c0_66, %c0_67], %79 {strides = array<i32>} : memref<1x64x128xbf16, #tpu.memory_space<vmem>>, vector<1x64x128xbf16>,
    return
  }
  func.func @transform_0(%arg0: i32) -> (i32, i32, i32, i32) {
    %c0_i32 = arith.constant 0 : i32
    %c0_i32_0 = arith.constant 0 : i32
    %c0_i32_1 = arith.constant 0 : i32
    %c0_i32_2 = arith.constant 0 : i32
    return %arg0, %c0_i32, %c0_i32_0, %c0_i32_1 : i32, i32, i32, i32
  }
  func.func @transform_1(%arg0: i32) -> (i32, i32, i32) {
    %c0_i32 = arith.constant 0 : i32
    %c0_i32_0 = arith.constant 0 : i32
    %c0_i32_1 = arith.constant 0 : i32
    %c0_i32_2 = arith.constant 0 : i32
    return %c0_i32, %c0_i32_0, %c0_i32_1 : i32, i32, i32
  }
  func.func @transform_2(%arg0: i32) -> (i32, i32) {
    %c0_i32 = arith.constant 0 : i32
    %c0_i32_0 = arith.constant 0 : i32
    %c0_i32_1 = arith.constant 0 : i32
    return %c0_i32, %c0_i32_0 : i32, i32
  }
  func.func @transform_3(%arg0: i32) -> (i32, i32, i32) {
    %c0_i32 = arith.constant 0 : i32
    %c0_i32_0 = arith.constant 0 : i32
    %c0_i32_1 = arith.constant 0 : i32
    return %arg0, %c0_i32, %c0_i32_0 : i32, i32, i32
  }
}

module attributes {stable_mosaic.version = 11 : i64} {
  func.func @_mm_dual_kernel(%arg0: i32, %arg1: i32, %arg2: memref<128x128xbf16, #tpu.memory_space<vmem>>, %arg3: memref<128x128xbf16, #tpu.memory_space<vmem>>, %arg4: memref<128x128xf32, #tpu.memory_space<vmem>>, %arg5: memref<128x128xbf16, #tpu.memory_space<vmem>>, %arg6: memref<1x128xf32, #tpu.memory_space<vmem>>, %arg7: memref<128x128xf32, #tpu.memory_space<vmem>>) attributes {dimension_semantics = [#tpu.dimension_semantics<parallel>, #tpu.dimension_semantics<parallel>], iteration_bounds = array<i64: 1, 1>, scalar_prefetch = 0 : i64, scratch_operands = 0 : i64, tpu.core_type = #tpu.core_type<tc>, window_params = [{transform_indices = @transform_0, window_bounds = array<i64: 128, 128>}, {transform_indices = @transform_1, window_bounds = array<i64: 128, 128>}, {transform_indices = @transform_2, window_bounds = array<i64: 128, 128>}, {transform_indices = @transform_3, window_bounds = array<i64: 128, 128>}, {transform_indices = @transform_4, window_bounds = array<i64: 1, 128>}, {transform_indices = @transform_5, window_bounds = array<i64: 128, 128>}]} {
    %c0 = arith.constant 0 : index
    %c0_0 = arith.constant 0 : index
    %0 = vector.load %arg2[%c0, %c0_0] : memref<128x128xbf16, #tpu.memory_space<vmem>>, vector<128x128xbf16>
    %c0_1 = arith.constant 0 : index
    %c0_2 = arith.constant 0 : index
    %1 = vector.load %arg3[%c0_1, %c0_2] : memref<128x128xbf16, #tpu.memory_space<vmem>>, vector<128x128xbf16>
    %cst = arith.constant dense<0.000000e+00> : vector<128x128xf32>
    %2 = tpu.matmul %0, %1, %cst {dimension_numbers = #tpu.dot_dimension_numbers<[1], [0], [0], [1], [0, 0, 1, 1], [], []>} : vector<128x128xbf16>, vector<128x128xbf16>, vector<128x128xf32> -> vector<128x128xf32>
    %c0_3 = arith.constant 0 : index
    %c0_4 = arith.constant 0 : index
    %3 = vector.load %arg4[%c0_3, %c0_4] : memref<128x128xf32, #tpu.memory_space<vmem>>, vector<128x128xf32>
    %4 = arith.truncf %3 : vector<128x128xf32> to vector<128x128xbf16>
    %c0_5 = arith.constant 0 : index
    %c0_6 = arith.constant 0 : index
    %5 = vector.load %arg5[%c0_5, %c0_6] : memref<128x128xbf16, #tpu.memory_space<vmem>>, vector<128x128xbf16>
    %cst_7 = arith.constant dense<0.000000e+00> : vector<128x128xf32>
    %6 = tpu.matmul %4, %5, %cst_7 {dimension_numbers = #tpu.dot_dimension_numbers<[1], [0], [0], [1], [0, 0, 1, 1], [], []>} : vector<128x128xbf16>, vector<128x128xbf16>, vector<128x128xf32> -> vector<128x128xf32>
    %7 = arith.addf %2, %6 : vector<128x128xf32>
    %c0_8 = arith.constant 0 : index
    %c0_9 = arith.constant 0 : index
    %8 = vector.load %arg6[%c0_8, %c0_9] : memref<1x128xf32, #tpu.memory_space<vmem>>, vector<1x128xf32>
    %9 = vector.broadcast %8 : vector<1x128xf32> to vector<128x128xf32>
    %10 = arith.addf %7, %9 : vector<128x128xf32>
    %cst_10 = arith.constant 0.000000e+00 : f32
    %11 = vector.broadcast %cst_10 : f32 to vector<128x128xf32>
    %12 = arith.maximumf %10, %11 : vector<128x128xf32>
    %c0_11 = arith.constant 0 : index
    %c0_12 = arith.constant 0 : index
    %13 = vector.load %arg7[%c0_11, %c0_12] : memref<128x128xf32, #tpu.memory_space<vmem>>, vector<128x128xf32>
    tpu.vector_store %arg7[%c0_11, %c0_12], %12 {strides = array<i32>} : memref<128x128xf32, #tpu.memory_space<vmem>>, vector<128x128xf32>,
    return
  }
  func.func @transform_0(%arg0: i32, %arg1: i32) -> (i32, i32) {
    %c0_i32 = arith.constant 0 : i32
    %c0_i32_0 = arith.constant 0 : i32
    return %arg0, %c0_i32 : i32, i32
  }
  func.func @transform_1(%arg0: i32, %arg1: i32) -> (i32, i32) {
    %c0_i32 = arith.constant 0 : i32
    %c0_i32_0 = arith.constant 0 : i32
    return %c0_i32, %arg1 : i32, i32
  }
  func.func @transform_2(%arg0: i32, %arg1: i32) -> (i32, i32) {
    %c0_i32 = arith.constant 0 : i32
    %c0_i32_0 = arith.constant 0 : i32
    return %arg0, %c0_i32 : i32, i32
  }
  func.func @transform_3(%arg0: i32, %arg1: i32) -> (i32, i32) {
    %c0_i32 = arith.constant 0 : i32
    %c0_i32_0 = arith.constant 0 : i32
    return %c0_i32, %arg1 : i32, i32
  }
  func.func @transform_4(%arg0: i32, %arg1: i32) -> (i32, i32) {
    %c0_i32 = arith.constant 0 : i32
    %c0_i32_0 = arith.constant 0 : i32
    return %c0_i32, %arg1 : i32, i32
  }
  func.func @transform_5(%arg0: i32, %arg1: i32) -> (i32, i32) {
    %c0_i32 = arith.constant 0 : i32
    return %arg0, %arg1 : i32, i32
  }
}

</mosaic_0001>

<llo_original>
// kernel: bottleneck_forward.3
$region0: #{bottleneck_forward.3}
  #allocation0 [shape = 'u32[]', space=smem, size = 0x4, offset = 0x4, fixed_abs, tag = 'smem constant byte address 0x4 - core index']
  #allocation1 [shape = 'u32[144,128]{1,0:T(1,128)}', space=vmem, size = 0x12000, scoped, tag = 'internal scratch']
  #allocation2 [shape = 'f32[512,128]{1,0:T(8,128)}', space=vmem, size = 0x40000, scoped, tag = 'scratch operand']
  %s0 = inlined_call_operand.vmem [shape: f32[512,128], index: 0, kind: input, shape index: {}]
  %s1 = inlined_call_operand.vmem [shape: bf16[128,128], index: 1, kind: input, shape index: {}]
  %s2 = inlined_call_operand.vmem [shape: f32[1,128], index: 2, kind: input, shape index: {}]
  %s3 = inlined_call_operand.vmem [shape: f32[512,128], index: 3, kind: output, shape index: {}]
  %s4 = sld [smem:[#allocation0]]
  $region30: #{bottleneck_forward.3} parent=0
    _
  %s6 = ssub.s32 1, %s4
  %s7 = scalar_select 0, %s6, %s4
  // Predicated region
  $region2: #{bottleneck_forward.3} parent=0 // pred_check
    _
  $region3: #{bottleneck_forward.3} parent=0 // pred_check_branch
    %9 = sbr.rel (0) target = $region5
  $region4: #{bottleneck_forward.3} parent=0 // pred_region
    _
  $region5: #{bottleneck_forward.3} parent=0 // pred_fallthru
    _
  // Predicated region
  $region6: #{bottleneck_forward.3} parent=0 // pred_check
    _
  $region7: #{bottleneck_forward.3} parent=0 // pred_check_branch
    %11 = sbr.rel (0) target = $region9
  $region8: #{bottleneck_forward.3} parent=0 // pred_region
    _
  $region9: #{bottleneck_forward.3} parent=0 // pred_fallthru
    _
  // Predicated region
  $region10: #{bottleneck_forward.3} parent=0 // pred_check
    _
  $region11: #{bottleneck_forward.3} parent=0 // pred_check_branch
    %13 = sbr.rel (0) target = $region13
  $region12: #{bottleneck_forward.3} parent=0 // pred_region
    _
  $region13: #{bottleneck_forward.3} parent=0 // pred_fallthru
    _
  %p15 = scmp.eq.s32.totalorder 0, 0
  // Predicated region
  $region14: #{bottleneck_forward.3} parent=0 // pred_check
    %p16 = pneg %p15
  $region15: #{bottleneck_forward.3} parent=0 // pred_check_branch
    %18 = sbr.rel (%p16) target = $region17
  $region16: #{bottleneck_forward.3} parent=0 // pred_region
    %19 = vst [vmem:[#allocation2] sm:$0xff] 0.0
    %20 = vst [vmem:[#allocation2 + $0x8] sm:$0xff] 0.0
    %21 = vst [vmem:[#allocation2 + $0x10] sm:$0xff] 0.0
    %22 = vst [vmem:[#allocation2 + $0x18] sm:$0xff] 0.0
    %23 = vst [vmem:[#allocation2 + $0x20] sm:$0xff] 0.0
    %24 = vst [vmem:[#allocation2 + $0x28] sm:$0xff] 0.0
    %25 = vst [vmem:[#allocation2 + $0x30] sm:$0xff] 0.0
    %26 = vst [vmem:[#allocation2 + $0x38] sm:$0xff] 0.0
    %27 = vst [vmem:[#allocation2 + $0x40] sm:$0xff] 0.0
    %28 = vst [vmem:[#allocation2 + $0x48] sm:$0xff] 0.0
    %29 = vst [vmem:[#allocation2 + $0x50] sm:$0xff] 0.0
    %30 = vst [vmem:[#allocation2 + $0x58] sm:$0xff] 0.0
    %31 = vst [vmem:[#allocation2 + $0x60] sm:$0xff] 0.0
    %32 = vst [vmem:[#allocation2 + $0x68] sm:$0xff] 0.0
    %33 = vst [vmem:[#allocation2 + $0x70] sm:$0xff] 0.0
    %34 = vst [vmem:[#allocation2 + $0x78] sm:$0xff] 0.0
    %35 = vst [vmem:[#allocation2 + $0x80] sm:$0xff] 0.0
    %36 = vst [vmem:[#allocation2 + $0x88] sm:$0xff] 0.0
    %37 = vst [vmem:[#allocation2 + $0x90] sm:$0xff] 0.0
    %38 = vst [vmem:[#allocation2 + $0x98] sm:$0xff] 0.0
    %39 = vst [vmem:[#allocation2 + $0xa0] sm:$0xff] 0.0
    %40 = vst [vmem:[#allocation2 + $0xa8] sm:$0xff] 0.0
    %41 = vst [vmem:[#allocation2 + $0xb0] sm:$0xff] 0.0
    %42 = vst [vmem:[#allocation2 + $0xb8] sm:$0xff] 0.0
    %43 = vst [vmem:[#allocation2 + $0xc0] sm:$0xff] 0.0
    %44 = vst [vmem:[#allocation2 + $0xc8] sm:$0xff] 0.0
    %45 = vst [vmem:[#allocation2 + $0xd0] sm:$0xff] 0.0
    %46 = vst [vmem:[#allocation2 + $0xd8] sm:$0xff] 0.0
    %47 = vst [vmem:[#allocation2 + $0xe0] sm:$0xff] 0.0
    %48 = vst [vmem:[#allocation2 + $0xe8] sm:$0xff] 0.0
    %49 = vst [vmem:[#allocation2 + $0xf0] sm:$0xff] 0.0
    %50 = vst [vmem:[#allocation2 + $0xf8] sm:$0xff] 0.0
    %51 = vst [vmem:[#allocation2 + $0x100] sm:$0xff] 0.0
    %52 = vst [vmem:[#allocation2 + $0x108] sm:$0xff] 0.0
    %53 = vst [vmem:[#allocation2 + $0x110] sm:$0xff] 0.0
    %54 = vst [vmem:[#allocation2 + $0x118] sm:$0xff] 0.0
    %55 = vst [vmem:[#allocation2 + $0x120] sm:$0xff] 0.0
    %56 = vst [vmem:[#allocation2 + $0x128] sm:$0xff] 0.0
    %57 = vst [vmem:[#allocation2 + $0x130] sm:$0xff] 0.0
    %58 = vst [vmem:[#allocation2 + $0x138] sm:$0xff] 0.0
    %59 = vst [vmem:[#allocation2 + $0x140] sm:$0xff] 0.0
    %60 = vst [vmem:[#allocation2 + $0x148] sm:$0xff] 0.0
    %61 = vst [vmem:[#allocation2 + $0x150] sm:$0xff] 0.0
    %62 = vst [vmem:[#allocation2 + $0x158] sm:$0xff] 0.0
    %63 = vst [vmem:[#allocation2 + $0x160] sm:$0xff] 0.0
    %64 = vst [vmem:[#allocation2 + $0x168] sm:$0xff] 0.0
    %65 = vst [vmem:[#allocation2 + $0x170] sm:$0xff] 0.0
    %66 = vst [vmem:[#allocation2 + $0x178] sm:$0xff] 0.0
    %67 = vst [vmem:[#allocation2 + $0x180] sm:$0xff] 0.0
    %68 = vst [vmem:[#allocation2 + $0x188] sm:$0xff] 0.0
    %69 = vst [vmem:[#allocation2 + $0x190] sm:$0xff] 0.0
    %70 = vst [vmem:[#allocation2 + $0x198] sm:$0xff] 0.0
    %71 = vst [vmem:[#allocation2 + $0x1a0] sm:$0xff] 0.0
    %72 = vst [vmem:[#allocation2 + $0x1a8] sm:$0xff] 0.0
    %73 = vst [vmem:[#allocation2 + $0x1b0] sm:$0xff] 0.0
    %74 = vst [vmem:[#allocation2 + $0x1b8] sm:$0xff] 0.0
    %75 = vst [vmem:[#allocation2 + $0x1c0] sm:$0xff] 0.0
    %76 = vst [vmem:[#allocation2 + $0x1c8] sm:$0xff] 0.0
    %77 = vst [vmem:[#allocation2 + $0x1d0] sm:$0xff] 0.0
    %78 = vst [vmem:[#allocation2 + $0x1d8] sm:$0xff] 0.0
    %79 = vst [vmem:[#allocation2 + $0x1e0] sm:$0xff] 0.0
    %80 = vst [vmem:[#allocation2 + $0x1e8] sm:$0xff] 0.0
    %81 = vst [vmem:[#allocation2 + $0x1f0] sm:$0xff] 0.0
    %82 = vst [vmem:[#allocation2 + $0x1f8] sm:$0xff] 0.0
  $region17: #{bottleneck_forward.3} parent=0 // pred_fallthru
    _
  %v83 = vld [vmem:[#allocation2] sm:$0xff]
  %v84 = vld [vmem:[#allocation2 + $0x8] sm:$0xff]
  %v85 = vld [vmem:[#allocation2 + $0x10] sm:$0xff]
  %v86 = vld [vmem:[#allocation2 + $0x18] sm:$0xff]
  %v87 = vld [vmem:[#allocation2 + $0x20] sm:$0xff]
  %v88 = vld [vmem:[#allocation2 + $0x28] sm:$0xff]
  %v89 = vld [vmem:[#allocation2 + $0x30] sm:$0xff]
  %v90 = vld [vmem:[#allocation2 + $0x38] sm:$0xff]
  %v91 = vld [vmem:[#allocation2 + $0x40] sm:$0xff]
  %v92 = vld [vmem:[#allocation2 + $0x48] sm:$0xff]
  %v93 = vld [vmem:[#allocation2 + $0x50] sm:$0xff]
  %v94 = vld [vmem:[#allocation2 + $0x58] sm:$0xff]
  %v95 = vld [vmem:[#allocation2 + $0x60] sm:$0xff]
  %v96 = vld [vmem:[#allocation2 + $0x68] sm:$0xff]
  %v97 = vld [vmem:[#allocation2 + $0x70] sm:$0xff]
  %v98 = vld [vmem:[#allocation2 + $0x78] sm:$0xff]
  %v99 = vld [vmem:[#allocation2 + $0x80] sm:$0xff]
  %v100 = vld [vmem:[#allocation2 + $0x88] sm:$0xff]
  %v101 = vld [vmem:[#allocation2 + $0x90] sm:$0xff]
  %v102 = vld [vmem:[#allocation2 + $0x98] sm:$0xff]
  %v103 = vld [vmem:[#allocation2 + $0xa0] sm:$0xff]
  %v104 = vld [vmem:[#allocation2 + $0xa8] sm:$0xff]
  %v105 = vld [vmem:[#allocation2 + $0xb0] sm:$0xff]
  %v106 = vld [vmem:[#allocation2 + $0xb8] sm:$0xff]
  %v107 = vld [vmem:[#allocation2 + $0xc0] sm:$0xff]
  %v108 = vld [vmem:[#allocation2 + $0xc8] sm:$0xff]
  %v109 = vld [vmem:[#allocation2 + $0xd0] sm:$0xff]
  %v110 = vld [vmem:[#allocation2 + $0xd8] sm:$0xff]
  %v111 = vld [vmem:[#allocation2 + $0xe0] sm:$0xff]
  %v112 = vld [vmem:[#allocation2 + $0xe8] sm:$0xff]
  %v113 = vld [vmem:[#allocation2 + $0xf0] sm:$0xff]
  %v114 = vld [vmem:[#allocation2 + $0xf8] sm:$0xff]
  %v115 = vld [vmem:[#allocation2 + $0x100] sm:$0xff]
  %v116 = vld [vmem:[#allocation2 + $0x108] sm:$0xff]
  %v117 = vld [vmem:[#allocation2 + $0x110] sm:$0xff]
  %v118 = vld [vmem:[#allocation2 + $0x118] sm:$0xff]
  %v119 = vld [vmem:[#allocation2 + $0x120] sm:$0xff]
  %v120 = vld [vmem:[#allocation2 + $0x128] sm:$0xff]
  %v121 = vld [vmem:[#allocation2 + $0x130] sm:$0xff]
  %v122 = vld [vmem:[#allocation2 + $0x138] sm:$0xff]
  %v123 = vld [vmem:[#allocation2 + $0x140] sm:$0xff]
  %v124 = vld [vmem:[#allocation2 + $0x148] sm:$0xff]
  %v125 = vld [vmem:[#allocation2 + $0x150] sm:$0xff]
  %v126 = vld [vmem:[#allocation2 + $0x158] sm:$0xff]
  %v127 = vld [vmem:[#allocation2 + $0x160] sm:$0xff]
  %v128 = vld [vmem:[#allocation2 + $0x168] sm:$0xff]
  %v129 = vld [vmem:[#allocation2 + $0x170] sm:$0xff]
  %v130 = vld [vmem:[#allocation2 + $0x178] sm:$0xff]
  %v131 = vld [vmem:[#allocation2 + $0x180] sm:$0xff]
  %v132 = vld [vmem:[#allocation2 + $0x188] sm:$0xff]
  %v133 = vld [vmem:[#allocation2 + $0x190] sm:$0xff]
  %v134 = vld [vmem:[#allocation2 + $0x198] sm:$0xff]
  %v135 = vld [vmem:[#allocation2 + $0x1a0] sm:$0xff]
  %v136 = vld [vmem:[#allocation2 + $0x1a8] sm:$0xff]
  %v137 = vld [vmem:[#allocation2 + $0x1b0] sm:$0xff]
  %v138 = vld [vmem:[#allocation2 + $0x1b8] sm:$0xff]
  %v139 = vld [vmem:[#allocation2 + $0x1c0] sm:$0xff]
  %v140 = vld [vmem:[#allocation2 + $0x1c8] sm:$0xff]
  %v141 = vld [vmem:[#allocation2 + $0x1d0] sm:$0xff]
  %v142 = vld [vmem:[#allocation2 + $0x1d8] sm:$0xff]
  %v143 = vld [vmem:[#allocation2 + $0x1e0] sm:$0xff]
  %v144 = vld [vmem:[#allocation2 + $0x1e8] sm:$0xff]
  %v145 = vld [vmem:[#allocation2 + $0x1f0] sm:$0xff]
  %v146 = vld [vmem:[#allocation2 + $0x1f8] sm:$0xff]
  %v147 = vld [vmem:[%s0] sm:$0xff]
  %v148 = vld [vmem:[%s0 + $0x8] sm:$0xff]
  %v149 = vld [vmem:[%s0 + $0x10] sm:$0xff]
  %v150 = vld [vmem:[%s0 + $0x18] sm:$0xff]
  %v151 = vld [vmem:[%s0 + $0x20] sm:$0xff]
  %v152 = vld [vmem:[%s0 + $0x28] sm:$0xff]
  %v153 = vld [vmem:[%s0 + $0x30] sm:$0xff]
  %v154 = vld [vmem:[%s0 + $0x38] sm:$0xff]
  %v155 = vld [vmem:[%s0 + $0x40] sm:$0xff]
  %v156 = vld [vmem:[%s0 + $0x48] sm:$0xff]
  %v157 = vld [vmem:[%s0 + $0x50] sm:$0xff]
  %v158 = vld [vmem:[%s0 + $0x58] sm:$0xff]
  %v159 = vld [vmem:[%s0 + $0x60] sm:$0xff]
  %v160 = vld [vmem:[%s0 + $0x68] sm:$0xff]
  %v161 = vld [vmem:[%s0 + $0x70] sm:$0xff]
  %v162 = vld [vmem:[%s0 + $0x78] sm:$0xff]
  %v163 = vld [vmem:[%s0 + $0x80] sm:$0xff]
  %v164 = vld [vmem:[%s0 + $0x88] sm:$0xff]
  %v165 = vld [vmem:[%s0 + $0x90] sm:$0xff]
  %v166 = vld [vmem:[%s0 + $0x98] sm:$0xff]
  %v167 = vld [vmem:[%s0 + $0xa0] sm:$0xff]
  %v168 = vld [vmem:[%s0 + $0xa8] sm:$0xff]
  %v169 = vld [vmem:[%s0 + $0xb0] sm:$0xff]
  %v170 = vld [vmem:[%s0 + $0xb8] sm:$0xff]
  %v171 = vld [vmem:[%s0 + $0xc0] sm:$0xff]
  %v172 = vld [vmem:[%s0 + $0xc8] sm:$0xff]
  %v173 = vld [vmem:[%s0 + $0xd0] sm:$0xff]
  %v174 = vld [vmem:[%s0 + $0xd8] sm:$0xff]
  %v175 = vld [vmem:[%s0 + $0xe0] sm:$0xff]
  %v176 = vld [vmem:[%s0 + $0xe8] sm:$0xff]
  %v177 = vld [vmem:[%s0 + $0xf0] sm:$0xff]
  %v178 = vld [vmem:[%s0 + $0xf8] sm:$0xff]
  %v179 = vld [vmem:[%s0 + $0x100] sm:$0xff]
  %v180 = vld [vmem:[%s0 + $0x108] sm:$0xff]
  %v181 = vld [vmem:[%s0 + $0x110] sm:$0xff]
  %v182 = vld [vmem:[%s0 + $0x118] sm:$0xff]
  %v183 = vld [vmem:[%s0 + $0x120] sm:$0xff]
  %v184 = vld [vmem:[%s0 + $0x128] sm:$0xff]
  %v185 = vld [vmem:[%s0 + $0x130] sm:$0xff]
  %v186 = vld [vmem:[%s0 + $0x138] sm:$0xff]
  %v187 = vld [vmem:[%s0 + $0x140] sm:$0xff]
  %v188 = vld [vmem:[%s0 + $0x148] sm:$0xff]
  %v189 = vld [vmem:[%s0 + $0x150] sm:$0xff]
  %v190 = vld [vmem:[%s0 + $0x158] sm:$0xff]
  %v191 = vld [vmem:[%s0 + $0x160] sm:$0xff]
  %v192 = vld [vmem:[%s0 + $0x168] sm:$0xff]
  %v193 = vld [vmem:[%s0 + $0x170] sm:$0xff]
  %v194 = vld [vmem:[%s0 + $0x178] sm:$0xff]
  %v195 = vld [vmem:[%s0 + $0x180] sm:$0xff]
  %v196 = vld [vmem:[%s0 + $0x188] sm:$0xff]
  %v197 = vld [vmem:[%s0 + $0x190] sm:$0xff]
  %v198 = vld [vmem:[%s0 + $0x198] sm:$0xff]
  %v199 = vld [vmem:[%s0 + $0x1a0] sm:$0xff]
  %v200 = vld [vmem:[%s0 + $0x1a8] sm:$0xff]
  %v201 = vld [vmem:[%s0 + $0x1b0] sm:$0xff]
  %v202 = vld [vmem:[%s0 + $0x1b8] sm:$0xff]
  %v203 = vld [vmem:[%s0 + $0x1c0] sm:$0xff]
  %v204 = vld [vmem:[%s0 + $0x1c8] sm:$0xff]
  %v205 = vld [vmem:[%s0 + $0x1d0] sm:$0xff]
  %v206 = vld [vmem:[%s0 + $0x1d8] sm:$0xff]
  %v207 = vld [vmem:[%s0 + $0x1e0] sm:$0xff]
  %v208 = vld [vmem:[%s0 + $0x1e8] sm:$0xff]
  %v209 = vld [vmem:[%s0 + $0x1f0] sm:$0xff]
  %v210 = vld [vmem:[%s0 + $0x1f8] sm:$0xff]
  %v211 = vpack.c.bf16 %v148, %v147
  %v212 = vpack.c.bf16 %v150, %v149
  %v213 = vpack.c.bf16 %v152, %v151
  %v214 = vpack.c.bf16 %v154, %v153
  %v215 = vpack.c.bf16 %v156, %v155
  %v216 = vpack.c.bf16 %v158, %v157
  %v217 = vpack.c.bf16 %v160, %v159
  %v218 = vpack.c.bf16 %v162, %v161
  %v219 = vpack.c.bf16 %v164, %v163
  %v220 = vpack.c.bf16 %v166, %v165
  %v221 = vpack.c.bf16 %v168, %v167
  %v222 = vpack.c.bf16 %v170, %v169
  %v223 = vpack.c.bf16 %v172, %v171
  %v224 = vpack.c.bf16 %v174, %v173
  %v225 = vpack.c.bf16 %v176, %v175
  %v226 = vpack.c.bf16 %v178, %v177
  %v227 = vpack.c.bf16 %v180, %v179
  %v228 = vpack.c.bf16 %v182, %v181
  %v229 = vpack.c.bf16 %v184, %v183
  %v230 = vpack.c.bf16 %v186, %v185
  %v231 = vpack.c.bf16 %v188, %v187
  %v232 = vpack.c.bf16 %v190, %v189
  %v233 = vpack.c.bf16 %v192, %v191
  %v234 = vpack.c.bf16 %v194, %v193
  %v235 = vpack.c.bf16 %v196, %v195
  %v236 = vpack.c.bf16 %v198, %v197
  %v237 = vpack.c.bf16 %v200, %v199
  %v238 = vpack.c.bf16 %v202, %v201
  %v239 = vpack.c.bf16 %v204, %v203
  %v240 = vpack.c.bf16 %v206, %v205
  %v241 = vpack.c.bf16 %v208, %v207
  %v242 = vpack.c.bf16 %v210, %v209
  %v243 = vld [vmem:[%s1] sm:$0xf]
  %v244 = vld [vmem:[%s1 + $0x4] sm:$0xf]
  %v245 = vld [vmem:[%s1 + $0x8] sm:$0xf]
  %v246 = vld [vmem:[%s1 + $0xc] sm:$0xf]
  %v247 = vld [vmem:[%s1 + $0x10] sm:$0xf]
  %v248 = vld [vmem:[%s1 + $0x14] sm:$0xf]
  %v249 = vld [vmem:[%s1 + $0x18] sm:$0xf]
  %v250 = vld [vmem:[%s1 + $0x1c] sm:$0xf]
  %v251 = vld [vmem:[%s1 + $0x20] sm:$0xf]
  %v252 = vld [vmem:[%s1 + $0x24] sm:$0xf]
  %v253 = vld [vmem:[%s1 + $0x28] sm:$0xf]
  %v254 = vld [vmem:[%s1 + $0x2c] sm:$0xf]
  %v255 = vld [vmem:[%s1 + $0x30] sm:$0xf]
  %v256 = vld [vmem:[%s1 + $0x34] sm:$0xf]
  %v257 = vld [vmem:[%s1 + $0x38] sm:$0xf]
  %v258 = vld [vmem:[%s1 + $0x3c] sm:$0xf]
  %v275 = vunpack.c.l.b16 %v243
  %v276 = vunpack.c.l.b16 %v244
  %v277 = vunpack.c.l.b16 %v245
  %v278 = vunpack.c.l.b16 %v246
  %v279 = vunpack.c.l.b16 %v247
  %v280 = vunpack.c.l.b16 %v248
  %v281 = vunpack.c.l.b16 %v249
  %v282 = vunpack.c.l.b16 %v250
  %v283 = vunpack.c.l.b16 %v251
  %v284 = vunpack.c.l.b16 %v252
  %v285 = vunpack.c.l.b16 %v253
  %v286 = vunpack.c.l.b16 %v254
  %v287 = vunpack.c.l.b16 %v255
  %v288 = vunpack.c.l.b16 %v256
  %v289 = vunpack.c.l.b16 %v257
  %v290 = vunpack.c.l.b16 %v258
  %v291 = vpack.c.b16 %v276, %v275
  %v292 = vpack.c.b16 %v278, %v277
  %v293 = vpack.c.b16 %v280, %v279
  %v294 = vpack.c.b16 %v282, %v281
  %v295 = vpack.c.b16 %v284, %v283
  %v296 = vpack.c.b16 %v286, %v285
  %v297 = vpack.c.b16 %v288, %v287
  %v298 = vpack.c.b16 %v290, %v289
  %307 = vmatprep.subr.bf16.mxu0 0
  %308 = vmatpush1.bf16.msra.mxu0 %v291
  %309 = vmatprep.subr.bf16.mxu0 0
  %310 = vmatpush1.bf16.msra.mxu0 %v292
  %311 = vmatprep.subr.bf16.mxu0 0
  %312 = vmatpush1.bf16.msra.mxu0 %v293
  %313 = vmatprep.subr.bf16.mxu0 0
  %314 = vmatpush1.bf16.msra.mxu0 %v294
  %315 = vmatprep.subr.bf16.mxu0 0
  %316 = vmatpush1.bf16.msra.mxu0 %v295
  %317 = vmatprep.subr.bf16.mxu0 0
  %318 = vmatpush1.bf16.msra.mxu0 %v296
  %319 = vmatprep.subr.bf16.mxu0 0
  %320 = vmatpush1.bf16.msra.mxu0 %v297
  %321 = vmatprep.subr.bf16.mxu0 0
  %322 = vmatpush1.bf16.msra.mxu0 %v298
  %323 = vmatprep.subr.bf16.mxu0 0
  %324 = vmatpush1.bf16.msra.mxu0 0
  %325 = vmatprep.subr.bf16.mxu0 0
  %326 = vmatpush1.bf16.msra.mxu0 0
  %327 = vmatprep.subr.bf16.mxu0 0
  %328 = vmatpush1.bf16.msra.mxu0 0
  %329 = vmatprep.subr.bf16.mxu0 0
  %330 = vmatpush1.bf16.msra.mxu0 0
  %331 = vmatprep.subr.bf16.mxu0 0
  %332 = vmatpush1.bf16.msra.mxu0 0
  %333 = vmatprep.subr.bf16.mxu0 0
  %334 = vmatpush1.bf16.msra.mxu0 0
  %335 = vmatprep.subr.bf16.mxu0 0
  %336 = vmatpush1.bf16.msra.mxu0 0
  %337 = vmatprep.subr.bf16.mxu0 0
  %338 = vmatpush1.bf16.msra.mxu0 0
  %339 = vmatprep.mubr.bf16.mxu0 0
  %340 = vmatmul.mubr.bf16.gmra.mrb[0].mxu0 %v211
  %v341 = vpop.f32.mrb[0].mxu0
  %v342 = vadd.f32 0.0, %v341
  %v343 = vpop.f32.mrb[0].mxu0
  %v344 = vpop.f32.mrb[0].mxu0
  %v345 = vadd.f32 0.0, %v344
  %v346 = vpop.f32.mrb[0].mxu0
  %347 = vmatprep.mubr.bf16.mxu0 0
  %348 = vmatmul.mubr.bf16.gmra.mrb[0].mxu0 %v212
  %v349 = vpop.f32.mrb[0].mxu0
  %v350 = vadd.f32 0.0, %v349
  %v351 = vpop.f32.mrb[0].mxu0
  %v352 = vpop.f32.mrb[0].mxu0
  %v353 = vadd.f32 0.0, %v352
  %v354 = vpop.f32.mrb[0].mxu0
  %355 = vmatprep.mubr.bf16.mxu0 0
  %356 = vmatmul.mubr.bf16.gmra.mrb[0].mxu0 %v213
  %v357 = vpop.f32.mrb[0].mxu0
  %v358 = vadd.f32 0.0, %v357
  %v359 = vpop.f32.mrb[0].mxu0
  %v360 = vpop.f32.mrb[0].mxu0
  %v361 = vadd.f32 0.0, %v360
  %v362 = vpop.f32.mrb[0].mxu0
  %363 = vmatprep.mubr.bf16.mxu0 0
  %364 = vmatmul.mubr.bf16.gmra.mrb[0].mxu0 %v214
  %v365 = vpop.f32.mrb[0].mxu0
  %v366 = vadd.f32 0.0, %v365
  %v367 = vpop.f32.mrb[0].mxu0
  %v368 = vpop.f32.mrb[0].mxu0
  %v369 = vadd.f32 0.0, %v368
  %v370 = vpop.f32.mrb[0].mxu0
  %371 = vmatprep.mubr.bf16.mxu0 0
  %372 = vmatmul.mubr.bf16.gmra.mrb[0].mxu0 %v215
  %v373 = vpop.f32.mrb[0].mxu0
  %v374 = vadd.f32 0.0, %v373
  %v375 = vpop.f32.mrb[0].mxu0
  %v376 = vpop.f32.mrb[0].mxu0
  %v377 = vadd.f32 0.0, %v376
  %v378 = vpop.f32.mrb[0].mxu0
  %379 = vmatprep.mubr.bf16.mxu0 0
  %380 = vmatmul.mubr.bf16.gmra.mrb[0].mxu0 %v216
  %v381 = vpop.f32.mrb[0].mxu0
  %v382 = vadd.f32 0.0, %v381
  %v383 = vpop.f32.mrb[0].mxu0
  %v384 = vpop.f32.mrb[0].mxu0
  %v385 = vadd.f32 0.0, %v384
  %v386 = vpop.f32.mrb[0].mxu0
  %387 = vmatprep.mubr.bf16.mxu0 0
  %388 = vmatmul.mubr.bf16.gmra.mrb[0].mxu0 %v217
  %v389 = vpop.f32.mrb[0].mxu0
  %v390 = vadd.f32 0.0, %v389
  %v391 = vpop.f32.mrb[0].mxu0
  %v392 = vpop.f32.mrb[0].mxu0
  %v393 = vadd.f32 0.0, %v392
  %v394 = vpop.f32.mrb[0].mxu0
  %395 = vmatprep.mubr.bf16.mxu0 0
  %396 = vmatmul.mubr.bf16.gmra.mrb[0].mxu0 %v218
  %v397 = vpop.f32.mrb[0].mxu0
  %v398 = vadd.f32 0.0, %v397
  %v399 = vpop.f32.mrb[0].mxu0
  %v400 = vpop.f32.mrb[0].mxu0
  %v401 = vadd.f32 0.0, %v400
  %v402 = vpop.f32.mrb[0].mxu0
  %403 = vmatprep.mubr.bf16.mxu0 0
  %404 = vmatmul.mubr.bf16.gmra.mrb[0].mxu0 %v219
  %v405 = vpop.f32.mrb[0].mxu0
  %v406 = vadd.f32 0.0, %v405
  %v407 = vpop.f32.mrb[0].mxu0
  %v408 = vpop.f32.mrb[0].mxu0
  %v409 = vadd.f32 0.0, %v408
  %v410 = vpop.f32.mrb[0].mxu0
  %411 = vmatprep.mubr.bf16.mxu0 0
  %412 = vmatmul.mubr.bf16.gmra.mrb[0].mxu0 %v220
  %v413 = vpop.f32.mrb[0].mxu0
  %v414 = vadd.f32 0.0, %v413
  %v415 = vpop.f32.mrb[0].mxu0
  %v416 = vpop.f32.mrb[0].mxu0
  %v417 = vadd.f32 0.0, %v416
  %v418 = vpop.f32.mrb[0].mxu0
  %419 = vmatprep.mubr.bf16.mxu0 0
  %420 = vmatmul.mubr.bf16.gmra.mrb[0].mxu0 %v221
  %v421 = vpop.f32.mrb[0].mxu0
  %v422 = vadd.f32 0.0, %v421
  %v423 = vpop.f32.mrb[0].mxu0
  %v424 = vpop.f32.mrb[0].mxu0
  %v425 = vadd.f32 0.0, %v424
  %v426 = vpop.f32.mrb[0].mxu0
  %427 = vmatprep.mubr.bf16.mxu0 0
  %428 = vmatmul.mubr.bf16.gmra.mrb[0].mxu0 %v222
  %v429 = vpop.f32.mrb[0].mxu0
  %v430 = vadd.f32 0.0, %v429
  %v431 = vpop.f32.mrb[0].mxu0
  %v432 = vpop.f32.mrb[0].mxu0
  %v433 = vadd.f32 0.0, %v432
  %v434 = vpop.f32.mrb[0].mxu0
  %435 = vmatprep.mubr.bf16.mxu0 0
  %436 = vmatmul.mubr.bf16.gmra.mrb[0].mxu0 %v223
  %v437 = vpop.f32.mrb[0].mxu0
  %v438 = vadd.f32 0.0, %v437
  %v439 = vpop.f32.mrb[0].mxu0
  %v440 = vpop.f32.mrb[0].mxu0
  %v441 = vadd.f32 0.0, %v440
  %v442 = vpop.f32.mrb[0].mxu0
  %443 = vmatprep.mubr.bf16.mxu0 0
  %444 = vmatmul.mubr.bf16.gmra.mrb[0].mxu0 %v224
  %v445 = vpop.f32.mrb[0].mxu0
  %v446 = vadd.f32 0.0, %v445
  %v447 = vpop.f32.mrb[0].mxu0
  %v448 = vpop.f32.mrb[0].mxu0
  %v449 = vadd.f32 0.0, %v448
  %v450 = vpop.f32.mrb[0].mxu0
  %451 = vmatprep.mubr.bf16.mxu0 0
  %452 = vmatmul.mubr.bf16.gmra.mrb[0].mxu0 %v225
  %v453 = vpop.f32.mrb[0].mxu0
  %v454 = vadd.f32 0.0, %v453
  %v455 = vpop.f32.mrb[0].mxu0
  %v456 = vpop.f32.mrb[0].mxu0
  %v457 = vadd.f32 0.0, %v456
  %v458 = vpop.f32.mrb[0].mxu0
  %459 = vmatprep.mubr.bf16.mxu0 0
  %460 = vmatmul.mubr.bf16.gmra.mrb[0].mxu0 %v226
  %v461 = vpop.f32.mrb[0].mxu0
  %v462 = vadd.f32 0.0, %v461
  %v463 = vpop.f32.mrb[0].mxu0
  %v464 = vpop.f32.mrb[0].mxu0
  %v465 = vadd.f32 0.0, %v464
  %v466 = vpop.f32.mrb[0].mxu0
  %467 = vmatprep.mubr.bf16.mxu0 0
  %468 = vmatmul.mubr.bf16.gmra.mrb[0].mxu0 %v227
  %v469 = vpop.f32.mrb[0].mxu0
  %v470 = vadd.f32 0.0, %v469
  %v471 = vpop.f32.mrb[0].mxu0
  %v472 = vpop.f32.mrb[0].mxu0
  %v473 = vadd.f32 0.0, %v472
  %v474 = vpop.f32.mrb[0].mxu0
  %475 = vmatprep.mubr.bf16.mxu0 0
  %476 = vmatmul.mubr.bf16.gmra.mrb[0].mxu0 %v228
  %v477 = vpop.f32.mrb[0].mxu0
  %v478 = vadd.f32 0.0, %v477
  %v479 = vpop.f32.mrb[0].mxu0
  %v480 = vpop.f32.mrb[0].mxu0
  %v481 = vadd.f32 0.0, %v480
  %v482 = vpop.f32.mrb[0].mxu0
  %483 = vmatprep.mubr.bf16.mxu0 0
  %484 = vmatmul.mubr.bf16.gmra.mrb[0].mxu0 %v229
  %v485 = vpop.f32.mrb[0].mxu0
  %v486 = vadd.f32 0.0, %v485
  %v487 = vpop.f32.mrb[0].mxu0
  %v488 = vpop.f32.mrb[0].mxu0
  %v489 = vadd.f32 0.0, %v488
  %v490 = vpop.f32.mrb[0].mxu0
  %491 = vmatprep.mubr.bf16.mxu0 0
  %492 = vmatmul.mubr.bf16.gmra.mrb[0].mxu0 %v230
  %v493 = vpop.f32.mrb[0].mxu0
  %v494 = vadd.f32 0.0, %v493
  %v495 = vpop.f32.mrb[0].mxu0
  %v496 = vpop.f32.mrb[0].mxu0
  %v497 = vadd.f32 0.0, %v496
  %v498 = vpop.f32.mrb[0].mxu0
  %499 = vmatprep.mubr.bf16.mxu0 0
  %500 = vmatmul.mubr.bf16.gmra.mrb[0].mxu0 %v231
  %v501 = vpop.f32.mrb[0].mxu0
  %v502 = vadd.f32 0.0, %v501
  %v503 = vpop.f32.mrb[0].mxu0
  %v504 = vpop.f32.mrb[0].mxu0
  %v505 = vadd.f32 0.0, %v504
  %v506 = vpop.f32.mrb[0].mxu0
  %507 = vmatprep.mubr.bf16.mxu0 0
  %508 = vmatmul.mubr.bf16.gmra.mrb[0].mxu0 %v232
  %v509 = vpop.f32.mrb[0].mxu0
  %v510 = vadd.f32 0.0, %v509
  %v511 = vpop.f32.mrb[0].mxu0
  %v512 = vpop.f32.mrb[0].mxu0
  %v513 = vadd.f32 0.0, %v512
  %v514 = vpop.f32.mrb[0].mxu0
  %515 = vmatprep.mubr.bf16.mxu0 0
  %516 = vmatmul.mubr.bf16.gmra.mrb[0].mxu0 %v233
  %v517 = vpop.f32.mrb[0].mxu0
  %v518 = vadd.f32 0.0, %v517
  %v519 = vpop.f32.mrb[0].mxu0
  %v520 = vpop.f32.mrb[0].mxu0
  %v521 = vadd.f32 0.0, %v520
  %v522 = vpop.f32.mrb[0].mxu0
  %523 = vmatprep.mubr.bf16.mxu0 0
  %524 = vmatmul.mubr.bf16.gmra.mrb[0].mxu0 %v234
  %v525 = vpop.f32.mrb[0].mxu0
  %v526 = vadd.f32 0.0, %v525
  %v527 = vpop.f32.mrb[0].mxu0
  %v528 = vpop.f32.mrb[0].mxu0
  %v529 = vadd.f32 0.0, %v528
  %v530 = vpop.f32.mrb[0].mxu0
  %531 = vmatprep.mubr.bf16.mxu0 0
  %532 = vmatmul.mubr.bf16.gmra.mrb[0].mxu0 %v235
  %v533 = vpop.f32.mrb[0].mxu0
  %v534 = vadd.f32 0.0, %v533
  %v535 = vpop.f32.mrb[0].mxu0
  %v536 = vpop.f32.mrb[0].mxu0
  %v537 = vadd.f32 0.0, %v536
  %v538 = vpop.f32.mrb[0].mxu0
  %539 = vmatprep.mubr.bf16.mxu0 0
  %540 = vmatmul.mubr.bf16.gmra.mrb[0].mxu0 %v236
  %v541 = vpop.f32.mrb[0].mxu0
  %v542 = vadd.f32 0.0, %v541
  %v543 = vpop.f32.mrb[0].mxu0
  %v544 = vpop.f32.mrb[0].mxu0
  %v545 = vadd.f32 0.0, %v544
  %v546 = vpop.f32.mrb[0].mxu0
  %547 = vmatprep.mubr.bf16.mxu0 0
  %548 = vmatmul.mubr.bf16.gmra.mrb[0].mxu0 %v237
  %v549 = vpop.f32.mrb[0].mxu0
  %v550 = vadd.f32 0.0, %v549
  %v551 = vpop.f32.mrb[0].mxu0
  %v552 = vpop.f32.mrb[0].mxu0
  %v553 = vadd.f32 0.0, %v552
  %v554 = vpop.f32.mrb[0].mxu0
  %555 = vmatprep.mubr.bf16.mxu0 0
  %556 = vmatmul.mubr.bf16.gmra.mrb[0].mxu0 %v238
  %v557 = vpop.f32.mrb[0].mxu0
  %v558 = vadd.f32 0.0, %v557
  %v559 = vpop.f32.mrb[0].mxu0
  %v560 = vpop.f32.mrb[0].mxu0
  %v561 = vadd.f32 0.0, %v560
  %v562 = vpop.f32.mrb[0].mxu0
  %563 = vmatprep.mubr.bf16.mxu0 0
  %564 = vmatmul.mubr.bf16.gmra.mrb[0].mxu0 %v239
  %v565 = vpop.f32.mrb[0].mxu0
  %v566 = vadd.f32 0.0, %v565
  %v567 = vpop.f32.mrb[0].mxu0
  %v568 = vpop.f32.mrb[0].mxu0
  %v569 = vadd.f32 0.0, %v568
  %v570 = vpop.f32.mrb[0].mxu0
  %571 = vmatprep.mubr.bf16.mxu0 0
  %572 = vmatmul.mubr.bf16.gmra.mrb[0].mxu0 %v240
  %v573 = vpop.f32.mrb[0].mxu0
  %v574 = vadd.f32 0.0, %v573
  %v575 = vpop.f32.mrb[0].mxu0
  %v576 = vpop.f32.mrb[0].mxu0
  %v577 = vadd.f32 0.0, %v576
  %v578 = vpop.f32.mrb[0].mxu0
  %579 = vmatprep.mubr.bf16.mxu0 0
  %580 = vmatmul.mubr.bf16.gmra.mrb[0].mxu0 %v241
  %v581 = vpop.f32.mrb[0].mxu0
  %v582 = vadd.f32 0.0, %v581
  %v583 = vpop.f32.mrb[0].mxu0
  %v584 = vpop.f32.mrb[0].mxu0
  %v585 = vadd.f32 0.0, %v584
  %v586 = vpop.f32.mrb[0].mxu0
  %587 = vmatprep.mubr.bf16.mxu0 0
  %588 = vmatmul.mubr.bf16.gmra.mrb[0].mxu0 %v242
  %v589 = vpop.f32.mrb[0].mxu0
  %v590 = vadd.f32 0.0, %v589
  %v591 = vpop.f32.mrb[0].mxu0
  %v592 = vpop.f32.mrb[0].mxu0
  %v593 = vadd.f32 0.0, %v592
  %v594 = vpop.f32.mrb[0].mxu0
  %595 = vdwg.mxu0
  %v596 = vadd.f32 %v83, %v342
  %v597 = vadd.f32 %v84, %v345
  %v598 = vadd.f32 %v85, %v350
  %v599 = vadd.f32 %v86, %v353
  %v600 = vadd.f32 %v87, %v358
  %v601 = vadd.f32 %v88, %v361
  %v602 = vadd.f32 %v89, %v366
  %v603 = vadd.f32 %v90, %v369
  %v604 = vadd.f32 %v91, %v374
  %v605 = vadd.f32 %v92, %v377
  %v606 = vadd.f32 %v93, %v382
  %v607 = vadd.f32 %v94, %v385
  %v608 = vadd.f32 %v95, %v390
  %v609 = vadd.f32 %v96, %v393
  %v610 = vadd.f32 %v97, %v398
  %v611 = vadd.f32 %v98, %v401
  %v612 = vadd.f32 %v99, %v406
  %v613 = vadd.f32 %v100, %v409
  %v614 = vadd.f32 %v101, %v414
  %v615 = vadd.f32 %v102, %v417
  %v616 = vadd.f32 %v103, %v422
  %v617 = vadd.f32 %v104, %v425
  %v618 = vadd.f32 %v105, %v430
  %v619 = vadd.f32 %v106, %v433
  %v620 = vadd.f32 %v107, %v438
  %v621 = vadd.f32 %v108, %v441
  %v622 = vadd.f32 %v109, %v446
  %v623 = vadd.f32 %v110, %v449
  %v624 = vadd.f32 %v111, %v454
  %v625 = vadd.f32 %v112, %v457
  %v626 = vadd.f32 %v113, %v462
  %v627 = vadd.f32 %v114, %v465
  %v628 = vadd.f32 %v115, %v470
  %v629 = vadd.f32 %v116, %v473
  %v630 = vadd.f32 %v117, %v478
  %v631 = vadd.f32 %v118, %v481
  %v632 = vadd.f32 %v119, %v486
  %v633 = vadd.f32 %v120, %v489
  %v634 = vadd.f32 %v121, %v494
  %v635 = vadd.f32 %v122, %v497
  %v636 = vadd.f32 %v123, %v502
  %v637 = vadd.f32 %v124, %v505
  %v638 = vadd.f32 %v125, %v510
  %v639 = vadd.f32 %v126, %v513
  %v640 = vadd.f32 %v127, %v518
  %v641 = vadd.f32 %v128, %v521
  %v642 = vadd.f32 %v129, %v526
  %v643 = vadd.f32 %v130, %v529
  %v644 = vadd.f32 %v131, %v534
  %v645 = vadd.f32 %v132, %v537
  %v646 = vadd.f32 %v133, %v542
  %v647 = vadd.f32 %v134, %v545
  %v648 = vadd.f32 %v135, %v550
  %v649 = vadd.f32 %v136, %v553
  %v650 = vadd.f32 %v137, %v558
  %v651 = vadd.f32 %v138, %v561
  %v652 = vadd.f32 %v139, %v566
  %v653 = vadd.f32 %v140, %v569
  %v654 = vadd.f32 %v141, %v574
  %v655 = vadd.f32 %v142, %v577
  %v656 = vadd.f32 %v143, %v582
  %v657 = vadd.f32 %v144, %v585
  %v658 = vadd.f32 %v145, %v590
  %v659 = vadd.f32 %v146, %v593
  %660 = vst [vmem:[#allocation2] sm:$0xff] %v596
  %661 = vst [vmem:[#allocation2 + $0x8] sm:$0xff] %v597
  %662 = vst [vmem:[#allocation2 + $0x10] sm:$0xff] %v598
  %663 = vst [vmem:[#allocation2 + $0x18] sm:$0xff] %v599
  %664 = vst [vmem:[#allocation2 + $0x20] sm:$0xff] %v600
  %665 = vst [vmem:[#allocation2 + $0x28] sm:$0xff] %v601
  %666 = vst [vmem:[#allocation2 + $0x30] sm:$0xff] %v602
  %667 = vst [vmem:[#allocation2 + $0x38] sm:$0xff] %v603
  %668 = vst [vmem:[#allocation2 + $0x40] sm:$0xff] %v604
  %669 = vst [vmem:[#allocation2 + $0x48] sm:$0xff] %v605
  %670 = vst [vmem:[#allocation2 + $0x50] sm:$0xff] %v606
  %671 = vst [vmem:[#allocation2 + $0x58] sm:$0xff] %v607
  %672 = vst [vmem:[#allocation2 + $0x60] sm:$0xff] %v608
  %673 = vst [vmem:[#allocation2 + $0x68] sm:$0xff] %v609
  %674 = vst [vmem:[#allocation2 + $0x70] sm:$0xff] %v610
  %675 = vst [vmem:[#allocation2 + $0x78] sm:$0xff] %v611
  %676 = vst [vmem:[#allocation2 + $0x80] sm:$0xff] %v612
  %677 = vst [vmem:[#allocation2 + $0x88] sm:$0xff] %v613
  %678 = vst [vmem:[#allocation2 + $0x90] sm:$0xff] %v614
  %679 = vst [vmem:[#allocation2 + $0x98] sm:$0xff] %v615
  %680 = vst [vmem:[#allocation2 + $0xa0] sm:$0xff] %v616
  %681 = vst [vmem:[#allocation2 + $0xa8] sm:$0xff] %v617
  %682 = vst [vmem:[#allocation2 + $0xb0] sm:$0xff] %v618
  %683 = vst [vmem:[#allocation2 + $0xb8] sm:$0xff] %v619
  %684 = vst [vmem:[#allocation2 + $0xc0] sm:$0xff] %v620
  %685 = vst [vmem:[#allocation2 + $0xc8] sm:$0xff] %v621
  %686 = vst [vmem:[#allocation2 + $0xd0] sm:$0xff] %v622
  %687 = vst [vmem:[#allocation2 + $0xd8] sm:$0xff] %v623
  %688 = vst [vmem:[#allocation2 + $0xe0] sm:$0xff] %v624
  %689 = vst [vmem:[#allocation2 + $0xe8] sm:$0xff] %v625
  %690 = vst [vmem:[#allocation2 + $0xf0] sm:$0xff] %v626
  %691 = vst [vmem:[#allocation2 + $0xf8] sm:$0xff] %v627
  %692 = vst [vmem:[#allocation2 + $0x100] sm:$0xff] %v628
  %693 = vst [vmem:[#allocation2 + $0x108] sm:$0xff] %v629
  %694 = vst [vmem:[#allocation2 + $0x110] sm:$0xff] %v630
  %695 = vst [vmem:[#allocation2 + $0x118] sm:$0xff] %v631
  %696 = vst [vmem:[#allocation2 + $0x120] sm:$0xff] %v632
  %697 = vst [vmem:[#allocation2 + $0x128] sm:$0xff] %v633
  %698 = vst [vmem:[#allocation2 + $0x130] sm:$0xff] %v634
  %699 = vst [vmem:[#allocation2 + $0x138] sm:$0xff] %v635
  %700 = vst [vmem:[#allocation2 + $0x140] sm:$0xff] %v636
  %701 = vst [vmem:[#allocation2 + $0x148] sm:$0xff] %v637
  %702 = vst [vmem:[#allocation2 + $0x150] sm:$0xff] %v638
  %703 = vst [vmem:[#allocation2 + $0x158] sm:$0xff] %v639
  %704 = vst [vmem:[#allocation2 + $0x160] sm:$0xff] %v640
  %705 = vst [vmem:[#allocation2 + $0x168] sm:$0xff] %v641
  %706 = vst [vmem:[#allocation2 + $0x170] sm:$0xff] %v642
  %707 = vst [vmem:[#allocation2 + $0x178] sm:$0xff] %v643
  %708 = vst [vmem:[#allocation2 + $0x180] sm:$0xff] %v644
  %709 = vst [vmem:[#allocation2 + $0x188] sm:$0xff] %v645
  %710 = vst [vmem:[#allocation2 + $0x190] sm:$0xff] %v646
  %711 = vst [vmem:[#allocation2 + $0x198] sm:$0xff] %v647
  %712 = vst [vmem:[#allocation2 + $0x1a0] sm:$0xff] %v648
  %713 = vst [vmem:[#allocation2 + $0x1a8] sm:$0xff] %v649
  %714 = vst [vmem:[#allocation2 + $0x1b0] sm:$0xff] %v650
  %715 = vst [vmem:[#allocation2 + $0x1b8] sm:$0xff] %v651
  %716 = vst [vmem:[#allocation2 + $0x1c0] sm:$0xff] %v652
  %717 = vst [vmem:[#allocation2 + $0x1c8] sm:$0xff] %v653
  %718 = vst [vmem:[#allocation2 + $0x1d0] sm:$0xff] %v654
  %719 = vst [vmem:[#allocation2 + $0x1d8] sm:$0xff] %v655
  %720 = vst [vmem:[#allocation2 + $0x1e0] sm:$0xff] %v656
  %721 = vst [vmem:[#allocation2 + $0x1e8] sm:$0xff] %v657
  %722 = vst [vmem:[#allocation2 + $0x1f0] sm:$0xff] %v658
  %723 = vst [vmem:[#allocation2 + $0x1f8] sm:$0xff] %v659
  // Predicated region
  $region18: #{bottleneck_forward.3} parent=0 // pred_check
    %p724 = pneg %p15
  $region19: #{bottleneck_forward.3} parent=0 // pred_check_branch
    %726 = sbr.rel (%p724) target = $region21
  $region20: #{bottleneck_forward.3} parent=0 // pred_region
    %v727 = vld [vmem:[#allocation2] sm:$0xff]
    %v728 = vld [vmem:[#allocation2 + $0x8] sm:$0xff]
    %v729 = vld [vmem:[#allocation2 + $0x10] sm:$0xff]
    %v730 = vld [vmem:[#allocation2 + $0x18] sm:$0xff]
    %v731 = vld [vmem:[#allocation2 + $0x20] sm:$0xff]
    %v732 = vld [vmem:[#allocation2 + $0x28] sm:$0xff]
    %v733 = vld [vmem:[#allocation2 + $0x30] sm:$0xff]
    %v734 = vld [vmem:[#allocation2 + $0x38] sm:$0xff]
    %v735 = vld [vmem:[#allocation2 + $0x40] sm:$0xff]
    %v736 = vld [vmem:[#allocation2 + $0x48] sm:$0xff]
    %v737 = vld [vmem:[#allocation2 + $0x50] sm:$0xff]
    %v738 = vld [vmem:[#allocation2 + $0x58] sm:$0xff]
    %v739 = vld [vmem:[#allocation2 + $0x60] sm:$0xff]
    %v740 = vld [vmem:[#allocation2 + $0x68] sm:$0xff]
    %v741 = vld [vmem:[#allocation2 + $0x70] sm:$0xff]
    %v742 = vld [vmem:[#allocation2 + $0x78] sm:$0xff]
    %v743 = vld [vmem:[#allocation2 + $0x80] sm:$0xff]
    %v744 = vld [vmem:[#allocation2 + $0x88] sm:$0xff]
    %v745 = vld [vmem:[#allocation2 + $0x90] sm:$0xff]
    %v746 = vld [vmem:[#allocation2 + $0x98] sm:$0xff]
    %v747 = vld [vmem:[#allocation2 + $0xa0] sm:$0xff]
    %v748 = vld [vmem:[#allocation2 + $0xa8] sm:$0xff]
    %v749 = vld [vmem:[#allocation2 + $0xb0] sm:$0xff]
    %v750 = vld [vmem:[#allocation2 + $0xb8] sm:$0xff]
    %v751 = vld [vmem:[#allocation2 + $0xc0] sm:$0xff]
    %v752 = vld [vmem:[#allocation2 + $0xc8] sm:$0xff]
    %v753 = vld [vmem:[#allocation2 + $0xd0] sm:$0xff]
    %v754 = vld [vmem:[#allocation2 + $0xd8] sm:$0xff]
    %v755 = vld [vmem:[#allocation2 + $0xe0] sm:$0xff]
    %v756 = vld [vmem:[#allocation2 + $0xe8] sm:$0xff]
    %v757 = vld [vmem:[#allocation2 + $0xf0] sm:$0xff]
    %v758 = vld [vmem:[#allocation2 + $0xf8] sm:$0xff]
    %v759 = vld [vmem:[#allocation2 + $0x100] sm:$0xff]
    %v760 = vld [vmem:[#allocation2 + $0x108] sm:$0xff]
    %v761 = vld [vmem:[#allocation2 + $0x110] sm:$0xff]
    %v762 = vld [vmem:[#allocation2 + $0x118] sm:$0xff]
    %v763 = vld [vmem:[#allocation2 + $0x120] sm:$0xff]
    %v764 = vld [vmem:[#allocation2 + $0x128] sm:$0xff]
    %v765 = vld [vmem:[#allocation2 + $0x130] sm:$0xff]
    %v766 = vld [vmem:[#allocation2 + $0x138] sm:$0xff]
    %v767 = vld [vmem:[#allocation2 + $0x140] sm:$0xff]
    %v768 = vld [vmem:[#allocation2 + $0x148] sm:$0xff]
    %v769 = vld [vmem:[#allocation2 + $0x150] sm:$0xff]
    %v770 = vld [vmem:[#allocation2 + $0x158] sm:$0xff]
    %v771 = vld [vmem:[#allocation2 + $0x160] sm:$0xff]
    %v772 = vld [vmem:[#allocation2 + $0x168] sm:$0xff]
    %v773 = vld [vmem:[#allocation2 + $0x170] sm:$0xff]
    %v774 = vld [vmem:[#allocation2 + $0x178] sm:$0xff]
    %v775 = vld [vmem:[#allocation2 + $0x180] sm:$0xff]
    %v776 = vld [vmem:[#allocation2 + $0x188] sm:$0xff]
    %v777 = vld [vmem:[#allocation2 + $0x190] sm:$0xff]
    %v778 = vld [vmem:[#allocation2 + $0x198] sm:$0xff]
    %v779 = vld [vmem:[#allocation2 + $0x1a0] sm:$0xff]
    %v780 = vld [vmem:[#allocation2 + $0x1a8] sm:$0xff]
    %v781 = vld [vmem:[#allocation2 + $0x1b0] sm:$0xff]
    %v782 = vld [vmem:[#allocation2 + $0x1b8] sm:$0xff]
    %v783 = vld [vmem:[#allocation2 + $0x1c0] sm:$0xff]
    %v784 = vld [vmem:[#allocation2 + $0x1c8] sm:$0xff]
    %v785 = vld [vmem:[#allocation2 + $0x1d0] sm:$0xff]
    %v786 = vld [vmem:[#allocation2 + $0x1d8] sm:$0xff]
    %v787 = vld [vmem:[#allocation2 + $0x1e0] sm:$0xff]
    %v788 = vld [vmem:[#allocation2 + $0x1e8] sm:$0xff]
    %v789 = vld [vmem:[#allocation2 + $0x1f0] sm:$0xff]
    %v790 = vld [vmem:[#allocation2 + $0x1f8] sm:$0xff]
    %v791 = vld [vmem:[%s2] sm:$0x1]
    %v793 = vlaneseq
    %v794 = vshrl.u32 %v793, 7
    %v795 = vsub.s32 0, %v794
    %v796 = vrot.slane %v791, %v795
    %v798 = vadd.f32 %v727, %v796
    %v799 = vadd.f32 %v728, %v796
    %v800 = vadd.f32 %v729, %v796
    %v801 = vadd.f32 %v730, %v796
    %v802 = vadd.f32 %v731, %v796
    %v803 = vadd.f32 %v732, %v796
    %v804 = vadd.f32 %v733, %v796
    %v805 = vadd.f32 %v734, %v796
    %v806 = vadd.f32 %v735, %v796
    %v807 = vadd.f32 %v736, %v796
    %v808 = vadd.f32 %v737, %v796
    %v809 = vadd.f32 %v738, %v796
    %v810 = vadd.f32 %v739, %v796
    %v811 = vadd.f32 %v740, %v796
    %v812 = vadd.f32 %v741, %v796
    %v813 = vadd.f32 %v742, %v796
    %v814 = vadd.f32 %v743, %v796
    %v815 = vadd.f32 %v744, %v796
    %v816 = vadd.f32 %v745, %v796
    %v817 = vadd.f32 %v746, %v796
    %v818 = vadd.f32 %v747, %v796
    %v819 = vadd.f32 %v748, %v796
    %v820 = vadd.f32 %v749, %v796
    %v821 = vadd.f32 %v750, %v796
    %v822 = vadd.f32 %v751, %v796
    %v823 = vadd.f32 %v752, %v796
    %v824 = vadd.f32 %v753, %v796
    %v825 = vadd.f32 %v754, %v796
    %v826 = vadd.f32 %v755, %v796
    %v827 = vadd.f32 %v756, %v796
    %v828 = vadd.f32 %v757, %v796
    %v829 = vadd.f32 %v758, %v796
    %v830 = vadd.f32 %v759, %v796
    %v831 = vadd.f32 %v760, %v796
    %v832 = vadd.f32 %v761, %v796
    %v833 = vadd.f32 %v762, %v796
    %v834 = vadd.f32 %v763, %v796
    %v835 = vadd.f32 %v764, %v796
    %v836 = vadd.f32 %v765, %v796
    %v837 = vadd.f32 %v766, %v796
    %v838 = vadd.f32 %v767, %v796
    %v839 = vadd.f32 %v768, %v796
    %v840 = vadd.f32 %v769, %v796
    %v841 = vadd.f32 %v770, %v796
    %v842 = vadd.f32 %v771, %v796
    %v843 = vadd.f32 %v772, %v796
    %v844 = vadd.f32 %v773, %v796
    %v845 = vadd.f32 %v774, %v796
    %v846 = vadd.f32 %v775, %v796
    %v847 = vadd.f32 %v776, %v796
    %v848 = vadd.f32 %v777, %v796
    %v849 = vadd.f32 %v778, %v796
    %v850 = vadd.f32 %v779, %v796
    %v851 = vadd.f32 %v780, %v796
    %v852 = vadd.f32 %v781, %v796
    %v853 = vadd.f32 %v782, %v796
    %v854 = vadd.f32 %v783, %v796
    %v855 = vadd.f32 %v784, %v796
    %v856 = vadd.f32 %v785, %v796
    %v857 = vadd.f32 %v786, %v796
    %v858 = vadd.f32 %v787, %v796
    %v859 = vadd.f32 %v788, %v796
    %v860 = vadd.f32 %v789, %v796
    %v861 = vadd.f32 %v790, %v796
    %v862 = vmax.f32 %v798, 0.0
    %v863 = vmax.f32 %v799, 0.0
    %v864 = vmax.f32 %v800, 0.0
    %v865 = vmax.f32 %v801, 0.0
    %v866 = vmax.f32 %v802, 0.0
    %v867 = vmax.f32 %v803, 0.0
    %v868 = vmax.f32 %v804, 0.0
    %v869 = vmax.f32 %v805, 0.0
    %v870 = vmax.f32 %v806, 0.0
    %v871 = vmax.f32 %v807, 0.0
    %v872 = vmax.f32 %v808, 0.0
    %v873 = vmax.f32 %v809, 0.0
    %v874 = vmax.f32 %v810, 0.0
    %v875 = vmax.f32 %v811, 0.0
    %v876 = vmax.f32 %v812, 0.0
    %v877 = vmax.f32 %v813, 0.0
    %v878 = vmax.f32 %v814, 0.0
    %v879 = vmax.f32 %v815, 0.0
    %v880 = vmax.f32 %v816, 0.0
    %v881 = vmax.f32 %v817, 0.0
    %v882 = vmax.f32 %v818, 0.0
    %v883 = vmax.f32 %v819, 0.0
    %v884 = vmax.f32 %v820, 0.0
    %v885 = vmax.f32 %v821, 0.0
    %v886 = vmax.f32 %v822, 0.0
    %v887 = vmax.f32 %v823, 0.0
    %v888 = vmax.f32 %v824, 0.0
    %v889 = vmax.f32 %v825, 0.0
    %v890 = vmax.f32 %v826, 0.0
    %v891 = vmax.f32 %v827, 0.0
    %v892 = vmax.f32 %v828, 0.0
    %v893 = vmax.f32 %v829, 0.0
    %v894 = vmax.f32 %v830, 0.0
    %v895 = vmax.f32 %v831, 0.0
    %v896 = vmax.f32 %v832, 0.0
    %v897 = vmax.f32 %v833, 0.0
    %v898 = vmax.f32 %v834, 0.0
    %v899 = vmax.f32 %v835, 0.0
    %v900 = vmax.f32 %v836, 0.0
    %v901 = vmax.f32 %v837, 0.0
    %v902 = vmax.f32 %v838, 0.0
    %v903 = vmax.f32 %v839, 0.0
    %v904 = vmax.f32 %v840, 0.0
    %v905 = vmax.f32 %v841, 0.0
    %v906 = vmax.f32 %v842, 0.0
    %v907 = vmax.f32 %v843, 0.0
    %v908 = vmax.f32 %v844, 0.0
    %v909 = vmax.f32 %v845, 0.0
    %v910 = vmax.f32 %v846, 0.0
    %v911 = vmax.f32 %v847, 0.0
    %v912 = vmax.f32 %v848, 0.0
    %v913 = vmax.f32 %v849, 0.0
    %v914 = vmax.f32 %v850, 0.0
    %v915 = vmax.f32 %v851, 0.0
    %v916 = vmax.f32 %v852, 0.0
    %v917 = vmax.f32 %v853, 0.0
    %v918 = vmax.f32 %v854, 0.0
    %v919 = vmax.f32 %v855, 0.0
    %v920 = vmax.f32 %v856, 0.0
    %v921 = vmax.f32 %v857, 0.0
    %v922 = vmax.f32 %v858, 0.0
    %v923 = vmax.f32 %v859, 0.0
    %v924 = vmax.f32 %v860, 0.0
    %v925 = vmax.f32 %v861, 0.0
    %926 = vst [vmem:[%s3] sm:$0xff] %v862
    %927 = vst [vmem:[%s3 + $0x8] sm:$0xff] %v863
    %928 = vst [vmem:[%s3 + $0x10] sm:$0xff] %v864
    %929 = vst [vmem:[%s3 + $0x18] sm:$0xff] %v865
    %930 = vst [vmem:[%s3 + $0x20] sm:$0xff] %v866
    %931 = vst [vmem:[%s3 + $0x28] sm:$0xff] %v867
    %932 = vst [vmem:[%s3 + $0x30] sm:$0xff] %v868
    %933 = vst [vmem:[%s3 + $0x38] sm:$0xff] %v869
    %934 = vst [vmem:[%s3 + $0x40] sm:$0xff] %v870
    %935 = vst [vmem:[%s3 + $0x48] sm:$0xff] %v871
    %936 = vst [vmem:[%s3 + $0x50] sm:$0xff] %v872
    %937 = vst [vmem:[%s3 + $0x58] sm:$0xff] %v873
    %938 = vst [vmem:[%s3 + $0x60] sm:$0xff] %v874
    %939 = vst [vmem:[%s3 + $0x68] sm:$0xff] %v875
    %940 = vst [vmem:[%s3 + $0x70] sm:$0xff] %v876
    %941 = vst [vmem:[%s3 + $0x78] sm:$0xff] %v877
    %942 = vst [vmem:[%s3 + $0x80] sm:$0xff] %v878
    %943 = vst [vmem:[%s3 + $0x88] sm:$0xff] %v879
    %944 = vst [vmem:[%s3 + $0x90] sm:$0xff] %v880
    %945 = vst [vmem:[%s3 + $0x98] sm:$0xff] %v881
    %946 = vst [vmem:[%s3 + $0xa0] sm:$0xff] %v882
    %947 = vst [vmem:[%s3 + $0xa8] sm:$0xff] %v883
    %948 = vst [vmem:[%s3 + $0xb0] sm:$0xff] %v884
    %949 = vst [vmem:[%s3 + $0xb8] sm:$0xff] %v885
    %950 = vst [vmem:[%s3 + $0xc0] sm:$0xff] %v886
    %951 = vst [vmem:[%s3 + $0xc8] sm:$0xff] %v887
    %952 = vst [vmem:[%s3 + $0xd0] sm:$0xff] %v888
    %953 = vst [vmem:[%s3 + $0xd8] sm:$0xff] %v889
    %954 = vst [vmem:[%s3 + $0xe0] sm:$0xff] %v890
    %955 = vst [vmem:[%s3 + $0xe8] sm:$0xff] %v891
    %956 = vst [vmem:[%s3 + $0xf0] sm:$0xff] %v892
    %957 = vst [vmem:[%s3 + $0xf8] sm:$0xff] %v893
    %958 = vst [vmem:[%s3 + $0x100] sm:$0xff] %v894
    %959 = vst [vmem:[%s3 + $0x108] sm:$0xff] %v895
    %960 = vst [vmem:[%s3 + $0x110] sm:$0xff] %v896
    %961 = vst [vmem:[%s3 + $0x118] sm:$0xff] %v897
    %962 = vst [vmem:[%s3 + $0x120] sm:$0xff] %v898
    %963 = vst [vmem:[%s3 + $0x128] sm:$0xff] %v899
    %964 = vst [vmem:[%s3 + $0x130] sm:$0xff] %v900
    %965 = vst [vmem:[%s3 + $0x138] sm:$0xff] %v901
    %966 = vst [vmem:[%s3 + $0x140] sm:$0xff] %v902
    %967 = vst [vmem:[%s3 + $0x148] sm:$0xff] %v903
    %968 = vst [vmem:[%s3 + $0x150] sm:$0xff] %v904
    %969 = vst [vmem:[%s3 + $0x158] sm:$0xff] %v905
    %970 = vst [vmem:[%s3 + $0x160] sm:$0xff] %v906
    %971 = vst [vmem:[%s3 + $0x168] sm:$0xff] %v907
    %972 = vst [vmem:[%s3 + $0x170] sm:$0xff] %v908
    %973 = vst [vmem:[%s3 + $0x178] sm:$0xff] %v909
    %974 = vst [vmem:[%s3 + $0x180] sm:$0xff] %v910
    %975 = vst [vmem:[%s3 + $0x188] sm:$0xff] %v911
    %976 = vst [vmem:[%s3 + $0x190] sm:$0xff] %v912
    %977 = vst [vmem:[%s3 + $0x198] sm:$0xff] %v913
    %978 = vst [vmem:[%s3 + $0x1a0] sm:$0xff] %v914
    %979 = vst [vmem:[%s3 + $0x1a8] sm:$0xff] %v915
    %980 = vst [vmem:[%s3 + $0x1b0] sm:$0xff] %v916
    %981 = vst [vmem:[%s3 + $0x1b8] sm:$0xff] %v917
    %982 = vst [vmem:[%s3 + $0x1c0] sm:$0xff] %v918
    %983 = vst [vmem:[%s3 + $0x1c8] sm:$0xff] %v919
    %984 = vst [vmem:[%s3 + $0x1d0] sm:$0xff] %v920
    %985 = vst [vmem:[%s3 + $0x1d8] sm:$0xff] %v921
    %986 = vst [vmem:[%s3 + $0x1e0] sm:$0xff] %v922
    %987 = vst [vmem:[%s3 + $0x1e8] sm:$0xff] %v923
    %988 = vst [vmem:[%s3 + $0x1f0] sm:$0xff] %v924
    %989 = vst [vmem:[%s3 + $0x1f8] sm:$0xff] %v925
  $region21: #{bottleneck_forward.3} parent=0 // pred_fallthru
    _
  // Predicated region
  $region22: #{bottleneck_forward.3} parent=0 // pred_check
    _
  $region23: #{bottleneck_forward.3} parent=0 // pred_check_branch
    %991 = sbr.rel (0) target = $region25
  $region24: #{bottleneck_forward.3} parent=0 // pred_region
    _
  $region25: #{bottleneck_forward.3} parent=0 // pred_fallthru
    _
  // Predicated region
  $region26: #{bottleneck_forward.3} parent=0 // pred_check
    _
  $region27: #{bottleneck_forward.3} parent=0 // pred_check_branch
    %993 = sbr.rel (0) target = $region29
  $region28: #{bottleneck_forward.3} parent=0 // pred_region
    _
  $region29: #{bottleneck_forward.3} parent=0 // pred_fallthru
    _

// kernel: bottleneck_forward.4
$region0: #{bottleneck_forward.4}
  #allocation0 [shape = 'u32[]', space=smem, size = 0x4, offset = 0x4, fixed_abs, tag = 'smem constant byte address 0x4 - core index']
  #allocation1 [shape = 'u32[144,128]{1,0:T(1,128)}', space=vmem, size = 0x12000, scoped, tag = 'internal scratch']
  %s0 = inlined_call_operand.vmem [shape: f32[8,9,9,128], index: 0, kind: input, shape index: {}]
  %s1 = inlined_call_operand.vmem [shape: bf16[9,128,128], index: 1, kind: input, shape index: {}]
  %s2 = inlined_call_operand.vmem [shape: f32[1,128], index: 2, kind: input, shape index: {}]
  %s3 = inlined_call_operand.vmem [shape: bf16[2,64,128], index: 3, kind: output, shape index: {}]
  %s4 = sld [smem:[#allocation0]]
  $region45: #{bottleneck_forward.4} parent=0
    _
  %s6 = ssub.s32 1, %s4
  %s7 = scalar_select 0, %s6, %s4
  loop: start=0, step=1, limit=4
  $region2: #{bottleneck_forward.4} parent=0 // loop_pre_header
    _
  $region3: #{bottleneck_forward.4} parent=0 // loop_header
    %s9 = sphi 0, %s13
    %p10 = scmp.ge.s32.totalorder %s9, 4
    %s19 = sphi 0, %s21
    %s22 = sphi 0, %s19
    %s23 = sphi 0, %s22
    %s39 = sphi 0, %s23
    %s43 = sphi 0, %s43
    %s45 = sphi 0, %s43
    %s46 = sphi 0, %s45
    %s60 = sphi 0, %s46
    %s64 = sphi 0, %s64
    %s66 = sphi 0, %s64
    %s67 = sphi 0, %s66
    %s81 = sphi 0, %s67
    %s87 = sphi 0, %s89
    %s90 = sphi 0, %s87
    %s91 = sphi 0, %s90
    %s107 = sphi 0, %s91
  $region4: #{bottleneck_forward.4} parent=0 // loop_header_branch
    %12 = sbr.rel (%p10) target = $region8
  $region5: #{bottleneck_forward.4} parent=0 // loop_body
    %s14 = ssub.s32 %s9, 1
    %s15 = ssub.s32 %s9, 2
    %s16 = sadd.s32 %s9, 1
    %s17 = ssub.s32 %s9, %s16
    %p18 = scmp.eq.s32.totalorder %s17, 0
    %s20 = sadd.s32 %s19, 1
    %s21 = scalar_select %p18, %s19, %s20
    %p24 = pneg %p18
    %p25 = scmp.eq.s32.totalorder %s9, 1
    %p26 = por %p24, %p25
    %p27 = scmp.ne.s32.totalorder %s19, %s22
    %p28 = scmp.eq.s32.totalorder %s9, 0
    %p29 = por %p27, %p28
    %p30 = scmp.ne.s32.totalorder %s19, %s22
    %p31 = scmp.eq.s32.totalorder %s14, 1
    %p32 = por %p30, %p31
    %p33 = scmp.ne.s32.totalorder %s22, %s23
    %p34 = scmp.eq.s32.totalorder %s14, 0
    %p35 = por %p33, %p34
    %p36 = scmp.ne.s32.totalorder %s22, %s23
    %p37 = scmp.eq.s32.totalorder %s15, 1
    %p38 = por %p36, %p37
    %p40 = scmp.ne.s32.totalorder %s23, %s39
    %p41 = scmp.eq.s32.totalorder %s15, 0
    %p42 = por %p40, %p41
    %s44 = sadd.s32 %s43, 1
    %p47 = scmp.eq.s32.totalorder %s9, 1
    %p48 = scmp.ne.s32.totalorder %s43, %s45
    %p49 = scmp.eq.s32.totalorder %s9, 0
    %p50 = por %p48, %p49
    %p51 = scmp.ne.s32.totalorder %s43, %s45
    %p52 = scmp.eq.s32.totalorder %s14, 1
    %p53 = por %p51, %p52
    %p54 = scmp.ne.s32.totalorder %s45, %s46
    %p55 = scmp.eq.s32.totalorder %s14, 0
    %p56 = por %p54, %p55
    %p57 = scmp.ne.s32.totalorder %s45, %s46
    %p58 = scmp.eq.s32.totalorder %s15, 1
    %p59 = por %p57, %p58
    %p61 = scmp.ne.s32.totalorder %s46, %s60
    %p62 = scmp.eq.s32.totalorder %s15, 0
    %p63 = por %p61, %p62
    %s65 = sadd.s32 %s64, 1
    %p68 = scmp.eq.s32.totalorder %s9, 1
    %p69 = scmp.ne.s32.totalorder %s64, %s66
    %p70 = scmp.eq.s32.totalorder %s9, 0
    %p71 = por %p69, %p70
    %p72 = scmp.ne.s32.totalorder %s64, %s66
    %p73 = scmp.eq.s32.totalorder %s14, 1
    %p74 = por %p72, %p73
    %p75 = scmp.ne.s32.totalorder %s66, %s67
    %p76 = scmp.eq.s32.totalorder %s14, 0
    %p77 = por %p75, %p76
    %p78 = scmp.ne.s32.totalorder %s66, %s67
    %p79 = scmp.eq.s32.totalorder %s15, 1
    %p80 = por %p78, %p79
    %p82 = scmp.ne.s32.totalorder %s67, %s81
    %p83 = scmp.eq.s32.totalorder %s15, 0
    %p84 = por %p82, %p83
    %s85 = ssub.s32 %s9, %s16
    %p86 = scmp.eq.s32.totalorder %s85, 0
    %s88 = sadd.s32 %s87, 1
    %s89 = scalar_select %p86, %s87, %s88
    %p92 = pneg %p86
    %p93 = scmp.eq.s32.totalorder %s9, 1
    %p94 = por %p92, %p93
    %p95 = scmp.ne.s32.totalorder %s87, %s90
    %p96 = scmp.eq.s32.totalorder %s9, 0
    %p97 = por %p95, %p96
    %p98 = scmp.ne.s32.totalorder %s87, %s90
    %p99 = scmp.eq.s32.totalorder %s14, 1
    %p100 = por %p98, %p99
    %p101 = scmp.ne.s32.totalorder %s90, %s91
    %p102 = scmp.eq.s32.totalorder %s14, 0
    %p103 = por %p101, %p102
    %p104 = scmp.ne.s32.totalorder %s90, %s91
    %p105 = scmp.eq.s32.totalorder %s15, 1
    %p106 = por %p104, %p105
    %p108 = scmp.ne.s32.totalorder %s91, %s107
    %p109 = scmp.eq.s32.totalorder %s15, 0
    %p110 = por %p108, %p109
    %p111 = scmp.le.s32.totalorder 1, %s9
    %p112 = scmp.lt.s32.totalorder %s9, 3
    %p113 = pnand %p111, %p112
    %p114 = pneg %p113
    // Predicated region
    $region9: #{bottleneck_forward.4} parent=5 // pred_check
      _
    $region10: #{bottleneck_forward.4} parent=5 // pred_check_branch
      %116 = sbr.rel (%p113) target = $region12
    $region11: #{bottleneck_forward.4} parent=5 // pred_region
      %s117 = ssub.s32 %s9, 1
      // Predicated region
      $region13: #{bottleneck_forward.4} parent=11 // pred_check
        %p118 = pneg %p56
      $region14: #{bottleneck_forward.4} parent=11 // pred_check_branch
        %120 = sbr.rel (%p118) target = $region16
      $region15: #{bottleneck_forward.4} parent=11 // pred_region
        _
      $region16: #{bottleneck_forward.4} parent=11 // pred_fallthru
        _
      // Predicated region
      $region17: #{bottleneck_forward.4} parent=11 // pred_check
        %p121 = pneg %p77
      $region18: #{bottleneck_forward.4} parent=11 // pred_check_branch
        %123 = sbr.rel (%p121) target = $region20
      $region19: #{bottleneck_forward.4} parent=11 // pred_region
        _
      $region20: #{bottleneck_forward.4} parent=11 // pred_fallthru
        _
    $region12: #{bottleneck_forward.4} parent=5 // pred_fallthru
      _
    %p124 = scmp.lt.s32.totalorder %s9, 2
    // Predicated region
    $region21: #{bottleneck_forward.4} parent=5 // pred_check
      %p125 = pneg %p124
    $region22: #{bottleneck_forward.4} parent=5 // pred_check_branch
      %127 = sbr.rel (%p125) target = $region24
    $region23: #{bottleneck_forward.4} parent=5 // pred_region
      // Predicated region
      $region25: #{bottleneck_forward.4} parent=23 // pred_check
        %p128 = pneg %p29
      $region26: #{bottleneck_forward.4} parent=23 // pred_check_branch
        %130 = sbr.rel (%p128) target = $region28
      $region27: #{bottleneck_forward.4} parent=23 // pred_region
        %s131 = smul.u32 4, %s9
        %p132 = scmp.lt.s32.totalorder %s131, 7
        %s133 = scalar_select %p132, %s131, 7
        %s134 = smul.addr %s133, 18
        %s135 = smul.addr %s134, 8
        %s136 = scalar_lea.vmem %s0, %s135
        %s137 = smul.u32 4, %s9
      $region28: #{bottleneck_forward.4} parent=23 // pred_fallthru
        _
    $region24: #{bottleneck_forward.4} parent=5 // pred_fallthru
      _
    %p138 = scmp.le.s32.totalorder 1, %s9
    %p139 = scmp.lt.s32.totalorder %s9, 3
    %p140 = pnand %p138, %p139
    %p141 = pneg %p140
    // Predicated region
    $region29: #{bottleneck_forward.4} parent=5 // pred_check
      _
    $region30: #{bottleneck_forward.4} parent=5 // pred_check_branch
      %143 = sbr.rel (%p140) target = $region32
    $region31: #{bottleneck_forward.4} parent=5 // pred_region
      %s144 = ssub.s32 %s9, 1
      %s145 = smul.u32 4, %s14
      %p146 = scmp.lt.s32.totalorder %s145, 7
      %s147 = scalar_select %p146, %s145, 7
      %s148 = smul.addr %s147, 18
      %s149 = smul.addr %s148, 8
      %s150 = scalar_lea.vmem %s0, %s149
      %p151 = pneg %p35
      %p152 = pneg %p32
      %p153 = pneg %p56
      %p154 = pneg %p53
      %p155 = pneg %p77
      %p156 = pneg %p74
      %p157 = pneg %p103
      %p158 = pneg %p100
      %p159 = scmp.lt.s32.totalorder %s14, 1
      %s160 = scalar_select %p159, %s14, 1
      %s161 = smul.addr %s160, 8
      %s162 = smul.addr %s161, 4
      %s163 = scalar_lea.vmem %s3, %s162
      %s164 = smul.u32 4, %s14
      %p165 = scmp.lt.s32.totalorder %s164, 7
      %s166 = scalar_select %p165, %s164, 7
      %s167 = smul.addr %s166, 18
      %s168 = smul.addr %s167, 8
      %s169 = scalar_lea.vmem %s0, %s168
      %s170 = smul.u32 4, %s14
      %p171 = scmp.lt.s32.totalorder %s14, 1
      %s172 = scalar_select %p171, %s14, 1
      %s173 = smul.addr %s172, 8
      %s174 = smul.addr %s173, 4
      %s175 = scalar_lea.vmem %s3, %s174
      %v177 = vld [vmem:[%s169] sm:$0xff]
      %v178 = vld [vmem:[%s169 + $0x10] sm:$0xff]
      %v179 = vld [vmem:[%s169 + $0x20] sm:$0xff]
      %v180 = vld [vmem:[%s169 + $0x30] sm:$0xff]
      %v181 = vld [vmem:[%s169 + $0x40] sm:$0xff]
      %v182 = vld [vmem:[%s169 + $0x50] sm:$0xff]
      %v183 = vld [vmem:[%s169 + $0x60] sm:$0xff]
      %v184 = vld [vmem:[%s169 + $0x70] sm:$0xff]
      %v185 = vpack.c.bf16 %v178, %v177
      %v186 = vpack.c.bf16 %v180, %v179
      %v187 = vpack.c.bf16 %v182, %v181
      %v188 = vpack.c.bf16 %v184, %v183
      %v189 = vld [vmem:[%s1] sm:$0xf]
      %v190 = vld [vmem:[%s1 + $0x4] sm:$0xf]
      %v191 = vld [vmem:[%s1 + $0x8] sm:$0xf]
      %v192 = vld [vmem:[%s1 + $0xc] sm:$0xf]
      %v193 = vld [vmem:[%s1 + $0x10] sm:$0xf]
      %v194 = vld [vmem:[%s1 + $0x14] sm:$0xf]
      %v195 = vld [vmem:[%s1 + $0x18] sm:$0xf]
      %v196 = vld [vmem:[%s1 + $0x1c] sm:$0xf]
      %v197 = vld [vmem:[%s1 + $0x20] sm:$0xf]
      %v198 = vld [vmem:[%s1 + $0x24] sm:$0xf]
      %v199 = vld [vmem:[%s1 + $0x28] sm:$0xf]
      %v200 = vld [vmem:[%s1 + $0x2c] sm:$0xf]
      %v201 = vld [vmem:[%s1 + $0x30] sm:$0xf]
      %v202 = vld [vmem:[%s1 + $0x34] sm:$0xf]
      %v203 = vld [vmem:[%s1 + $0x38] sm:$0xf]
      %v204 = vld [vmem:[%s1 + $0x3c] sm:$0xf]
      %s205 = scalar_lea.vmem %s169, 144
      %v206 = vld [vmem:[%s205] sm:$0xff]
      %v207 = vld [vmem:[%s205 + $0x10] sm:$0xff]
      %v208 = vld [vmem:[%s205 + $0x20] sm:$0xff]
      %v209 = vld [vmem:[%s205 + $0x30] sm:$0xff]
      %v210 = vld [vmem:[%s205 + $0x40] sm:$0xff]
      %v211 = vld [vmem:[%s205 + $0x50] sm:$0xff]
      %v212 = vld [vmem:[%s205 + $0x60] sm:$0xff]
      %v213 = vld [vmem:[%s205 + $0x70] sm:$0xff]
      %v214 = vpack.c.bf16 %v207, %v206
      %v215 = vpack.c.bf16 %v209, %v208
      %v216 = vpack.c.bf16 %v211, %v210
      %v217 = vpack.c.bf16 %v213, %v212
      %s218 = scalar_lea.vmem %s1, 64
      %v219 = vld [vmem:[%s218] sm:$0xf]
      %v220 = vld [vmem:[%s218 + $0x4] sm:$0xf]
      %v221 = vld [vmem:[%s218 + $0x8] sm:$0xf]
      %v222 = vld [vmem:[%s218 + $0xc] sm:$0xf]
      %v223 = vld [vmem:[%s218 + $0x10] sm:$0xf]
      %v224 = vld [vmem:[%s218 + $0x14] sm:$0xf]
      %v225 = vld [vmem:[%s218 + $0x18] sm:$0xf]
      %v226 = vld [vmem:[%s218 + $0x1c] sm:$0xf]
      %v227 = vld [vmem:[%s218 + $0x20] sm:$0xf]
      %v228 = vld [vmem:[%s218 + $0x24] sm:$0xf]
      %v229 = vld [vmem:[%s218 + $0x28] sm:$0xf]
      %v230 = vld [vmem:[%s218 + $0x2c] sm:$0xf]
      %v231 = vld [vmem:[%s218 + $0x30] sm:$0xf]
      %v232 = vld [vmem:[%s218 + $0x34] sm:$0xf]
      %v233 = vld [vmem:[%s218 + $0x38] sm:$0xf]
      %v234 = vld [vmem:[%s218 + $0x3c] sm:$0xf]
      %v251 = vunpack.c.l.b16 %v219
      %v252 = vunpack.c.l.b16 %v220
      %v253 = vunpack.c.l.b16 %v221
      %v254 = vunpack.c.l.b16 %v222
      %v255 = vunpack.c.l.b16 %v223
      %v256 = vunpack.c.l.b16 %v224
      %v257 = vunpack.c.l.b16 %v225
      %v258 = vunpack.c.l.b16 %v226
      %v259 = vunpack.c.l.b16 %v227
      %v260 = vunpack.c.l.b16 %v228
      %v261 = vunpack.c.l.b16 %v229
      %v262 = vunpack.c.l.b16 %v230
      %v263 = vunpack.c.l.b16 %v231
      %v264 = vunpack.c.l.b16 %v232
      %v265 = vunpack.c.l.b16 %v233
      %v266 = vunpack.c.l.b16 %v234
      %v267 = vpack.c.b16 %v252, %v251
      %v268 = vpack.c.b16 %v254, %v253
      %v269 = vpack.c.b16 %v256, %v255
      %v270 = vpack.c.b16 %v258, %v257
      %v271 = vpack.c.b16 %v260, %v259
      %v272 = vpack.c.b16 %v262, %v261
      %v273 = vpack.c.b16 %v264, %v263
      %v274 = vpack.c.b16 %v266, %v265
      %283 = vmatprep.subr.bf16.mxu0 0
      %284 = vmatpush1.bf16.msra.mxu0 %v267
      %285 = vmatprep.subr.bf16.mxu0 0
      %286 = vmatpush1.bf16.msra.mxu0 %v268
      %287 = vmatprep.subr.bf16.mxu0 0
      %288 = vmatpush1.bf16.msra.mxu0 %v269
      %289 = vmatprep.subr.bf16.mxu0 0
      %290 = vmatpush1.bf16.msra.mxu0 %v270
      %291 = vmatprep.subr.bf16.mxu0 0
      %292 = vmatpush1.bf16.msra.mxu0 %v271
      %293 = vmatprep.subr.bf16.mxu0 0
      %294 = vmatpush1.bf16.msra.mxu0 %v272
      %295 = vmatprep.subr.bf16.mxu0 0
      %296 = vmatpush1.bf16.msra.mxu0 %v273
      %297 = vmatprep.subr.bf16.mxu0 0
      %298 = vmatpush1.bf16.msra.mxu0 %v274
      %299 = vmatprep.subr.bf16.mxu0 0
      %300 = vmatpush1.bf16.msra.mxu0 0
      %301 = vmatprep.subr.bf16.mxu0 0
      %302 = vmatpush1.bf16.msra.mxu0 0
      %303 = vmatprep.subr.bf16.mxu0 0
      %304 = vmatpush1.bf16.msra.mxu0 0
      %305 = vmatprep.subr.bf16.mxu0 0
      %306 = vmatpush1.bf16.msra.mxu0 0
      %307 = vmatprep.subr.bf16.mxu0 0
      %308 = vmatpush1.bf16.msra.mxu0 0
      %309 = vmatprep.subr.bf16.mxu0 0
      %310 = vmatpush1.bf16.msra.mxu0 0
      %311 = vmatprep.subr.bf16.mxu0 0
      %312 = vmatpush1.bf16.msra.mxu0 0
      %313 = vmatprep.subr.bf16.mxu0 0
      %314 = vmatpush1.bf16.msra.mxu0 0
      %315 = vmatprep.mubr.bf16.mxu0 0
      %316 = vmatmul.mubr.bf16.gmra.mrb[0].mxu0 %v214
      %v317 = vpop.f32.mrb[0].mxu0
      %v318 = vadd.f32 0.0, %v317
      %v319 = vpop.f32.mrb[0].mxu0
      %v320 = vpop.f32.mrb[0].mxu0
      %v321 = vadd.f32 0.0, %v320
      %v322 = vpop.f32.mrb[0].mxu0
      %323 = vmatprep.mubr.bf16.mxu0 0
      %324 = vmatmul.mubr.bf16.gmra.mrb[0].mxu0 %v215
      %v325 = vpop.f32.mrb[0].mxu0
      %v326 = vadd.f32 0.0, %v325
      %v327 = vpop.f32.mrb[0].mxu0
      %v328 = vpop.f32.mrb[0].mxu0
      %v329 = vadd.f32 0.0, %v328
      %v330 = vpop.f32.mrb[0].mxu0
      %331 = vmatprep.mubr.bf16.mxu0 0
      %332 = vmatmul.mubr.bf16.gmra.mrb[0].mxu0 %v216
      %v333 = vpop.f32.mrb[0].mxu0
      %v334 = vadd.f32 0.0, %v333
      %v335 = vpop.f32.mrb[0].mxu0
      %v336 = vpop.f32.mrb[0].mxu0
      %v337 = vadd.f32 0.0, %v336
      %v338 = vpop.f32.mrb[0].mxu0
      %339 = vmatprep.mubr.bf16.mxu0 0
      %340 = vmatmul.mubr.bf16.gmra.mrb[0].mxu0 %v217
      %v341 = vpop.f32.mrb[0].mxu0
      %v342 = vadd.f32 0.0, %v341
      %v343 = vpop.f32.mrb[0].mxu0
      %v344 = vpop.f32.mrb[0].mxu0
      %v345 = vadd.f32 0.0, %v344
      %v346 = vpop.f32.mrb[0].mxu0
      %347 = vdwg.mxu0
      %v364 = vunpack.c.l.b16 %v189
      %v365 = vunpack.c.l.b16 %v190
      %v366 = vunpack.c.l.b16 %v191
      %v367 = vunpack.c.l.b16 %v192
      %v368 = vunpack.c.l.b16 %v193
      %v369 = vunpack.c.l.b16 %v194
      %v370 = vunpack.c.l.b16 %v195
      %v371 = vunpack.c.l.b16 %v196
      %v372 = vunpack.c.l.b16 %v197
      %v373 = vunpack.c.l.b16 %v198
      %v374 = vunpack.c.l.b16 %v199
      %v375 = vunpack.c.l.b16 %v200
      %v376 = vunpack.c.l.b16 %v201
      %v377 = vunpack.c.l.b16 %v202
      %v378 = vunpack.c.l.b16 %v203
      %v379 = vunpack.c.l.b16 %v204
      %v380 = vpack.c.b16 %v365, %v364
      %v381 = vpack.c.b16 %v367, %v366
      %v382 = vpack.c.b16 %v369, %v368
      %v383 = vpack.c.b16 %v371, %v370
      %v384 = vpack.c.b16 %v373, %v372
      %v385 = vpack.c.b16 %v375, %v374
      %v386 = vpack.c.b16 %v377, %v376
      %v387 = vpack.c.b16 %v379, %v378
      %396 = vmatprep.subr.bf16.mxu0 0
      %397 = vmatpush1.bf16.msra.mxu0 %v380
      %398 = vmatprep.subr.bf16.mxu0 0
      %399 = vmatpush1.bf16.msra.mxu0 %v381
      %400 = vmatprep.subr.bf16.mxu0 0
      %401 = vmatpush1.bf16.msra.mxu0 %v382
      %402 = vmatprep.subr.bf16.mxu0 0
      %403 = vmatpush1.bf16.msra.mxu0 %v383
      %404 = vmatprep.subr.bf16.mxu0 0
      %405 = vmatpush1.bf16.msra.mxu0 %v384
      %406 = vmatprep.subr.bf16.mxu0 0
      %407 = vmatpush1.bf16.msra.mxu0 %v385
      %408 = vmatprep.subr.bf16.mxu0 0
      %409 = vmatpush1.bf16.msra.mxu0 %v386
      %410 = vmatprep.subr.bf16.mxu0 0
      %411 = vmatpush1.bf16.msra.mxu0 %v387
      %412 = vmatprep.subr.bf16.mxu0 0
      %413 = vmatpush1.bf16.msra.mxu0 0
      %414 = vmatprep.subr.bf16.mxu0 0
      %415 = vmatpush1.bf16.msra.mxu0 0
      %416 = vmatprep.subr.bf16.mxu0 0
      %417 = vmatpush1.bf16.msra.mxu0 0
      %418 = vmatprep.subr.bf16.mxu0 0
      %419 = vmatpush1.bf16.msra.mxu0 0
      %420 = vmatprep.subr.bf16.mxu0 0
      %421 = vmatpush1.bf16.msra.mxu0 0
      %422 = vmatprep.subr.bf16.mxu0 0
      %423 = vmatpush1.bf16.msra.mxu0 0
      %424 = vmatprep.subr.bf16.mxu0 0
      %425 = vmatpush1.bf16.msra.mxu0 0
      %426 = vmatprep.subr.bf16.mxu0 0
      %427 = vmatpush1.bf16.msra.mxu0 0
      %428 = vmatprep.mubr.bf16.mxu0 0
      %429 = vmatmul.mubr.bf16.gmra.mrb[0].mxu0 %v185
      %v430 = vpop.f32.mrb[0].mxu0
      %v431 = vadd.f32 %v318, %v430
      %v432 = vpop.f32.mrb[0].mxu0
      %v433 = vpop.f32.mrb[0].mxu0
      %v434 = vadd.f32 %v321, %v433
      %v435 = vpop.f32.mrb[0].mxu0
      %436 = vmatprep.mubr.bf16.mxu0 0
      %437 = vmatmul.mubr.bf16.gmra.mrb[0].mxu0 %v186
      %v438 = vpop.f32.mrb[0].mxu0
      %v439 = vadd.f32 %v326, %v438
      %v440 = vpop.f32.mrb[0].mxu0
      %v441 = vpop.f32.mrb[0].mxu0
      %v442 = vadd.f32 %v329, %v441
      %v443 = vpop.f32.mrb[0].mxu0
      %444 = vmatprep.mubr.bf16.mxu0 0
      %445 = vmatmul.mubr.bf16.gmra.mrb[0].mxu0 %v187
      %v446 = vpop.f32.mrb[0].mxu0
      %v447 = vadd.f32 %v334, %v446
      %v448 = vpop.f32.mrb[0].mxu0
      %v449 = vpop.f32.mrb[0].mxu0
      %v450 = vadd.f32 %v337, %v449
      %v451 = vpop.f32.mrb[0].mxu0
      %452 = vmatprep.mubr.bf16.mxu0 0
      %453 = vmatmul.mubr.bf16.gmra.mrb[0].mxu0 %v188
      %v454 = vpop.f32.mrb[0].mxu0
      %v455 = vadd.f32 %v342, %v454
      %v456 = vpop.f32.mrb[0].mxu0
      %v457 = vpop.f32.mrb[0].mxu0
      %v458 = vadd.f32 %v345, %v457
      %v459 = vpop.f32.mrb[0].mxu0
      %460 = vdwg.mxu0
      %v461 = vld [vmem:[%s169 + $0x1] sm:$0xff]
      %v462 = vld [vmem:[%s169 + $0x11] sm:$0xff]
      %v463 = vld [vmem:[%s169 + $0x21] sm:$0xff]
      %v464 = vld [vmem:[%s169 + $0x31] sm:$0xff]
      %v465 = vld [vmem:[%s169 + $0x41] sm:$0xff]
      %v466 = vld [vmem:[%s169 + $0x51] sm:$0xff]
      %v467 = vld [vmem:[%s169 + $0x61] sm:$0xff]
      %v468 = vld [vmem:[%s169 + $0x71] sm:$0xff]
      %v469 = vpack.c.bf16 %v462, %v461
      %v470 = vpack.c.bf16 %v464, %v463
      %v471 = vpack.c.bf16 %v466, %v465
      %v472 = vpack.c.bf16 %v468, %v467
      %s473 = scalar_lea.vmem %s1, 128
      %v474 = vld [vmem:[%s473] sm:$0xf]
      %v475 = vld [vmem:[%s473 + $0x4] sm:$0xf]
      %v476 = vld [vmem:[%s473 + $0x8] sm:$0xf]
      %v477 = vld [vmem:[%s473 + $0xc] sm:$0xf]
      %v478 = vld [vmem:[%s473 + $0x10] sm:$0xf]
      %v479 = vld [vmem:[%s473 + $0x14] sm:$0xf]
      %v480 = vld [vmem:[%s473 + $0x18] sm:$0xf]
      %v481 = vld [vmem:[%s473 + $0x1c] sm:$0xf]
      %v482 = vld [vmem:[%s473 + $0x20] sm:$0xf]
      %v483 = vld [vmem:[%s473 + $0x24] sm:$0xf]
      %v484 = vld [vmem:[%s473 + $0x28] sm:$0xf]
      %v485 = vld [vmem:[%s473 + $0x2c] sm:$0xf]
      %v486 = vld [vmem:[%s473 + $0x30] sm:$0xf]
      %v487 = vld [vmem:[%s473 + $0x34] sm:$0xf]
      %v488 = vld [vmem:[%s473 + $0x38] sm:$0xf]
      %v489 = vld [vmem:[%s473 + $0x3c] sm:$0xf]
      %v506 = vunpack.c.l.b16 %v474
      %v507 = vunpack.c.l.b16 %v475
      %v508 = vunpack.c.l.b16 %v476
      %v509 = vunpack.c.l.b16 %v477
      %v510 = vunpack.c.l.b16 %v478
      %v511 = vunpack.c.l.b16 %v479
      %v512 = vunpack.c.l.b16 %v480
      %v513 = vunpack.c.l.b16 %v481
      %v514 = vunpack.c.l.b16 %v482
      %v515 = vunpack.c.l.b16 %v483
      %v516 = vunpack.c.l.b16 %v484
      %v517 = vunpack.c.l.b16 %v485
      %v518 = vunpack.c.l.b16 %v486
      %v519 = vunpack.c.l.b16 %v487
      %v520 = vunpack.c.l.b16 %v488
      %v521 = vunpack.c.l.b16 %v489
      %v522 = vpack.c.b16 %v507, %v506
      %v523 = vpack.c.b16 %v509, %v508
      %v524 = vpack.c.b16 %v511, %v510
      %v525 = vpack.c.b16 %v513, %v512
      %v526 = vpack.c.b16 %v515, %v514
      %v527 = vpack.c.b16 %v517, %v516
      %v528 = vpack.c.b16 %v519, %v518
      %v529 = vpack.c.b16 %v521, %v520
      %538 = vmatprep.subr.bf16.mxu0 0
      %539 = vmatpush1.bf16.msra.mxu0 %v522
      %540 = vmatprep.subr.bf16.mxu0 0
      %541 = vmatpush1.bf16.msra.mxu0 %v523
      %542 = vmatprep.subr.bf16.mxu0 0
      %543 = vmatpush1.bf16.msra.mxu0 %v524
      %544 = vmatprep.subr.bf16.mxu0 0
      %545 = vmatpush1.bf16.msra.mxu0 %v525
      %546 = vmatprep.subr.bf16.mxu0 0
      %547 = vmatpush1.bf16.msra.mxu0 %v526
      %548 = vmatprep.subr.bf16.mxu0 0
      %549 = vmatpush1.bf16.msra.mxu0 %v527
      %550 = vmatprep.subr.bf16.mxu0 0
      %551 = vmatpush1.bf16.msra.mxu0 %v528
      %552 = vmatprep.subr.bf16.mxu0 0
      %553 = vmatpush1.bf16.msra.mxu0 %v529
      %554 = vmatprep.subr.bf16.mxu0 0
      %555 = vmatpush1.bf16.msra.mxu0 0
      %556 = vmatprep.subr.bf16.mxu0 0
      %557 = vmatpush1.bf16.msra.mxu0 0
      %558 = vmatprep.subr.bf16.mxu0 0
      %559 = vmatpush1.bf16.msra.mxu0 0
      %560 = vmatprep.subr.bf16.mxu0 0
      %561 = vmatpush1.bf16.msra.mxu0 0
      %562 = vmatprep.subr.bf16.mxu0 0
      %563 = vmatpush1.bf16.msra.mxu0 0
      %564 = vmatprep.subr.bf16.mxu0 0
      %565 = vmatpush1.bf16.msra.mxu0 0
      %566 = vmatprep.subr.bf16.mxu0 0
      %567 = vmatpush1.bf16.msra.mxu0 0
      %568 = vmatprep.subr.bf16.mxu0 0
      %569 = vmatpush1.bf16.msra.mxu0 0
      %570 = vmatprep.mubr.bf16.mxu0 0
      %571 = vmatmul.mubr.bf16.gmra.mrb[0].mxu0 %v469
      %v572 = vpop.f32.mrb[0].mxu0
      %v573 = vadd.f32 0.0, %v572
      %v574 = vpop.f32.mrb[0].mxu0
      %v575 = vpop.f32.mrb[0].mxu0
      %v576 = vadd.f32 0.0, %v575
      %v577 = vpop.f32.mrb[0].mxu0
      %578 = vmatprep.mubr.bf16.mxu0 0
      %579 = vmatmul.mubr.bf16.gmra.mrb[0].mxu0 %v470
      %v580 = vpop.f32.mrb[0].mxu0
      %v581 = vadd.f32 0.0, %v580
      %v582 = vpop.f32.mrb[0].mxu0
      %v583 = vpop.f32.mrb[0].mxu0
      %v584 = vadd.f32 0.0, %v583
      %v585 = vpop.f32.mrb[0].mxu0
      %586 = vmatprep.mubr.bf16.mxu0 0
      %587 = vmatmul.mubr.bf16.gmra.mrb[0].mxu0 %v471
      %v588 = vpop.f32.mrb[0].mxu0
      %v589 = vadd.f32 0.0, %v588
      %v590 = vpop.f32.mrb[0].mxu0
      %v591 = vpop.f32.mrb[0].mxu0
      %v592 = vadd.f32 0.0, %v591
      %v593 = vpop.f32.mrb[0].mxu0
      %594 = vmatprep.mubr.bf16.mxu0 0
      %595 = vmatmul.mubr.bf16.gmra.mrb[0].mxu0 %v472
      %v596 = vpop.f32.mrb[0].mxu0
      %v597 = vadd.f32 0.0, %v596
      %v598 = vpop.f32.mrb[0].mxu0
      %v599 = vpop.f32.mrb[0].mxu0
      %v600 = vadd.f32 0.0, %v599
      %v601 = vpop.f32.mrb[0].mxu0
      %602 = vdwg.mxu0
      %v603 = vadd.f32 %v431, %v573
      %v604 = vadd.f32 %v434, %v576
      %v605 = vadd.f32 %v439, %v581
      %v606 = vadd.f32 %v442, %v584
      %v607 = vadd.f32 %v447, %v589
      %v608 = vadd.f32 %v450, %v592
      %v609 = vadd.f32 %v455, %v597
      %v610 = vadd.f32 %v458, %v600
      %s611 = scalar_lea.vmem %s169, 288
      %v612 = vld [vmem:[%s611] sm:$0xff]
      %v613 = vld [vmem:[%s611 + $0x10] sm:$0xff]
      %v614 = vld [vmem:[%s611 + $0x20] sm:$0xff]
      %v615 = vld [vmem:[%s611 + $0x30] sm:$0xff]
      %v616 = vld [vmem:[%s611 + $0x40] sm:$0xff]
      %v617 = vld [vmem:[%s611 + $0x50] sm:$0xff]
      %v618 = vld [vmem:[%s611 + $0x60] sm:$0xff]
      %v619 = vld [vmem:[%s611 + $0x70] sm:$0xff]
      %v620 = vpack.c.bf16 %v613, %v612
      %v621 = vpack.c.bf16 %v615, %v614
      %v622 = vpack.c.bf16 %v617, %v616
      %v623 = vpack.c.bf16 %v619, %v618
      %s624 = scalar_lea.vmem %s1, 192
      %v625 = vld [vmem:[%s624] sm:$0xf]
      %v626 = vld [vmem:[%s624 + $0x4] sm:$0xf]
      %v627 = vld [vmem:[%s624 + $0x8] sm:$0xf]
      %v628 = vld [vmem:[%s624 + $0xc] sm:$0xf]
      %v629 = vld [vmem:[%s624 + $0x10] sm:$0xf]
      %v630 = vld [vmem:[%s624 + $0x14] sm:$0xf]
      %v631 = vld [vmem:[%s624 + $0x18] sm:$0xf]
      %v632 = vld [vmem:[%s624 + $0x1c] sm:$0xf]
      %v633 = vld [vmem:[%s624 + $0x20] sm:$0xf]
      %v634 = vld [vmem:[%s624 + $0x24] sm:$0xf]
      %v635 = vld [vmem:[%s624 + $0x28] sm:$0xf]
      %v636 = vld [vmem:[%s624 + $0x2c] sm:$0xf]
      %v637 = vld [vmem:[%s624 + $0x30] sm:$0xf]
      %v638 = vld [vmem:[%s624 + $0x34] sm:$0xf]
      %v639 = vld [vmem:[%s624 + $0x38] sm:$0xf]
      %v640 = vld [vmem:[%s624 + $0x3c] sm:$0xf]
      %v657 = vunpack.c.l.b16 %v625
      %v658 = vunpack.c.l.b16 %v626
      %v659 = vunpack.c.l.b16 %v627
      %v660 = vunpack.c.l.b16 %v628
      %v661 = vunpack.c.l.b16 %v629
      %v662 = vunpack.c.l.b16 %v630
      %v663 = vunpack.c.l.b16 %v631
      %v664 = vunpack.c.l.b16 %v632
      %v665 = vunpack.c.l.b16 %v633
      %v666 = vunpack.c.l.b16 %v634
      %v667 = vunpack.c.l.b16 %v635
      %v668 = vunpack.c.l.b16 %v636
      %v669 = vunpack.c.l.b16 %v637
      %v670 = vunpack.c.l.b16 %v638
      %v671 = vunpack.c.l.b16 %v639
      %v672 = vunpack.c.l.b16 %v640
      %v673 = vpack.c.b16 %v658, %v657
      %v674 = vpack.c.b16 %v660, %v659
      %v675 = vpack.c.b16 %v662, %v661
      %v676 = vpack.c.b16 %v664, %v663
      %v677 = vpack.c.b16 %v666, %v665
      %v678 = vpack.c.b16 %v668, %v667
      %v679 = vpack.c.b16 %v670, %v669
      %v680 = vpack.c.b16 %v672, %v671
      %689 = vmatprep.subr.bf16.mxu0 0
      %690 = vmatpush1.bf16.msra.mxu0 %v673
      %691 = vmatprep.subr.bf16.mxu0 0
      %692 = vmatpush1.bf16.msra.mxu0 %v674
      %693 = vmatprep.subr.bf16.mxu0 0
      %694 = vmatpush1.bf16.msra.mxu0 %v675
      %695 = vmatprep.subr.bf16.mxu0 0
      %696 = vmatpush1.bf16.msra.mxu0 %v676
      %697 = vmatprep.subr.bf16.mxu0 0
      %698 = vmatpush1.bf16.msra.mxu0 %v677
      %699 = vmatprep.subr.bf16.mxu0 0
      %700 = vmatpush1.bf16.msra.mxu0 %v678
      %701 = vmatprep.subr.bf16.mxu0 0
      %702 = vmatpush1.bf16.msra.mxu0 %v679
      %703 = vmatprep.subr.bf16.mxu0 0
      %704 = vmatpush1.bf16.msra.mxu0 %v680
      %705 = vmatprep.subr.bf16.mxu0 0
      %706 = vmatpush1.bf16.msra.mxu0 0
      %707 = vmatprep.subr.bf16.mxu0 0
      %708 = vmatpush1.bf16.msra.mxu0 0
      %709 = vmatprep.subr.bf16.mxu0 0
      %710 = vmatpush1.bf16.msra.mxu0 0
      %711 = vmatprep.subr.bf16.mxu0 0
      %712 = vmatpush1.bf16.msra.mxu0 0
      %713 = vmatprep.subr.bf16.mxu0 0
      %714 = vmatpush1.bf16.msra.mxu0 0
      %715 = vmatprep.subr.bf16.mxu0 0
      %716 = vmatpush1.bf16.msra.mxu0 0
      %717 = vmatprep.subr.bf16.mxu0 0
      %718 = vmatpush1.bf16.msra.mxu0 0
      %719 = vmatprep.subr.bf16.mxu0 0
      %720 = vmatpush1.bf16.msra.mxu0 0
      %721 = vmatprep.mubr.bf16.mxu0 0
      %722 = vmatmul.mubr.bf16.gmra.mrb[0].mxu0 %v620
      %v723 = vpop.f32.mrb[0].mxu0
      %v724 = vadd.f32 0.0, %v723
      %v725 = vpop.f32.mrb[0].mxu0
      %v726 = vpop.f32.mrb[0].mxu0
      %v727 = vadd.f32 0.0, %v726
      %v728 = vpop.f32.mrb[0].mxu0
      %729 = vmatprep.mubr.bf16.mxu0 0
      %730 = vmatmul.mubr.bf16.gmra.mrb[0].mxu0 %v621
      %v731 = vpop.f32.mrb[0].mxu0
      %v732 = vadd.f32 0.0, %v731
      %v733 = vpop.f32.mrb[0].mxu0
      %v734 = vpop.f32.mrb[0].mxu0
      %v735 = vadd.f32 0.0, %v734
      %v736 = vpop.f32.mrb[0].mxu0
      %737 = vmatprep.mubr.bf16.mxu0 0
      %738 = vmatmul.mubr.bf16.gmra.mrb[0].mxu0 %v622
      %v739 = vpop.f32.mrb[0].mxu0
      %v740 = vadd.f32 0.0, %v739
      %v741 = vpop.f32.mrb[0].mxu0
      %v742 = vpop.f32.mrb[0].mxu0
      %v743 = vadd.f32 0.0, %v742
      %v744 = vpop.f32.mrb[0].mxu0
      %745 = vmatprep.mubr.bf16.mxu0 0
      %746 = vmatmul.mubr.bf16.gmra.mrb[0].mxu0 %v623
      %v747 = vpop.f32.mrb[0].mxu0
      %v748 = vadd.f32 0.0, %v747
      %v749 = vpop.f32.mrb[0].mxu0
      %v750 = vpop.f32.mrb[0].mxu0
      %v751 = vadd.f32 0.0, %v750
      %v752 = vpop.f32.mrb[0].mxu0
      %753 = vdwg.mxu0
      %v754 = vadd.f32 %v603, %v724
      %v755 = vadd.f32 %v604, %v727
      %v756 = vadd.f32 %v605, %v732
      %v757 = vadd.f32 %v606, %v735
      %v758 = vadd.f32 %v607, %v740
      %v759 = vadd.f32 %v608, %v743
      %v760 = vadd.f32 %v609, %v748
      %v761 = vadd.f32 %v610, %v751
      %s762 = scalar_lea.vmem %s169, 432
      %v763 = vld [vmem:[%s762] sm:$0xff]
      %v764 = vld [vmem:[%s762 + $0x10] sm:$0xff]
      %v765 = vld [vmem:[%s762 + $0x20] sm:$0xff]
      %v766 = vld [vmem:[%s762 + $0x30] sm:$0xff]
      %v767 = vld [vmem:[%s762 + $0x40] sm:$0xff]
      %v768 = vld [vmem:[%s762 + $0x50] sm:$0xff]
      %v769 = vld [vmem:[%s762 + $0x60] sm:$0xff]
      %v770 = vld [vmem:[%s762 + $0x70] sm:$0xff]
      %v771 = vpack.c.bf16 %v764, %v763
      %v772 = vpack.c.bf16 %v766, %v765
      %v773 = vpack.c.bf16 %v768, %v767
      %v774 = vpack.c.bf16 %v770, %v769
      %s775 = scalar_lea.vmem %s1, 256
      %v776 = vld [vmem:[%s775] sm:$0xf]
      %v777 = vld [vmem:[%s775 + $0x4] sm:$0xf]
      %v778 = vld [vmem:[%s775 + $0x8] sm:$0xf]
      %v779 = vld [vmem:[%s775 + $0xc] sm:$0xf]
      %v780 = vld [vmem:[%s775 + $0x10] sm:$0xf]
      %v781 = vld [vmem:[%s775 + $0x14] sm:$0xf]
      %v782 = vld [vmem:[%s775 + $0x18] sm:$0xf]
      %v783 = vld [vmem:[%s775 + $0x1c] sm:$0xf]
      %v784 = vld [vmem:[%s775 + $0x20] sm:$0xf]
      %v785 = vld [vmem:[%s775 + $0x24] sm:$0xf]
      %v786 = vld [vmem:[%s775 + $0x28] sm:$0xf]
      %v787 = vld [vmem:[%s775 + $0x2c] sm:$0xf]
      %v788 = vld [vmem:[%s775 + $0x30] sm:$0xf]
      %v789 = vld [vmem:[%s775 + $0x34] sm:$0xf]
      %v790 = vld [vmem:[%s775 + $0x38] sm:$0xf]
      %v791 = vld [vmem:[%s775 + $0x3c] sm:$0xf]
      %v808 = vunpack.c.l.b16 %v776
      %v809 = vunpack.c.l.b16 %v777
      %v810 = vunpack.c.l.b16 %v778
      %v811 = vunpack.c.l.b16 %v779
      %v812 = vunpack.c.l.b16 %v780
      %v813 = vunpack.c.l.b16 %v781
      %v814 = vunpack.c.l.b16 %v782
      %v815 = vunpack.c.l.b16 %v783
      %v816 = vunpack.c.l.b16 %v784
      %v817 = vunpack.c.l.b16 %v785
      %v818 = vunpack.c.l.b16 %v786
      %v819 = vunpack.c.l.b16 %v787
      %v820 = vunpack.c.l.b16 %v788
      %v821 = vunpack.c.l.b16 %v789
      %v822 = vunpack.c.l.b16 %v790
      %v823 = vunpack.c.l.b16 %v791
      %v824 = vpack.c.b16 %v809, %v808
      %v825 = vpack.c.b16 %v811, %v810
      %v826 = vpack.c.b16 %v813, %v812
      %v827 = vpack.c.b16 %v815, %v814
      %v828 = vpack.c.b16 %v817, %v816
      %v829 = vpack.c.b16 %v819, %v818
      %v830 = vpack.c.b16 %v821, %v820
      %v831 = vpack.c.b16 %v823, %v822
      %840 = vmatprep.subr.bf16.mxu0 0
      %841 = vmatpush1.bf16.msra.mxu0 %v824
      %842 = vmatprep.subr.bf16.mxu0 0
      %843 = vmatpush1.bf16.msra.mxu0 %v825
      %844 = vmatprep.subr.bf16.mxu0 0
      %845 = vmatpush1.bf16.msra.mxu0 %v826
      %846 = vmatprep.subr.bf16.mxu0 0
      %847 = vmatpush1.bf16.msra.mxu0 %v827
      %848 = vmatprep.subr.bf16.mxu0 0
      %849 = vmatpush1.bf16.msra.mxu0 %v828
      %850 = vmatprep.subr.bf16.mxu0 0
      %851 = vmatpush1.bf16.msra.mxu0 %v829
      %852 = vmatprep.subr.bf16.mxu0 0
      %853 = vmatpush1.bf16.msra.mxu0 %v830
      %854 = vmatprep.subr.bf16.mxu0 0
      %855 = vmatpush1.bf16.msra.mxu0 %v831
      %856 = vmatprep.subr.bf16.mxu0 0
      %857 = vmatpush1.bf16.msra.mxu0 0
      %858 = vmatprep.subr.bf16.mxu0 0
      %859 = vmatpush1.bf16.msra.mxu0 0
      %860 = vmatprep.subr.bf16.mxu0 0
      %861 = vmatpush1.bf16.msra.mxu0 0
      %862 = vmatprep.subr.bf16.mxu0 0
      %863 = vmatpush1.bf16.msra.mxu0 0
      %864 = vmatprep.subr.bf16.mxu0 0
      %865 = vmatpush1.bf16.msra.mxu0 0
      %866 = vmatprep.subr.bf16.mxu0 0
      %867 = vmatpush1.bf16.msra.mxu0 0
      %868 = vmatprep.subr.bf16.mxu0 0
      %869 = vmatpush1.bf16.msra.mxu0 0
      %870 = vmatprep.subr.bf16.mxu0 0
      %871 = vmatpush1.bf16.msra.mxu0 0
      %872 = vmatprep.mubr.bf16.mxu0 0
      %873 = vmatmul.mubr.bf16.gmra.mrb[0].mxu0 %v771
      %v874 = vpop.f32.mrb[0].mxu0
      %v875 = vadd.f32 0.0, %v874
      %v876 = vpop.f32.mrb[0].mxu0
      %v877 = vpop.f32.mrb[0].mxu0
      %v878 = vadd.f32 0.0, %v877
      %v879 = vpop.f32.mrb[0].mxu0
      %880 = vmatprep.mubr.bf16.mxu0 0
      %881 = vmatmul.mubr.bf16.gmra.mrb[0].mxu0 %v772
      %v882 = vpop.f32.mrb[0].mxu0
      %v883 = vadd.f32 0.0, %v882
      %v884 = vpop.f32.mrb[0].mxu0
      %v885 = vpop.f32.mrb[0].mxu0
      %v886 = vadd.f32 0.0, %v885
      %v887 = vpop.f32.mrb[0].mxu0
      %888 = vmatprep.mubr.bf16.mxu0 0
      %889 = vmatmul.mubr.bf16.gmra.mrb[0].mxu0 %v773
      %v890 = vpop.f32.mrb[0].mxu0
      %v891 = vadd.f32 0.0, %v890
      %v892 = vpop.f32.mrb[0].mxu0
      %v893 = vpop.f32.mrb[0].mxu0
      %v894 = vadd.f32 0.0, %v893
      %v895 = vpop.f32.mrb[0].mxu0
      %896 = vmatprep.mubr.bf16.mxu0 0
      %897 = vmatmul.mubr.bf16.gmra.mrb[0].mxu0 %v774
      %v898 = vpop.f32.mrb[0].mxu0
      %v899 = vadd.f32 0.0, %v898
      %v900 = vpop.f32.mrb[0].mxu0
      %v901 = vpop.f32.mrb[0].mxu0
      %v902 = vadd.f32 0.0, %v901
      %v903 = vpop.f32.mrb[0].mxu0
      %904 = vdwg.mxu0
      %v905 = vadd.f32 %v754, %v875
      %v906 = vadd.f32 %v755, %v878
      %v907 = vadd.f32 %v756, %v883
      %v908 = vadd.f32 %v757, %v886
      %v909 = vadd.f32 %v758, %v891
      %v910 = vadd.f32 %v759, %v894
      %v911 = vadd.f32 %v760, %v899
      %v912 = vadd.f32 %v761, %v902
      %v913 = vld [vmem:[%s611 + $0x1] sm:$0xff]
      %v914 = vld [vmem:[%s611 + $0x11] sm:$0xff]
      %v915 = vld [vmem:[%s611 + $0x21] sm:$0xff]
      %v916 = vld [vmem:[%s611 + $0x31] sm:$0xff]
      %v917 = vld [vmem:[%s611 + $0x41] sm:$0xff]
      %v918 = vld [vmem:[%s611 + $0x51] sm:$0xff]
      %v919 = vld [vmem:[%s611 + $0x61] sm:$0xff]
      %v920 = vld [vmem:[%s611 + $0x71] sm:$0xff]
      %v921 = vpack.c.bf16 %v914, %v913
      %v922 = vpack.c.bf16 %v916, %v915
      %v923 = vpack.c.bf16 %v918, %v917
      %v924 = vpack.c.bf16 %v920, %v919
      %s925 = scalar_lea.vmem %s1, 320
      %v926 = vld [vmem:[%s925] sm:$0xf]
      %v927 = vld [vmem:[%s925 + $0x4] sm:$0xf]
      %v928 = vld [vmem:[%s925 + $0x8] sm:$0xf]
      %v929 = vld [vmem:[%s925 + $0xc] sm:$0xf]
      %v930 = vld [vmem:[%s925 + $0x10] sm:$0xf]
      %v931 = vld [vmem:[%s925 + $0x14] sm:$0xf]
      %v932 = vld [vmem:[%s925 + $0x18] sm:$0xf]
      %v933 = vld [vmem:[%s925 + $0x1c] sm:$0xf]
      %v934 = vld [vmem:[%s925 + $0x20] sm:$0xf]
      %v935 = vld [vmem:[%s925 + $0x24] sm:$0xf]
      %v936 = vld [vmem:[%s925 + $0x28] sm:$0xf]
      %v937 = vld [vmem:[%s925 + $0x2c] sm:$0xf]
      %v938 = vld [vmem:[%s925 + $0x30] sm:$0xf]
      %v939 = vld [vmem:[%s925 + $0x34] sm:$0xf]
      %v940 = vld [vmem:[%s925 + $0x38] sm:$0xf]
      %v941 = vld [vmem:[%s925 + $0x3c] sm:$0xf]
      %v958 = vunpack.c.l.b16 %v926
      %v959 = vunpack.c.l.b16 %v927
      %v960 = vunpack.c.l.b16 %v928
      %v961 = vunpack.c.l.b16 %v929
      %v962 = vunpack.c.l.b16 %v930
      %v963 = vunpack.c.l.b16 %v931
      %v964 = vunpack.c.l.b16 %v932
      %v965 = vunpack.c.l.b16 %v933
      %v966 = vunpack.c.l.b16 %v934
      %v967 = vunpack.c.l.b16 %v935
      %v968 = vunpack.c.l.b16 %v936
      %v969 = vunpack.c.l.b16 %v937
      %v970 = vunpack.c.l.b16 %v938
      %v971 = vunpack.c.l.b16 %v939
      %v972 = vunpack.c.l.b16 %v940
      %v973 = vunpack.c.l.b16 %v941
      %v974 = vpack.c.b16 %v959, %v958
      %v975 = vpack.c.b16 %v961, %v960
      %v976 = vpack.c.b16 %v963, %v962
      %v977 = vpack.c.b16 %v965, %v964
      %v978 = vpack.c.b16 %v967, %v966
      %v979 = vpack.c.b16 %v969, %v968
      %v980 = vpack.c.b16 %v971, %v970
      %v981 = vpack.c.b16 %v973, %v972
      %990 = vmatprep.subr.bf16.mxu0 0
      %991 = vmatpush1.bf16.msra.mxu0 %v974
      %992 = vmatprep.subr.bf16.mxu0 0
      %993 = vmatpush1.bf16.msra.mxu0 %v975
      %994 = vmatprep.subr.bf16.mxu0 0
      %995 = vmatpush1.bf16.msra.mxu0 %v976
      %996 = vmatprep.subr.bf16.mxu0 0
      %997 = vmatpush1.bf16.msra.mxu0 %v977
      %998 = vmatprep.subr.bf16.mxu0 0
      %999 = vmatpush1.bf16.msra.mxu0 %v978
      %1000 = vmatprep.subr.bf16.mxu0 0
      %1001 = vmatpush1.bf16.msra.mxu0 %v979
      %1002 = vmatprep.subr.bf16.mxu0 0
      %1003 = vmatpush1.bf16.msra.mxu0 %v980
      %1004 = vmatprep.subr.bf16.mxu0 0
      %1005 = vmatpush1.bf16.msra.mxu0 %v981
      %1006 = vmatprep.subr.bf16.mxu0 0
      %1007 = vmatpush1.bf16.msra.mxu0 0
      %1008 = vmatprep.subr.bf16.mxu0 0
      %1009 = vmatpush1.bf16.msra.mxu0 0
      %1010 = vmatprep.subr.bf16.mxu0 0
      %1011 = vmatpush1.bf16.msra.mxu0 0
      %1012 = vmatprep.subr.bf16.mxu0 0
      %1013 = vmatpush1.bf16.msra.mxu0 0
      %1014 = vmatprep.subr.bf16.mxu0 0
      %1015 = vmatpush1.bf16.msra.mxu0 0
      %1016 = vmatprep.subr.bf16.mxu0 0
      %1017 = vmatpush1.bf16.msra.mxu0 0
      %1018 = vmatprep.subr.bf16.mxu0 0
      %1019 = vmatpush1.bf16.msra.mxu0 0
      %1020 = vmatprep.subr.bf16.mxu0 0
      %1021 = vmatpush1.bf16.msra.mxu0 0
      %1022 = vmatprep.mubr.bf16.mxu0 0
      %1023 = vmatmul.mubr.bf16.gmra.mrb[0].mxu0 %v921
      %v1024 = vpop.f32.mrb[0].mxu0
      %v1025 = vadd.f32 0.0, %v1024
      %v1026 = vpop.f32.mrb[0].mxu0
      %v1027 = vpop.f32.mrb[0].mxu0
      %v1028 = vadd.f32 0.0, %v1027
      %v1029 = vpop.f32.mrb[0].mxu0
      %1030 = vmatprep.mubr.bf16.mxu0 0
      %1031 = vmatmul.mubr.bf16.gmra.mrb[0].mxu0 %v922
      %v1032 = vpop.f32.mrb[0].mxu0
      %v1033 = vadd.f32 0.0, %v1032
      %v1034 = vpop.f32.mrb[0].mxu0
      %v1035 = vpop.f32.mrb[0].mxu0
      %v1036 = vadd.f32 0.0, %v1035
      %v1037 = vpop.f32.mrb[0].mxu0
      %1038 = vmatprep.mubr.bf16.mxu0 0
      %1039 = vmatmul.mubr.bf16.gmra.mrb[0].mxu0 %v923
      %v1040 = vpop.f32.mrb[0].mxu0
      %v1041 = vadd.f32 0.0, %v1040
      %v1042 = vpop.f32.mrb[0].mxu0
      %v1043 = vpop.f32.mrb[0].mxu0
      %v1044 = vadd.f32 0.0, %v1043
      %v1045 = vpop.f32.mrb[0].mxu0
      %1046 = vmatprep.mubr.bf16.mxu0 0
      %1047 = vmatmul.mubr.bf16.gmra.mrb[0].mxu0 %v924
      %v1048 = vpop.f32.mrb[0].mxu0
      %v1049 = vadd.f32 0.0, %v1048
      %v1050 = vpop.f32.mrb[0].mxu0
      %v1051 = vpop.f32.mrb[0].mxu0
      %v1052 = vadd.f32 0.0, %v1051
      %v1053 = vpop.f32.mrb[0].mxu0
      %1054 = vdwg.mxu0
      %v1055 = vadd.f32 %v905, %v1025
      %v1056 = vadd.f32 %v906, %v1028
      %v1057 = vadd.f32 %v907, %v1033
      %v1058 = vadd.f32 %v908, %v1036
      %v1059 = vadd.f32 %v909, %v1041
      %v1060 = vadd.f32 %v910, %v1044
      %v1061 = vadd.f32 %v911, %v1049
      %v1062 = vadd.f32 %v912, %v1052
      %s1063 = scalar_lea.vmem %s169, 16
      %v1064 = vld [vmem:[%s1063] sm:$0xff]
      %v1065 = vld [vmem:[%s1063 + $0x10] sm:$0xff]
      %v1066 = vld [vmem:[%s1063 + $0x20] sm:$0xff]
      %v1067 = vld [vmem:[%s1063 + $0x30] sm:$0xff]
      %v1068 = vld [vmem:[%s1063 + $0x40] sm:$0xff]
      %v1069 = vld [vmem:[%s1063 + $0x50] sm:$0xff]
      %v1070 = vld [vmem:[%s1063 + $0x60] sm:$0xff]
      %v1071 = vld [vmem:[%s1063 + $0x70] sm:$0xff]
      %v1072 = vpack.c.bf16 %v1065, %v1064
      %v1073 = vpack.c.bf16 %v1067, %v1066
      %v1074 = vpack.c.bf16 %v1069, %v1068
      %v1075 = vpack.c.bf16 %v1071, %v1070
      %s1076 = scalar_lea.vmem %s1, 384
      %v1077 = vld [vmem:[%s1076] sm:$0xf]
      %v1078 = vld [vmem:[%s1076 + $0x4] sm:$0xf]
      %v1079 = vld [vmem:[%s1076 + $0x8] sm:$0xf]
      %v1080 = vld [vmem:[%s1076 + $0xc] sm:$0xf]
      %v1081 = vld [vmem:[%s1076 + $0x10] sm:$0xf]
      %v1082 = vld [vmem:[%s1076 + $0x14] sm:$0xf]
      %v1083 = vld [vmem:[%s1076 + $0x18] sm:$0xf]
      %v1084 = vld [vmem:[%s1076 + $0x1c] sm:$0xf]
      %v1085 = vld [vmem:[%s1076 + $0x20] sm:$0xf]
      %v1086 = vld [vmem:[%s1076 + $0x24] sm:$0xf]
      %v1087 = vld [vmem:[%s1076 + $0x28] sm:$0xf]
      %v1088 = vld [vmem:[%s1076 + $0x2c] sm:$0xf]
      %v1089 = vld [vmem:[%s1076 + $0x30] sm:$0xf]
      %v1090 = vld [vmem:[%s1076 + $0x34] sm:$0xf]
      %v1091 = vld [vmem:[%s1076 + $0x38] sm:$0xf]
      %v1092 = vld [vmem:[%s1076 + $0x3c] sm:$0xf]
      %v1109 = vunpack.c.l.b16 %v1077
      %v1110 = vunpack.c.l.b16 %v1078
      %v1111 = vunpack.c.l.b16 %v1079
      %v1112 = vunpack.c.l.b16 %v1080
      %v1113 = vunpack.c.l.b16 %v1081
      %v1114 = vunpack.c.l.b16 %v1082
      %v1115 = vunpack.c.l.b16 %v1083
      %v1116 = vunpack.c.l.b16 %v1084
      %v1117 = vunpack.c.l.b16 %v1085
      %v1118 = vunpack.c.l.b16 %v1086
      %v1119 = vunpack.c.l.b16 %v1087
      %v1120 = vunpack.c.l.b16 %v1088
      %v1121 = vunpack.c.l.b16 %v1089
      %v1122 = vunpack.c.l.b16 %v1090
      %v1123 = vunpack.c.l.b16 %v1091
      %v1124 = vunpack.c.l.b16 %v1092
      %v1125 = vpack.c.b16 %v1110, %v1109
      %v1126 = vpack.c.b16 %v1112, %v1111
      %v1127 = vpack.c.b16 %v1114, %v1113
      %v1128 = vpack.c.b16 %v1116, %v1115
      %v1129 = vpack.c.b16 %v1118, %v1117
      %v1130 = vpack.c.b16 %v1120, %v1119
      %v1131 = vpack.c.b16 %v1122, %v1121
      %v1132 = vpack.c.b16 %v1124, %v1123
      %1141 = vmatprep.subr.bf16.mxu0 0
      %1142 = vmatpush1.bf16.msra.mxu0 %v1125
      %1143 = vmatprep.subr.bf16.mxu0 0
      %1144 = vmatpush1.bf16.msra.mxu0 %v1126
      %1145 = vmatprep.subr.bf16.mxu0 0
      %1146 = vmatpush1.bf16.msra.mxu0 %v1127
      %1147 = vmatprep.subr.bf16.mxu0 0
      %1148 = vmatpush1.bf16.msra.mxu0 %v1128
      %1149 = vmatprep.subr.bf16.mxu0 0
      %1150 = vmatpush1.bf16.msra.mxu0 %v1129
      %1151 = vmatprep.subr.bf16.mxu0 0
      %1152 = vmatpush1.bf16.msra.mxu0 %v1130
      %1153 = vmatprep.subr.bf16.mxu0 0
      %1154 = vmatpush1.bf16.msra.mxu0 %v1131
      %1155 = vmatprep.subr.bf16.mxu0 0
      %1156 = vmatpush1.bf16.msra.mxu0 %v1132
      %1157 = vmatprep.subr.bf16.mxu0 0
      %1158 = vmatpush1.bf16.msra.mxu0 0
      %1159 = vmatprep.subr.bf16.mxu0 0
      %1160 = vmatpush1.bf16.msra.mxu0 0
      %1161 = vmatprep.subr.bf16.mxu0 0
      %1162 = vmatpush1.bf16.msra.mxu0 0
      %1163 = vmatprep.subr.bf16.mxu0 0
      %1164 = vmatpush1.bf16.msra.mxu0 0
      %1165 = vmatprep.subr.bf16.mxu0 0
      %1166 = vmatpush1.bf16.msra.mxu0 0
      %1167 = vmatprep.subr.bf16.mxu0 0
      %1168 = vmatpush1.bf16.msra.mxu0 0
      %1169 = vmatprep.subr.bf16.mxu0 0
      %1170 = vmatpush1.bf16.msra.mxu0 0
      %1171 = vmatprep.subr.bf16.mxu0 0
      %1172 = vmatpush1.bf16.msra.mxu0 0
      %1173 = vmatprep.mubr.bf16.mxu0 0
      %1174 = vmatmul.mubr.bf16.gmra.mrb[0].mxu0 %v1072
      %v1175 = vpop.f32.mrb[0].mxu0
      %v1176 = vadd.f32 0.0, %v1175
      %v1177 = vpop.f32.mrb[0].mxu0
      %v1178 = vpop.f32.mrb[0].mxu0
      %v1179 = vadd.f32 0.0, %v1178
      %v1180 = vpop.f32.mrb[0].mxu0
      %1181 = vmatprep.mubr.bf16.mxu0 0
      %1182 = vmatmul.mubr.bf16.gmra.mrb[0].mxu0 %v1073
      %v1183 = vpop.f32.mrb[0].mxu0
      %v1184 = vadd.f32 0.0, %v1183
      %v1185 = vpop.f32.mrb[0].mxu0
      %v1186 = vpop.f32.mrb[0].mxu0
      %v1187 = vadd.f32 0.0, %v1186
      %v1188 = vpop.f32.mrb[0].mxu0
      %1189 = vmatprep.mubr.bf16.mxu0 0
      %1190 = vmatmul.mubr.bf16.gmra.mrb[0].mxu0 %v1074
      %v1191 = vpop.f32.mrb[0].mxu0
      %v1192 = vadd.f32 0.0, %v1191
      %v1193 = vpop.f32.mrb[0].mxu0
      %v1194 = vpop.f32.mrb[0].mxu0
      %v1195 = vadd.f32 0.0, %v1194
      %v1196 = vpop.f32.mrb[0].mxu0
      %1197 = vmatprep.mubr.bf16.mxu0 0
      %1198 = vmatmul.mubr.bf16.gmra.mrb[0].mxu0 %v1075
      %v1199 = vpop.f32.mrb[0].mxu0
      %v1200 = vadd.f32 0.0, %v1199
      %v1201 = vpop.f32.mrb[0].mxu0
      %v1202 = vpop.f32.mrb[0].mxu0
      %v1203 = vadd.f32 0.0, %v1202
      %v1204 = vpop.f32.mrb[0].mxu0
      %1205 = vdwg.mxu0
      %v1206 = vadd.f32 %v1055, %v1176
      %v1207 = vadd.f32 %v1056, %v1179
      %v1208 = vadd.f32 %v1057, %v1184
      %v1209 = vadd.f32 %v1058, %v1187
      %v1210 = vadd.f32 %v1059, %v1192
      %v1211 = vadd.f32 %v1060, %v1195
      %v1212 = vadd.f32 %v1061, %v1200
      %v1213 = vadd.f32 %v1062, %v1203
      %s1214 = scalar_lea.vmem %s169, 160
      %v1215 = vld [vmem:[%s1214] sm:$0xff]
      %v1216 = vld [vmem:[%s1214 + $0x10] sm:$0xff]
      %v1217 = vld [vmem:[%s1214 + $0x20] sm:$0xff]
      %v1218 = vld [vmem:[%s1214 + $0x30] sm:$0xff]
      %v1219 = vld [vmem:[%s1214 + $0x40] sm:$0xff]
      %v1220 = vld [vmem:[%s1214 + $0x50] sm:$0xff]
      %v1221 = vld [vmem:[%s1214 + $0x60] sm:$0xff]
      %v1222 = vld [vmem:[%s1214 + $0x70] sm:$0xff]
      %v1223 = vpack.c.bf16 %v1216, %v1215
      %v1224 = vpack.c.bf16 %v1218, %v1217
      %v1225 = vpack.c.bf16 %v1220, %v1219
      %v1226 = vpack.c.bf16 %v1222, %v1221
      %s1227 = scalar_lea.vmem %s1, 448
      %v1228 = vld [vmem:[%s1227] sm:$0xf]
      %v1229 = vld [vmem:[%s1227 + $0x4] sm:$0xf]
      %v1230 = vld [vmem:[%s1227 + $0x8] sm:$0xf]
      %v1231 = vld [vmem:[%s1227 + $0xc] sm:$0xf]
      %v1232 = vld [vmem:[%s1227 + $0x10] sm:$0xf]
      %v1233 = vld [vmem:[%s1227 + $0x14] sm:$0xf]
      %v1234 = vld [vmem:[%s1227 + $0x18] sm:$0xf]
      %v1235 = vld [vmem:[%s1227 + $0x1c] sm:$0xf]
      %v1236 = vld [vmem:[%s1227 + $0x20] sm:$0xf]
      %v1237 = vld [vmem:[%s1227 + $0x24] sm:$0xf]
      %v1238 = vld [vmem:[%s1227 + $0x28] sm:$0xf]
      %v1239 = vld [vmem:[%s1227 + $0x2c] sm:$0xf]
      %v1240 = vld [vmem:[%s1227 + $0x30] sm:$0xf]
      %v1241 = vld [vmem:[%s1227 + $0x34] sm:$0xf]
      %v1242 = vld [vmem:[%s1227 + $0x38] sm:$0xf]
      %v1243 = vld [vmem:[%s1227 + $0x3c] sm:$0xf]
      %v1260 = vunpack.c.l.b16 %v1228
      %v1261 = vunpack.c.l.b16 %v1229
      %v1262 = vunpack.c.l.b16 %v1230
      %v1263 = vunpack.c.l.b16 %v1231
      %v1264 = vunpack.c.l.b16 %v1232
      %v1265 = vunpack.c.l.b16 %v1233
      %v1266 = vunpack.c.l.b16 %v1234
      %v1267 = vunpack.c.l.b16 %v1235
      %v1268 = vunpack.c.l.b16 %v1236
      %v1269 = vunpack.c.l.b16 %v1237
      %v1270 = vunpack.c.l.b16 %v1238
      %v1271 = vunpack.c.l.b16 %v1239
      %v1272 = vunpack.c.l.b16 %v1240
      %v1273 = vunpack.c.l.b16 %v1241
      %v1274 = vunpack.c.l.b16 %v1242
      %v1275 = vunpack.c.l.b16 %v1243
      %v1276 = vpack.c.b16 %v1261, %v1260
      %v1277 = vpack.c.b16 %v1263, %v1262
      %v1278 = vpack.c.b16 %v1265, %v1264
      %v1279 = vpack.c.b16 %v1267, %v1266
      %v1280 = vpack.c.b16 %v1269, %v1268
      %v1281 = vpack.c.b16 %v1271, %v1270
      %v1282 = vpack.c.b16 %v1273, %v1272
      %v1283 = vpack.c.b16 %v1275, %v1274
      %1292 = vmatprep.subr.bf16.mxu0 0
      %1293 = vmatpush1.bf16.msra.mxu0 %v1276
      %1294 = vmatprep.subr.bf16.mxu0 0
      %1295 = vmatpush1.bf16.msra.mxu0 %v1277
      %1296 = vmatprep.subr.bf16.mxu0 0
      %1297 = vmatpush1.bf16.msra.mxu0 %v1278
      %1298 = vmatprep.subr.bf16.mxu0 0
      %1299 = vmatpush1.bf16.msra.mxu0 %v1279
      %1300 = vmatprep.subr.bf16.mxu0 0
      %1301 = vmatpush1.bf16.msra.mxu0 %v1280
      %1302 = vmatprep.subr.bf16.mxu0 0
      %1303 = vmatpush1.bf16.msra.mxu0 %v1281
      %1304 = vmatprep.subr.bf16.mxu0 0
      %1305 = vmatpush1.bf16.msra.mxu0 %v1282
      %1306 = vmatprep.subr.bf16.mxu0 0
      %1307 = vmatpush1.bf16.msra.mxu0 %v1283
      %1308 = vmatprep.subr.bf16.mxu0 0
      %1309 = vmatpush1.bf16.msra.mxu0 0
      %1310 = vmatprep.subr.bf16.mxu0 0
      %1311 = vmatpush1.bf16.msra.mxu0 0
      %1312 = vmatprep.subr.bf16.mxu0 0
      %1313 = vmatpush1.bf16.msra.mxu0 0
      %1314 = vmatprep.subr.bf16.mxu0 0
      %1315 = vmatpush1.bf16.msra.mxu0 0
      %1316 = vmatprep.subr.bf16.mxu0 0
      %1317 = vmatpush1.bf16.msra.mxu0 0
      %1318 = vmatprep.subr.bf16.mxu0 0
      %1319 = vmatpush1.bf16.msra.mxu0 0
      %1320 = vmatprep.subr.bf16.mxu0 0
      %1321 = vmatpush1.bf16.msra.mxu0 0
      %1322 = vmatprep.subr.bf16.mxu0 0
      %1323 = vmatpush1.bf16.msra.mxu0 0
      %1324 = vmatprep.mubr.bf16.mxu0 0
      %1325 = vmatmul.mubr.bf16.gmra.mrb[0].mxu0 %v1223
      %v1326 = vpop.f32.mrb[0].mxu0
      %v1327 = vadd.f32 0.0, %v1326
      %v1328 = vpop.f32.mrb[0].mxu0
      %v1329 = vpop.f32.mrb[0].mxu0
      %v1330 = vadd.f32 0.0, %v1329
      %v1331 = vpop.f32.mrb[0].mxu0
      %1332 = vmatprep.mubr.bf16.mxu0 0
      %1333 = vmatmul.mubr.bf16.gmra.mrb[0].mxu0 %v1224
      %v1334 = vpop.f32.mrb[0].mxu0
      %v1335 = vadd.f32 0.0, %v1334
      %v1336 = vpop.f32.mrb[0].mxu0
      %v1337 = vpop.f32.mrb[0].mxu0
      %v1338 = vadd.f32 0.0, %v1337
      %v1339 = vpop.f32.mrb[0].mxu0
      %1340 = vmatprep.mubr.bf16.mxu0 0
      %1341 = vmatmul.mubr.bf16.gmra.mrb[0].mxu0 %v1225
      %v1342 = vpop.f32.mrb[0].mxu0
      %v1343 = vadd.f32 0.0, %v1342
      %v1344 = vpop.f32.mrb[0].mxu0
      %v1345 = vpop.f32.mrb[0].mxu0
      %v1346 = vadd.f32 0.0, %v1345
      %v1347 = vpop.f32.mrb[0].mxu0
      %1348 = vmatprep.mubr.bf16.mxu0 0
      %1349 = vmatmul.mubr.bf16.gmra.mrb[0].mxu0 %v1226
      %v1350 = vpop.f32.mrb[0].mxu0
      %v1351 = vadd.f32 0.0, %v1350
      %v1352 = vpop.f32.mrb[0].mxu0
      %v1353 = vpop.f32.mrb[0].mxu0
      %v1354 = vadd.f32 0.0, %v1353
      %v1355 = vpop.f32.mrb[0].mxu0
      %1356 = vdwg.mxu0
      %v1357 = vadd.f32 %v1206, %v1327
      %v1358 = vadd.f32 %v1207, %v1330
      %v1359 = vadd.f32 %v1208, %v1335
      %v1360 = vadd.f32 %v1209, %v1338
      %v1361 = vadd.f32 %v1210, %v1343
      %v1362 = vadd.f32 %v1211, %v1346
      %v1363 = vadd.f32 %v1212, %v1351
      %v1364 = vadd.f32 %v1213, %v1354
      %v1365 = vld [vmem:[%s1063 + $0x1] sm:$0xff]
      %v1366 = vld [vmem:[%s1063 + $0x11] sm:$0xff]
      %v1367 = vld [vmem:[%s1063 + $0x21] sm:$0xff]
      %v1368 = vld [vmem:[%s1063 + $0x31] sm:$0xff]
      %v1369 = vld [vmem:[%s1063 + $0x41] sm:$0xff]
      %v1370 = vld [vmem:[%s1063 + $0x51] sm:$0xff]
      %v1371 = vld [vmem:[%s1063 + $0x61] sm:$0xff]
      %v1372 = vld [vmem:[%s1063 + $0x71] sm:$0xff]
      %v1373 = vpack.c.bf16 %v1366, %v1365
      %v1374 = vpack.c.bf16 %v1368, %v1367
      %v1375 = vpack.c.bf16 %v1370, %v1369
      %v1376 = vpack.c.bf16 %v1372, %v1371
      %s1377 = scalar_lea.vmem %s1, 512
      %v1378 = vld [vmem:[%s1377] sm:$0xf]
      %v1379 = vld [vmem:[%s1377 + $0x4] sm:$0xf]
      %v1380 = vld [vmem:[%s1377 + $0x8] sm:$0xf]
      %v1381 = vld [vmem:[%s1377 + $0xc] sm:$0xf]
      %v1382 = vld [vmem:[%s1377 + $0x10] sm:$0xf]
      %v1383 = vld [vmem:[%s1377 + $0x14] sm:$0xf]
      %v1384 = vld [vmem:[%s1377 + $0x18] sm:$0xf]
      %v1385 = vld [vmem:[%s1377 + $0x1c] sm:$0xf]
      %v1386 = vld [vmem:[%s1377 + $0x20] sm:$0xf]
      %v1387 = vld [vmem:[%s1377 + $0x24] sm:$0xf]
      %v1388 = vld [vmem:[%s1377 + $0x28] sm:$0xf]
      %v1389 = vld [vmem:[%s1377 + $0x2c] sm:$0xf]
      %v1390 = vld [vmem:[%s1377 + $0x30] sm:$0xf]
      %v1391 = vld [vmem:[%s1377 + $0x34] sm:$0xf]
      %v1392 = vld [vmem:[%s1377 + $0x38] sm:$0xf]
      %v1393 = vld [vmem:[%s1377 + $0x3c] sm:$0xf]
      %v1410 = vunpack.c.l.b16 %v1378
      %v1411 = vunpack.c.l.b16 %v1379
      %v1412 = vunpack.c.l.b16 %v1380
      %v1413 = vunpack.c.l.b16 %v1381
      %v1414 = vunpack.c.l.b16 %v1382
      %v1415 = vunpack.c.l.b16 %v1383
      %v1416 = vunpack.c.l.b16 %v1384
      %v1417 = vunpack.c.l.b16 %v1385
      %v1418 = vunpack.c.l.b16 %v1386
      %v1419 = vunpack.c.l.b16 %v1387
      %v1420 = vunpack.c.l.b16 %v1388
      %v1421 = vunpack.c.l.b16 %v1389
      %v1422 = vunpack.c.l.b16 %v1390
      %v1423 = vunpack.c.l.b16 %v1391
      %v1424 = vunpack.c.l.b16 %v1392
      %v1425 = vunpack.c.l.b16 %v1393
      %v1426 = vpack.c.b16 %v1411, %v1410
      %v1427 = vpack.c.b16 %v1413, %v1412
      %v1428 = vpack.c.b16 %v1415, %v1414
      %v1429 = vpack.c.b16 %v1417, %v1416
      %v1430 = vpack.c.b16 %v1419, %v1418
      %v1431 = vpack.c.b16 %v1421, %v1420
      %v1432 = vpack.c.b16 %v1423, %v1422
      %v1433 = vpack.c.b16 %v1425, %v1424
      %1442 = vmatprep.subr.bf16.mxu0 0
      %1443 = vmatpush1.bf16.msra.mxu0 %v1426
      %1444 = vmatprep.subr.bf16.mxu0 0
      %1445 = vmatpush1.bf16.msra.mxu0 %v1427
      %1446 = vmatprep.subr.bf16.mxu0 0
      %1447 = vmatpush1.bf16.msra.mxu0 %v1428
      %1448 = vmatprep.subr.bf16.mxu0 0
      %1449 = vmatpush1.bf16.msra.mxu0 %v1429
      %1450 = vmatprep.subr.bf16.mxu0 0
      %1451 = vmatpush1.bf16.msra.mxu0 %v1430
      %1452 = vmatprep.subr.bf16.mxu0 0
      %1453 = vmatpush1.bf16.msra.mxu0 %v1431
      %1454 = vmatprep.subr.bf16.mxu0 0
      %1455 = vmatpush1.bf16.msra.mxu0 %v1432
      %1456 = vmatprep.subr.bf16.mxu0 0
      %1457 = vmatpush1.bf16.msra.mxu0 %v1433
      %1458 = vmatprep.subr.bf16.mxu0 0
      %1459 = vmatpush1.bf16.msra.mxu0 0
      %1460 = vmatprep.subr.bf16.mxu0 0
      %1461 = vmatpush1.bf16.msra.mxu0 0
      %1462 = vmatprep.subr.bf16.mxu0 0
      %1463 = vmatpush1.bf16.msra.mxu0 0
      %1464 = vmatprep.subr.bf16.mxu0 0
      %1465 = vmatpush1.bf16.msra.mxu0 0
      %1466 = vmatprep.subr.bf16.mxu0 0
      %1467 = vmatpush1.bf16.msra.mxu0 0
      %1468 = vmatprep.subr.bf16.mxu0 0
      %1469 = vmatpush1.bf16.msra.mxu0 0
      %1470 = vmatprep.subr.bf16.mxu0 0
      %1471 = vmatpush1.bf16.msra.mxu0 0
      %1472 = vmatprep.subr.bf16.mxu0 0
      %1473 = vmatpush1.bf16.msra.mxu0 0
      %1474 = vmatprep.mubr.bf16.mxu0 0
      %1475 = vmatmul.mubr.bf16.gmra.mrb[0].mxu0 %v1373
      %v1476 = vpop.f32.mrb[0].mxu0
      %v1477 = vadd.f32 0.0, %v1476
      %v1478 = vpop.f32.mrb[0].mxu0
      %v1479 = vpop.f32.mrb[0].mxu0
      %v1480 = vadd.f32 0.0, %v1479
      %v1481 = vpop.f32.mrb[0].mxu0
      %1482 = vmatprep.mubr.bf16.mxu0 0
      %1483 = vmatmul.mubr.bf16.gmra.mrb[0].mxu0 %v1374
      %v1484 = vpop.f32.mrb[0].mxu0
      %v1485 = vadd.f32 0.0, %v1484
      %v1486 = vpop.f32.mrb[0].mxu0
      %v1487 = vpop.f32.mrb[0].mxu0
      %v1488 = vadd.f32 0.0, %v1487
      %v1489 = vpop.f32.mrb[0].mxu0
      %1490 = vmatprep.mubr.bf16.mxu0 0
      %1491 = vmatmul.mubr.bf16.gmra.mrb[0].mxu0 %v1375
      %v1492 = vpop.f32.mrb[0].mxu0
      %v1493 = vadd.f32 0.0, %v1492
      %v1494 = vpop.f32.mrb[0].mxu0
      %v1495 = vpop.f32.mrb[0].mxu0
      %v1496 = vadd.f32 0.0, %v1495
      %v1497 = vpop.f32.mrb[0].mxu0
      %1498 = vmatprep.mubr.bf16.mxu0 0
      %1499 = vmatmul.mubr.bf16.gmra.mrb[0].mxu0 %v1376
      %v1500 = vpop.f32.mrb[0].mxu0
      %v1501 = vadd.f32 0.0, %v1500
      %v1502 = vpop.f32.mrb[0].mxu0
      %v1503 = vpop.f32.mrb[0].mxu0
      %v1504 = vadd.f32 0.0, %v1503
      %v1505 = vpop.f32.mrb[0].mxu0
      %1506 = vdwg.mxu0
      %v1507 = vadd.f32 %v1357, %v1477
      %v1508 = vadd.f32 %v1358, %v1480
      %v1509 = vadd.f32 %v1359, %v1485
      %v1510 = vadd.f32 %v1360, %v1488
      %v1511 = vadd.f32 %v1361, %v1493
      %v1512 = vadd.f32 %v1362, %v1496
      %v1513 = vadd.f32 %v1363, %v1501
      %v1514 = vadd.f32 %v1364, %v1504
      %v1515 = vld [vmem:[%s2] sm:$0x1]
      %v1517 = vlaneseq
      %v1518 = vshrl.u32 %v1517, 7
      %v1519 = vsub.s32 0, %v1518
      %v1520 = vrot.slane %v1515, %v1519
      %v1522 = vadd.f32 %v1507, %v1520
      %v1523 = vadd.f32 %v1508, %v1520
      %v1524 = vadd.f32 %v1509, %v1520
      %v1525 = vadd.f32 %v1510, %v1520
      %v1526 = vadd.f32 %v1511, %v1520
      %v1527 = vadd.f32 %v1512, %v1520
      %v1528 = vadd.f32 %v1513, %v1520
      %v1529 = vadd.f32 %v1514, %v1520
      %v1530 = vmax.f32 %v1522, 0.0
      %v1531 = vmax.f32 %v1523, 0.0
      %v1532 = vmax.f32 %v1524, 0.0
      %v1533 = vmax.f32 %v1525, 0.0
      %v1534 = vmax.f32 %v1526, 0.0
      %v1535 = vmax.f32 %v1527, 0.0
      %v1536 = vmax.f32 %v1528, 0.0
      %v1537 = vmax.f32 %v1529, 0.0
      %v1538 = vpack.c.bf16 %v1531, %v1530
      %v1539 = vpack.c.bf16 %v1533, %v1532
      %v1540 = vpack.c.bf16 %v1535, %v1534
      %v1541 = vpack.c.bf16 %v1537, %v1536
      %v1546 = vunpack.c.l.b16 %v1538
      %v1547 = vunpack.c.h.b16 %v1538
      %v1548 = vunpack.c.l.b16 %v1539
      %v1549 = vunpack.c.h.b16 %v1539
      %v1550 = vunpack.c.l.b16 %v1540
      %v1551 = vunpack.c.h.b16 %v1540
      %v1552 = vunpack.c.l.b16 %v1541
      %v1553 = vunpack.c.h.b16 %v1541
      %v1554 = vpack.c.b16 %v1546, %v1546
      %v1555 = vpack.c.b16 %v1547, %v1547
      %v1556 = vpack.c.b16 %v1548, %v1548
      %v1557 = vpack.c.b16 %v1549, %v1549
      %v1558 = vpack.c.b16 %v1550, %v1550
      %v1559 = vpack.c.b16 %v1551, %v1551
      %v1560 = vpack.c.b16 %v1552, %v1552
      %v1561 = vpack.c.b16 %v1553, %v1553
      %1570 = vst [vmem:[%s175] sm:$0xf] %v1554
      %1571 = vst [vmem:[%s175 + $0x4] sm:$0xf] %v1555
      %1572 = vst [vmem:[%s175 + $0x8] sm:$0xf] %v1556
      %1573 = vst [vmem:[%s175 + $0xc] sm:$0xf] %v1557
      %1574 = vst [vmem:[%s175 + $0x10] sm:$0xf] %v1558
      %1575 = vst [vmem:[%s175 + $0x14] sm:$0xf] %v1559
      %1576 = vst [vmem:[%s175 + $0x18] sm:$0xf] %v1560
      %1577 = vst [vmem:[%s175 + $0x1c] sm:$0xf] %v1561
      %p1578 = scmp.lt.s32.totalorder %s14, 1
      %s1579 = scalar_select %p1578, %s14, 1
      %s1580 = smul.addr %s1579, 8
      %s1581 = smul.addr %s1580, 4
      %s1582 = scalar_lea.vmem %s3, %s1581
      // Predicated region
      $region33: #{bottleneck_forward.4} parent=31 // pred_check
        %p1583 = pneg %p100
      $region34: #{bottleneck_forward.4} parent=31 // pred_check_branch
        %1585 = sbr.rel (%p1583) target = $region36
      $region35: #{bottleneck_forward.4} parent=31 // pred_region
        _
      $region36: #{bottleneck_forward.4} parent=31 // pred_fallthru
        _
    $region32: #{bottleneck_forward.4} parent=5 // pred_fallthru
      _
    %p1586 = scmp.le.s32.totalorder 2, %s9
    // Predicated region
    $region37: #{bottleneck_forward.4} parent=5 // pred_check
      %p1587 = pneg %p1586
    $region38: #{bottleneck_forward.4} parent=5 // pred_check_branch
      %1589 = sbr.rel (%p1587) target = $region40
    $region39: #{bottleneck_forward.4} parent=5 // pred_region
      %s1590 = ssub.s32 %s9, 2
      // Predicated region
      $region41: #{bottleneck_forward.4} parent=39 // pred_check
        %p1591 = pneg %p106
      $region42: #{bottleneck_forward.4} parent=39 // pred_check_branch
        %1593 = sbr.rel (%p1591) target = $region44
      $region43: #{bottleneck_forward.4} parent=39 // pred_region
        %p1594 = scmp.lt.s32.totalorder %s15, 1
        %s1595 = scalar_select %p1594, %s15, 1
        %s1596 = smul.addr %s1595, 8
        %s1597 = smul.addr %s1596, 4
        %s1598 = scalar_lea.vmem %s3, %s1597
      $region44: #{bottleneck_forward.4} parent=39 // pred_fallthru
        _
    $region40: #{bottleneck_forward.4} parent=5 // pred_fallthru
      _
  $region6: #{bottleneck_forward.4} parent=0 // loop_footer
    %s13 = sadd.s32 1, %s9
  $region7: #{bottleneck_forward.4} parent=0 // loop_footer_branch
    %8 = sbr.rel target = $region3
  $region8: #{bottleneck_forward.4} parent=0 // loop_exit
    _

// kernel: bottleneck_forward.5
$region0: #{bottleneck_forward.5}
  #allocation0 [shape = 'u32[]', space=smem, size = 0x4, offset = 0x4, fixed_abs, tag = 'smem constant byte address 0x4 - core index']
  #allocation1 [shape = 'u32[144,128]{1,0:T(1,128)}', space=vmem, size = 0x12000, scoped, tag = 'internal scratch']
  %s0 = inlined_call_operand.vmem [shape: bf16[128,128], index: 0, kind: input, shape index: {}]
  %s1 = inlined_call_operand.vmem [shape: bf16[128,128], index: 1, kind: input, shape index: {}]
  %s2 = inlined_call_operand.vmem [shape: f32[128,128], index: 2, kind: input, shape index: {}]
  %s3 = inlined_call_operand.vmem [shape: bf16[128,128], index: 3, kind: input, shape index: {}]
  %s4 = inlined_call_operand.vmem [shape: f32[1,128], index: 4, kind: input, shape index: {}]
  %s5 = inlined_call_operand.vmem [shape: f32[128,128], index: 5, kind: output, shape index: {}]
  %s6 = sld [smem:[#allocation0]]
  $region30: #{bottleneck_forward.5} parent=0
    _
  %s8 = ssub.s32 1, %s6
  %s9 = scalar_select 0, %s8, %s6
  // Predicated region
  $region2: #{bottleneck_forward.5} parent=0 // pred_check
    _
  $region3: #{bottleneck_forward.5} parent=0 // pred_check_branch
    %11 = sbr.rel (0) target = $region5
  $region4: #{bottleneck_forward.5} parent=0 // pred_region
    _
  $region5: #{bottleneck_forward.5} parent=0 // pred_fallthru
    _
  // Predicated region
  $region6: #{bottleneck_forward.5} parent=0 // pred_check
    _
  $region7: #{bottleneck_forward.5} parent=0 // pred_check_branch
    %13 = sbr.rel (0) target = $region9
  $region8: #{bottleneck_forward.5} parent=0 // pred_region
    _
  $region9: #{bottleneck_forward.5} parent=0 // pred_fallthru
    _
  // Predicated region
  $region10: #{bottleneck_forward.5} parent=0 // pred_check
    _
  $region11: #{bottleneck_forward.5} parent=0 // pred_check_branch
    %15 = sbr.rel (0) target = $region13
  $region12: #{bottleneck_forward.5} parent=0 // pred_region
    _
  $region13: #{bottleneck_forward.5} parent=0 // pred_fallthru
    _
  // Predicated region
  $region14: #{bottleneck_forward.5} parent=0 // pred_check
    _
  $region15: #{bottleneck_forward.5} parent=0 // pred_check_branch
    %17 = sbr.rel (0) target = $region17
  $region16: #{bottleneck_forward.5} parent=0 // pred_region
    _
  $region17: #{bottleneck_forward.5} parent=0 // pred_fallthru
    _
  // Predicated region
  $region18: #{bottleneck_forward.5} parent=0 // pred_check
    _
  $region19: #{bottleneck_forward.5} parent=0 // pred_check_branch
    %19 = sbr.rel (0) target = $region21
  $region20: #{bottleneck_forward.5} parent=0 // pred_region
    _
  $region21: #{bottleneck_forward.5} parent=0 // pred_fallthru
    _
  %v21 = vld [vmem:[%s0] sm:$0xf]
  %v22 = vld [vmem:[%s0 + $0x4] sm:$0xf]
  %v23 = vld [vmem:[%s0 + $0x8] sm:$0xf]
  %v24 = vld [vmem:[%s0 + $0xc] sm:$0xf]
  %v25 = vld [vmem:[%s0 + $0x10] sm:$0xf]
  %v26 = vld [vmem:[%s0 + $0x14] sm:$0xf]
  %v27 = vld [vmem:[%s0 + $0x18] sm:$0xf]
  %v28 = vld [vmem:[%s0 + $0x1c] sm:$0xf]
  %v29 = vld [vmem:[%s0 + $0x20] sm:$0xf]
  %v30 = vld [vmem:[%s0 + $0x24] sm:$0xf]
  %v31 = vld [vmem:[%s0 + $0x28] sm:$0xf]
  %v32 = vld [vmem:[%s0 + $0x2c] sm:$0xf]
  %v33 = vld [vmem:[%s0 + $0x30] sm:$0xf]
  %v34 = vld [vmem:[%s0 + $0x34] sm:$0xf]
  %v35 = vld [vmem:[%s0 + $0x38] sm:$0xf]
  %v36 = vld [vmem:[%s0 + $0x3c] sm:$0xf]
  %v37 = vld [vmem:[%s1] sm:$0xf]
  %v38 = vld [vmem:[%s1 + $0x4] sm:$0xf]
  %v39 = vld [vmem:[%s1 + $0x8] sm:$0xf]
  %v40 = vld [vmem:[%s1 + $0xc] sm:$0xf]
  %v41 = vld [vmem:[%s1 + $0x10] sm:$0xf]
  %v42 = vld [vmem:[%s1 + $0x14] sm:$0xf]
  %v43 = vld [vmem:[%s1 + $0x18] sm:$0xf]
  %v44 = vld [vmem:[%s1 + $0x1c] sm:$0xf]
  %v45 = vld [vmem:[%s1 + $0x20] sm:$0xf]
  %v46 = vld [vmem:[%s1 + $0x24] sm:$0xf]
  %v47 = vld [vmem:[%s1 + $0x28] sm:$0xf]
  %v48 = vld [vmem:[%s1 + $0x2c] sm:$0xf]
  %v49 = vld [vmem:[%s1 + $0x30] sm:$0xf]
  %v50 = vld [vmem:[%s1 + $0x34] sm:$0xf]
  %v51 = vld [vmem:[%s1 + $0x38] sm:$0xf]
  %v52 = vld [vmem:[%s1 + $0x3c] sm:$0xf]
  %v53 = vld [vmem:[%s2] sm:$0xff]
  %v54 = vld [vmem:[%s2 + $0x8] sm:$0xff]
  %v55 = vld [vmem:[%s2 + $0x10] sm:$0xff]
  %v56 = vld [vmem:[%s2 + $0x18] sm:$0xff]
  %v57 = vld [vmem:[%s2 + $0x20] sm:$0xff]
  %v58 = vld [vmem:[%s2 + $0x28] sm:$0xff]
  %v59 = vld [vmem:[%s2 + $0x30] sm:$0xff]
  %v60 = vld [vmem:[%s2 + $0x38] sm:$0xff]
  %v61 = vld [vmem:[%s2 + $0x40] sm:$0xff]
  %v62 = vld [vmem:[%s2 + $0x48] sm:$0xff]
  %v63 = vld [vmem:[%s2 + $0x50] sm:$0xff]
  %v64 = vld [vmem:[%s2 + $0x58] sm:$0xff]
  %v65 = vld [vmem:[%s2 + $0x60] sm:$0xff]
  %v66 = vld [vmem:[%s2 + $0x68] sm:$0xff]
  %v67 = vld [vmem:[%s2 + $0x70] sm:$0xff]
  %v68 = vld [vmem:[%s2 + $0x78] sm:$0xff]
  %v69 = vpack.c.bf16 %v54, %v53
  %v70 = vpack.c.bf16 %v56, %v55
  %v71 = vpack.c.bf16 %v58, %v57
  %v72 = vpack.c.bf16 %v60, %v59
  %v73 = vpack.c.bf16 %v62, %v61
  %v74 = vpack.c.bf16 %v64, %v63
  %v75 = vpack.c.bf16 %v66, %v65
  %v76 = vpack.c.bf16 %v68, %v67
  %v77 = vld [vmem:[%s3] sm:$0xf]
  %v78 = vld [vmem:[%s3 + $0x4] sm:$0xf]
  %v79 = vld [vmem:[%s3 + $0x8] sm:$0xf]
  %v80 = vld [vmem:[%s3 + $0xc] sm:$0xf]
  %v81 = vld [vmem:[%s3 + $0x10] sm:$0xf]
  %v82 = vld [vmem:[%s3 + $0x14] sm:$0xf]
  %v83 = vld [vmem:[%s3 + $0x18] sm:$0xf]
  %v84 = vld [vmem:[%s3 + $0x1c] sm:$0xf]
  %v85 = vld [vmem:[%s3 + $0x20] sm:$0xf]
  %v86 = vld [vmem:[%s3 + $0x24] sm:$0xf]
  %v87 = vld [vmem:[%s3 + $0x28] sm:$0xf]
  %v88 = vld [vmem:[%s3 + $0x2c] sm:$0xf]
  %v89 = vld [vmem:[%s3 + $0x30] sm:$0xf]
  %v90 = vld [vmem:[%s3 + $0x34] sm:$0xf]
  %v91 = vld [vmem:[%s3 + $0x38] sm:$0xf]
  %v92 = vld [vmem:[%s3 + $0x3c] sm:$0xf]
  %v109 = vunpack.c.l.b16 %v77
  %v110 = vunpack.c.l.b16 %v78
  %v111 = vunpack.c.l.b16 %v79
  %v112 = vunpack.c.l.b16 %v80
  %v113 = vunpack.c.l.b16 %v81
  %v114 = vunpack.c.l.b16 %v82
  %v115 = vunpack.c.l.b16 %v83
  %v116 = vunpack.c.l.b16 %v84
  %v117 = vunpack.c.l.b16 %v85
  %v118 = vunpack.c.l.b16 %v86
  %v119 = vunpack.c.l.b16 %v87
  %v120 = vunpack.c.l.b16 %v88
  %v121 = vunpack.c.l.b16 %v89
  %v122 = vunpack.c.l.b16 %v90
  %v123 = vunpack.c.l.b16 %v91
  %v124 = vunpack.c.l.b16 %v92
  %v125 = vpack.c.b16 %v110, %v109
  %v126 = vpack.c.b16 %v112, %v111
  %v127 = vpack.c.b16 %v114, %v113
  %v128 = vpack.c.b16 %v116, %v115
  %v129 = vpack.c.b16 %v118, %v117
  %v130 = vpack.c.b16 %v120, %v119
  %v131 = vpack.c.b16 %v122, %v121
  %v132 = vpack.c.b16 %v124, %v123
  %141 = vmatprep.subr.bf16.mxu0 0
  %142 = vmatpush1.bf16.msra.mxu0 %v125
  %143 = vmatprep.subr.bf16.mxu0 0
  %144 = vmatpush1.bf16.msra.mxu0 %v126
  %145 = vmatprep.subr.bf16.mxu0 0
  %146 = vmatpush1.bf16.msra.mxu0 %v127
  %147 = vmatprep.subr.bf16.mxu0 0
  %148 = vmatpush1.bf16.msra.mxu0 %v128
  %149 = vmatprep.subr.bf16.mxu0 0
  %150 = vmatpush1.bf16.msra.mxu0 %v129
  %151 = vmatprep.subr.bf16.mxu0 0
  %152 = vmatpush1.bf16.msra.mxu0 %v130
  %153 = vmatprep.subr.bf16.mxu0 0
  %154 = vmatpush1.bf16.msra.mxu0 %v131
  %155 = vmatprep.subr.bf16.mxu0 0
  %156 = vmatpush1.bf16.msra.mxu0 %v132
  %157 = vmatprep.subr.bf16.mxu0 0
  %158 = vmatpush1.bf16.msra.mxu0 0
  %159 = vmatprep.subr.bf16.mxu0 0
  %160 = vmatpush1.bf16.msra.mxu0 0
  %161 = vmatprep.subr.bf16.mxu0 0
  %162 = vmatpush1.bf16.msra.mxu0 0
  %163 = vmatprep.subr.bf16.mxu0 0
  %164 = vmatpush1.bf16.msra.mxu0 0
  %165 = vmatprep.subr.bf16.mxu0 0
  %166 = vmatpush1.bf16.msra.mxu0 0
  %167 = vmatprep.subr.bf16.mxu0 0
  %168 = vmatpush1.bf16.msra.mxu0 0
  %169 = vmatprep.subr.bf16.mxu0 0
  %170 = vmatpush1.bf16.msra.mxu0 0
  %171 = vmatprep.subr.bf16.mxu0 0
  %172 = vmatpush1.bf16.msra.mxu0 0
  %173 = vmatprep.mubr.bf16.mxu0 0
  %174 = vmatmul.mubr.bf16.gmra.mrb[0].mxu0 %v69
  %v175 = vpop.f32.mrb[0].mxu0
  %v176 = vadd.f32 0.0, %v175
  %v177 = vpop.f32.mrb[0].mxu0
  %v178 = vpop.f32.mrb[0].mxu0
  %v179 = vadd.f32 0.0, %v178
  %v180 = vpop.f32.mrb[0].mxu0
  %181 = vmatprep.mubr.bf16.mxu0 0
  %182 = vmatmul.mubr.bf16.gmra.mrb[0].mxu0 %v70
  %v183 = vpop.f32.mrb[0].mxu0
  %v184 = vadd.f32 0.0, %v183
  %v185 = vpop.f32.mrb[0].mxu0
  %v186 = vpop.f32.mrb[0].mxu0
  %v187 = vadd.f32 0.0, %v186
  %v188 = vpop.f32.mrb[0].mxu0
  %189 = vmatprep.mubr.bf16.mxu0 0
  %190 = vmatmul.mubr.bf16.gmra.mrb[0].mxu0 %v71
  %v191 = vpop.f32.mrb[0].mxu0
  %v192 = vadd.f32 0.0, %v191
  %v193 = vpop.f32.mrb[0].mxu0
  %v194 = vpop.f32.mrb[0].mxu0
  %v195 = vadd.f32 0.0, %v194
  %v196 = vpop.f32.mrb[0].mxu0
  %197 = vmatprep.mubr.bf16.mxu0 0
  %198 = vmatmul.mubr.bf16.gmra.mrb[0].mxu0 %v72
  %v199 = vpop.f32.mrb[0].mxu0
  %v200 = vadd.f32 0.0, %v199
  %v201 = vpop.f32.mrb[0].mxu0
  %v202 = vpop.f32.mrb[0].mxu0
  %v203 = vadd.f32 0.0, %v202
  %v204 = vpop.f32.mrb[0].mxu0
  %205 = vmatprep.mubr.bf16.mxu0 0
  %206 = vmatmul.mubr.bf16.gmra.mrb[0].mxu0 %v73
  %v207 = vpop.f32.mrb[0].mxu0
  %v208 = vadd.f32 0.0, %v207
  %v209 = vpop.f32.mrb[0].mxu0
  %v210 = vpop.f32.mrb[0].mxu0
  %v211 = vadd.f32 0.0, %v210
  %v212 = vpop.f32.mrb[0].mxu0
  %213 = vmatprep.mubr.bf16.mxu0 0
  %214 = vmatmul.mubr.bf16.gmra.mrb[0].mxu0 %v74
  %v215 = vpop.f32.mrb[0].mxu0
  %v216 = vadd.f32 0.0, %v215
  %v217 = vpop.f32.mrb[0].mxu0
  %v218 = vpop.f32.mrb[0].mxu0
  %v219 = vadd.f32 0.0, %v218
  %v220 = vpop.f32.mrb[0].mxu0
  %221 = vmatprep.mubr.bf16.mxu0 0
  %222 = vmatmul.mubr.bf16.gmra.mrb[0].mxu0 %v75
  %v223 = vpop.f32.mrb[0].mxu0
  %v224 = vadd.f32 0.0, %v223
  %v225 = vpop.f32.mrb[0].mxu0
  %v226 = vpop.f32.mrb[0].mxu0
  %v227 = vadd.f32 0.0, %v226
  %v228 = vpop.f32.mrb[0].mxu0
  %229 = vmatprep.mubr.bf16.mxu0 0
  %230 = vmatmul.mubr.bf16.gmra.mrb[0].mxu0 %v76
  %v231 = vpop.f32.mrb[0].mxu0
  %v232 = vadd.f32 0.0, %v231
  %v233 = vpop.f32.mrb[0].mxu0
  %v234 = vpop.f32.mrb[0].mxu0
  %v235 = vadd.f32 0.0, %v234
  %v236 = vpop.f32.mrb[0].mxu0
  %237 = vdwg.mxu0
  %v254 = vunpack.c.l.b16 %v21
  %v255 = vunpack.c.l.b16 %v22
  %v256 = vunpack.c.l.b16 %v23
  %v257 = vunpack.c.l.b16 %v24
  %v258 = vunpack.c.l.b16 %v25
  %v259 = vunpack.c.l.b16 %v26
  %v260 = vunpack.c.l.b16 %v27
  %v261 = vunpack.c.l.b16 %v28
  %v262 = vunpack.c.l.b16 %v29
  %v263 = vunpack.c.l.b16 %v30
  %v264 = vunpack.c.l.b16 %v31
  %v265 = vunpack.c.l.b16 %v32
  %v266 = vunpack.c.l.b16 %v33
  %v267 = vunpack.c.l.b16 %v34
  %v268 = vunpack.c.l.b16 %v35
  %v269 = vunpack.c.l.b16 %v36
  %v270 = vpack.c.b16 %v255, %v254
  %v271 = vpack.c.b16 %v257, %v256
  %v272 = vpack.c.b16 %v259, %v258
  %v273 = vpack.c.b16 %v261, %v260
  %v274 = vpack.c.b16 %v263, %v262
  %v275 = vpack.c.b16 %v265, %v264
  %v276 = vpack.c.b16 %v267, %v266
  %v277 = vpack.c.b16 %v269, %v268
  %v302 = vunpack.c.l.b16 %v37
  %v303 = vunpack.c.l.b16 %v38
  %v304 = vunpack.c.l.b16 %v39
  %v305 = vunpack.c.l.b16 %v40
  %v306 = vunpack.c.l.b16 %v41
  %v307 = vunpack.c.l.b16 %v42
  %v308 = vunpack.c.l.b16 %v43
  %v309 = vunpack.c.l.b16 %v44
  %v310 = vunpack.c.l.b16 %v45
  %v311 = vunpack.c.l.b16 %v46
  %v312 = vunpack.c.l.b16 %v47
  %v313 = vunpack.c.l.b16 %v48
  %v314 = vunpack.c.l.b16 %v49
  %v315 = vunpack.c.l.b16 %v50
  %v316 = vunpack.c.l.b16 %v51
  %v317 = vunpack.c.l.b16 %v52
  %v318 = vpack.c.b16 %v303, %v302
  %v319 = vpack.c.b16 %v305, %v304
  %v320 = vpack.c.b16 %v307, %v306
  %v321 = vpack.c.b16 %v309, %v308
  %v322 = vpack.c.b16 %v311, %v310
  %v323 = vpack.c.b16 %v313, %v312
  %v324 = vpack.c.b16 %v315, %v314
  %v325 = vpack.c.b16 %v317, %v316
  %334 = vmatprep.subr.bf16.mxu0 0
  %335 = vmatpush1.bf16.msra.mxu0 %v318
  %336 = vmatprep.subr.bf16.mxu0 0
  %337 = vmatpush1.bf16.msra.mxu0 %v319
  %338 = vmatprep.subr.bf16.mxu0 0
  %339 = vmatpush1.bf16.msra.mxu0 %v320
  %340 = vmatprep.subr.bf16.mxu0 0
  %341 = vmatpush1.bf16.msra.mxu0 %v321
  %342 = vmatprep.subr.bf16.mxu0 0
  %343 = vmatpush1.bf16.msra.mxu0 %v322
  %344 = vmatprep.subr.bf16.mxu0 0
  %345 = vmatpush1.bf16.msra.mxu0 %v323
  %346 = vmatprep.subr.bf16.mxu0 0
  %347 = vmatpush1.bf16.msra.mxu0 %v324
  %348 = vmatprep.subr.bf16.mxu0 0
  %349 = vmatpush1.bf16.msra.mxu0 %v325
  %350 = vmatprep.subr.bf16.mxu0 0
  %351 = vmatpush1.bf16.msra.mxu0 0
  %352 = vmatprep.subr.bf16.mxu0 0
  %353 = vmatpush1.bf16.msra.mxu0 0
  %354 = vmatprep.subr.bf16.mxu0 0
  %355 = vmatpush1.bf16.msra.mxu0 0
  %356 = vmatprep.subr.bf16.mxu0 0
  %357 = vmatpush1.bf16.msra.mxu0 0
  %358 = vmatprep.subr.bf16.mxu0 0
  %359 = vmatpush1.bf16.msra.mxu0 0
  %360 = vmatprep.subr.bf16.mxu0 0
  %361 = vmatpush1.bf16.msra.mxu0 0
  %362 = vmatprep.subr.bf16.mxu0 0
  %363 = vmatpush1.bf16.msra.mxu0 0
  %364 = vmatprep.subr.bf16.mxu0 0
  %365 = vmatpush1.bf16.msra.mxu0 0
  %366 = vmatprep.mubr.bf16.mxu0 0
  %367 = vmatmul.mubr.bf16.gmra.mrb[0].mxu0 %v270
  %v368 = vpop.f32.mrb[0].mxu0
  %v369 = vadd.f32 %v176, %v368
  %v370 = vpop.f32.mrb[0].mxu0
  %v371 = vpop.f32.mrb[0].mxu0
  %v372 = vadd.f32 %v179, %v371
  %v373 = vpop.f32.mrb[0].mxu0
  %374 = vmatprep.mubr.bf16.mxu0 0
  %375 = vmatmul.mubr.bf16.gmra.mrb[0].mxu0 %v271
  %v376 = vpop.f32.mrb[0].mxu0
  %v377 = vadd.f32 %v184, %v376
  %v378 = vpop.f32.mrb[0].mxu0
  %v379 = vpop.f32.mrb[0].mxu0
  %v380 = vadd.f32 %v187, %v379
  %v381 = vpop.f32.mrb[0].mxu0
  %382 = vmatprep.mubr.bf16.mxu0 0
  %383 = vmatmul.mubr.bf16.gmra.mrb[0].mxu0 %v272
  %v384 = vpop.f32.mrb[0].mxu0
  %v385 = vadd.f32 %v192, %v384
  %v386 = vpop.f32.mrb[0].mxu0
  %v387 = vpop.f32.mrb[0].mxu0
  %v388 = vadd.f32 %v195, %v387
  %v389 = vpop.f32.mrb[0].mxu0
  %390 = vmatprep.mubr.bf16.mxu0 0
  %391 = vmatmul.mubr.bf16.gmra.mrb[0].mxu0 %v273
  %v392 = vpop.f32.mrb[0].mxu0
  %v393 = vadd.f32 %v200, %v392
  %v394 = vpop.f32.mrb[0].mxu0
  %v395 = vpop.f32.mrb[0].mxu0
  %v396 = vadd.f32 %v203, %v395
  %v397 = vpop.f32.mrb[0].mxu0
  %398 = vmatprep.mubr.bf16.mxu0 0
  %399 = vmatmul.mubr.bf16.gmra.mrb[0].mxu0 %v274
  %v400 = vpop.f32.mrb[0].mxu0
  %v401 = vadd.f32 %v208, %v400
  %v402 = vpop.f32.mrb[0].mxu0
  %v403 = vpop.f32.mrb[0].mxu0
  %v404 = vadd.f32 %v211, %v403
  %v405 = vpop.f32.mrb[0].mxu0
  %406 = vmatprep.mubr.bf16.mxu0 0
  %407 = vmatmul.mubr.bf16.gmra.mrb[0].mxu0 %v275
  %v408 = vpop.f32.mrb[0].mxu0
  %v409 = vadd.f32 %v216, %v408
  %v410 = vpop.f32.mrb[0].mxu0
  %v411 = vpop.f32.mrb[0].mxu0
  %v412 = vadd.f32 %v219, %v411
  %v413 = vpop.f32.mrb[0].mxu0
  %414 = vmatprep.mubr.bf16.mxu0 0
  %415 = vmatmul.mubr.bf16.gmra.mrb[0].mxu0 %v276
  %v416 = vpop.f32.mrb[0].mxu0
  %v417 = vadd.f32 %v224, %v416
  %v418 = vpop.f32.mrb[0].mxu0
  %v419 = vpop.f32.mrb[0].mxu0
  %v420 = vadd.f32 %v227, %v419
  %v421 = vpop.f32.mrb[0].mxu0
  %422 = vmatprep.mubr.bf16.mxu0 0
  %423 = vmatmul.mubr.bf16.gmra.mrb[0].mxu0 %v277
  %v424 = vpop.f32.mrb[0].mxu0
  %v425 = vadd.f32 %v232, %v424
  %v426 = vpop.f32.mrb[0].mxu0
  %v427 = vpop.f32.mrb[0].mxu0
  %v428 = vadd.f32 %v235, %v427
  %v429 = vpop.f32.mrb[0].mxu0
  %430 = vdwg.mxu0
  %v431 = vld [vmem:[%s4] sm:$0x1]
  %v433 = vlaneseq
  %v434 = vshrl.u32 %v433, 7
  %v435 = vsub.s32 0, %v434
  %v436 = vrot.slane %v431, %v435
  %v438 = vadd.f32 %v369, %v436
  %v439 = vadd.f32 %v372, %v436
  %v440 = vadd.f32 %v377, %v436
  %v441 = vadd.f32 %v380, %v436
  %v442 = vadd.f32 %v385, %v436
  %v443 = vadd.f32 %v388, %v436
  %v444 = vadd.f32 %v393, %v436
  %v445 = vadd.f32 %v396, %v436
  %v446 = vadd.f32 %v401, %v436
  %v447 = vadd.f32 %v404, %v436
  %v448 = vadd.f32 %v409, %v436
  %v449 = vadd.f32 %v412, %v436
  %v450 = vadd.f32 %v417, %v436
  %v451 = vadd.f32 %v420, %v436
  %v452 = vadd.f32 %v425, %v436
  %v453 = vadd.f32 %v428, %v436
  %v454 = vmax.f32 %v438, 0.0
  %v455 = vmax.f32 %v439, 0.0
  %v456 = vmax.f32 %v440, 0.0
  %v457 = vmax.f32 %v441, 0.0
  %v458 = vmax.f32 %v442, 0.0
  %v459 = vmax.f32 %v443, 0.0
  %v460 = vmax.f32 %v444, 0.0
  %v461 = vmax.f32 %v445, 0.0
  %v462 = vmax.f32 %v446, 0.0
  %v463 = vmax.f32 %v447, 0.0
  %v464 = vmax.f32 %v448, 0.0
  %v465 = vmax.f32 %v449, 0.0
  %v466 = vmax.f32 %v450, 0.0
  %v467 = vmax.f32 %v451, 0.0
  %v468 = vmax.f32 %v452, 0.0
  %v469 = vmax.f32 %v453, 0.0
  %470 = vst [vmem:[%s5] sm:$0xff] %v454
  %471 = vst [vmem:[%s5 + $0x8] sm:$0xff] %v455
  %472 = vst [vmem:[%s5 + $0x10] sm:$0xff] %v456
  %473 = vst [vmem:[%s5 + $0x18] sm:$0xff] %v457
  %474 = vst [vmem:[%s5 + $0x20] sm:$0xff] %v458
  %475 = vst [vmem:[%s5 + $0x28] sm:$0xff] %v459
  %476 = vst [vmem:[%s5 + $0x30] sm:$0xff] %v460
  %477 = vst [vmem:[%s5 + $0x38] sm:$0xff] %v461
  %478 = vst [vmem:[%s5 + $0x40] sm:$0xff] %v462
  %479 = vst [vmem:[%s5 + $0x48] sm:$0xff] %v463
  %480 = vst [vmem:[%s5 + $0x50] sm:$0xff] %v464
  %481 = vst [vmem:[%s5 + $0x58] sm:$0xff] %v465
  %482 = vst [vmem:[%s5 + $0x60] sm:$0xff] %v466
  %483 = vst [vmem:[%s5 + $0x68] sm:$0xff] %v467
  %484 = vst [vmem:[%s5 + $0x70] sm:$0xff] %v468
  %485 = vst [vmem:[%s5 + $0x78] sm:$0xff] %v469
  // Predicated region
  $region22: #{bottleneck_forward.5} parent=0 // pred_check
    _
  $region23: #{bottleneck_forward.5} parent=0 // pred_check_branch
    %487 = sbr.rel (0) target = $region25
  $region24: #{bottleneck_forward.5} parent=0 // pred_region
    _
  $region25: #{bottleneck_forward.5} parent=0 // pred_fallthru
    _
  // Predicated region
  $region26: #{bottleneck_forward.5} parent=0 // pred_check
    _
  $region27: #{bottleneck_forward.5} parent=0 // pred_check_branch
    %489 = sbr.rel (0) target = $region29
  $region28: #{bottleneck_forward.5} parent=0 // pred_region
    _
  $region29: #{bottleneck_forward.5} parent=0 // pred_fallthru
    _

</llo_original>
